<compile_context>
chip_gen: v6e
topology: v6e:2x2x1
jax: 0.10.0
libtpu: 0.0.40
codegen_flags: <defaults>
</compile_context>

<pallas_src>
import functools

import jax
import jax.numpy as jnp
import numpy as np
from jax.experimental import pallas as pl
from jax.experimental.pallas import tpu as pltpu

LANE = 128
PAD = 16            # left W padding of the slab (bf16 sublane-tile aligned offset)


def _round_up(x, m):
    return ((x + m - 1) // m) * m


@functools.lru_cache(maxsize=None)
def _vmem_limit_bytes():
    """Generation-dependent scoped-VMEM limit: ~3/4 of physical, capped at 96 MiB."""
    try:
        cap = int(pltpu.get_tpu_info().vmem_capacity_bytes)
    except Exception:
        cap = 0
    if cap < 32 * 1024 * 1024:
        return 32 * 1024 * 1024
    return int(min(96 * 1024 * 1024, (cap * 3) // 4))


def _compiler_params():
    return pltpu.CompilerParams(
        dimension_semantics=("parallel",),   # batch grid -> both TCs on multi-TC parts
        vmem_limit_bytes=_vmem_limit_bytes())


# --------------------------------------------------------------------------
# in-kernel helpers
# --------------------------------------------------------------------------
def _build_slab(x_img, col_ref):
    """Write x into the W-padded slab: col[r+1, PAD+j, :] = x[r, j, :].

    Only the read halo (rows 0 and h+1, columns PAD-1 and PAD+w) is zeroed each
    step -- the interior is fully overwritten, so no full zero-fill is needed.
    The data store is full width at a bf16-tile-aligned W offset (PAD=16), so it
    is an unmasked, aligned vector store.
    """
    h, w, c = x_img.shape
    w2 = col_ref.shape[1]
    zrow = jnp.zeros((w2, c), col_ref.dtype)
    col_ref[0] = zrow
    col_ref[h + 1] = zrow
    zcol = jnp.zeros((h, 1, c), col_ref.dtype)
    col_ref[1:h + 1, PAD - 1:PAD, :] = zcol
    col_ref[1:h + 1, PAD + w:PAD + w + 1, :] = zcol
    col_ref[1:h + 1, PAD:PAD + w, :] = x_img


def _conv3x3_acc(col_ref, w_ref, oh, w, stride, acc):
    """9 MXU matmuls (one per (kh, kw) tap); the kw shift sits on the load side.

    bf16 operands, f32 accumulation.  Row stride is a strided read along the
    majormost slab dim.
    """
    c = col_ref.shape[2]
    for kh in range(3):
        row_ix = pl.ds(kh, oh) if stride == 1 else pl.ds(kh, oh, stride=stride)
        for kw in range(3):
            taps = col_ref[row_ix, pl.ds(PAD - 1 + kw, w), :]
            acc = acc + jnp.dot(taps.reshape(oh * w, c), w_ref[kh, kw],
                                preferred_element_type=jnp.float32)
    return acc


# --------------------------------------------------------------------------
# Pallas kernels
# --------------------------------------------------------------------------
def _conv1_kernel(x_ref, w_ref, b_ref, o_ref, col_ref, *, stride):
    """3x3 conv (row stride in-kernel) + folded BN + ReLU -> bf16."""
    h, w = x_ref.shape[1], x_ref.shape[2]
    oh, co = o_ref.shape[1], o_ref.shape[3]
    _build_slab(x_ref[0], col_ref)
    acc = jnp.zeros((oh * w, co), jnp.float32) + b_ref[...]      # bias-initialized acc
    acc = _conv3x3_acc(col_ref, w_ref, oh, w, stride, acc)
    o_ref[0] = jnp.maximum(acc, 0.0).reshape(oh, w, co).astype(o_ref.dtype)


def _conv2_kernel(x_ref, w_ref, b_ref, res_ref, *rest, has_shortcut):
    """3x3 conv + folded BN + fused (1x1-conv shortcut | identity) + add + ReLU -> bf16."""
    if has_shortcut:
        wsc_ref, o_ref, col_ref = rest
    else:
        o_ref, col_ref = rest
    h, w = x_ref.shape[1], x_ref.shape[2]
    co = o_ref.shape[3]
    _build_slab(x_ref[0], col_ref)
    acc = jnp.zeros((h * w, co), jnp.float32) + b_ref[...]       # bias2 (+ shortcut bias)
    acc = _conv3x3_acc(col_ref, w_ref, h, w, 1, acc)
    res = res_ref[0].reshape(h * w, res_ref.shape[3])
    if has_shortcut:
        acc = acc + jnp.dot(res, wsc_ref[...], preferred_element_type=jnp.float32)
    else:
        acc = acc + res.astype(jnp.float32)
    o_ref[0] = jnp.maximum(acc, 0.0).reshape(h, w, co).astype(o_ref.dtype)


# --------------------------------------------------------------------------
# pallas_call wrappers
# --------------------------------------------------------------------------
def conv3x3_bn_relu(x, w_packed, bias, *, stride):
    n, h, w, c = x.shape
    co = w_packed.shape[-1]
    oh = (h - 1) // stride + 1
    assert w % 8 == 0, "W must be a multiple of 8 so in-kernel reshapes are relabels"
    kernel = functools.partial(_conv1_kernel, stride=stride)
    return pl.pallas_call(
        kernel,
        out_shape=jax.ShapeDtypeStruct((n, oh, w, co), jnp.bfloat16),
        grid=(n,),
        in_specs=[
            pl.BlockSpec((1, h, w, c), lambda b: (b, 0, 0, 0)),
            pl.BlockSpec((3, 3, c, co), lambda b: (0, 0, 0, 0)),   # VMEM resident
            pl.BlockSpec((1, co), lambda b: (0, 0)),
        ],
        out_specs=pl.BlockSpec((1, oh, w, co), lambda b: (b, 0, 0, 0)),
        scratch_shapes=[pltpu.VMEM((h + 2, w + 2 * PAD, c), jnp.bfloat16)],
        compiler_params=_compiler_params(),
    )(x, w_packed, bias)


def conv3x3_bn_residual_relu(x, w_packed, bias, res, wsc=None):
    n, h, w, c = x.shape
    co = w_packed.shape[-1]
    cres = res.shape[-1]
    assert w % 8 == 0
    in_specs = [
        pl.BlockSpec((1, h, w, c), lambda b: (b, 0, 0, 0)),
        pl.BlockSpec((3, 3, c, co), lambda b: (0, 0, 0, 0)),
        pl.BlockSpec((1, co), lambda b: (0, 0)),
        pl.BlockSpec((1, h, w, cres), lambda b: (b, 0, 0, 0)),
    ]
    args = [x, w_packed, bias, res]
    if wsc is not None:
        in_specs.append(pl.BlockSpec((cres, co), lambda b: (0, 0)))
        args.append(wsc)
    kernel = functools.partial(_conv2_kernel, has_shortcut=wsc is not None)
    return pl.pallas_call(
        kernel,
        out_shape=jax.ShapeDtypeStruct((n, h, w, co), jnp.bfloat16),
        grid=(n,),
        in_specs=in_specs,
        out_specs=pl.BlockSpec((1, h, w, co), lambda b: (b, 0, 0, 0)),
        scratch_shapes=[pltpu.VMEM((h + 2, w + 2 * PAD, c), jnp.bfloat16)],
        compiler_params=_compiler_params(),
    )(*args)


# --------------------------------------------------------------------------
# BasicBlock module (Pallas)
# --------------------------------------------------------------------------
def _fold_bn(gamma, beta, mean, var, eps=1e-5):
    scale = gamma / jnp.sqrt(var + eps)
    bias = beta - mean * scale
    return scale, bias


def _pad_last(v, cp):
    c = v.shape[-1]
    if c == cp:
        return v
    return jnp.pad(v, [(0, 0)] * (v.ndim - 1) + [(0, cp - c)])


class BasicBlockPallas:
    """Pallas port of shrinkernet BasicBlock (shrink_state=False, inference BN).

    Intentional numerics: bf16 conv operands with f32 accumulation, BN folded
    into (scale*weight, bias); the identity residual is the bf16 copy of x.
    """

    def __init__(self, in_planes, planes, idx, stride=1, expansion=1, key=None):
        self.block_idx = idx
        self.stride = stride
        self.in_planes = in_planes
        self.planes = planes
        self.expansion = expansion
        mid = expansion * planes
        self.has_shortcut = (stride != 1) or (in_planes != planes)

        self.cinp = _round_up(in_planes, LANE)
        self.midp = _round_up(mid, LANE)
        self.planesp = _round_up(planes, LANE)

        keys = jax.random.split(key, 6)

        def bn_params(k, c):
            k1, k2, k3, k4 = jax.random.split(k, 4)
            gamma = 0.5 + jax.random.uniform(k1, (c,), jnp.float32)
            beta = 0.1 * jax.random.normal(k2, (c,), jnp.float32)
            mean = 0.1 * jax.random.normal(k3, (c,), jnp.float32)
            var = 0.5 + jax.random.uniform(k4, (c,), jnp.float32)
            return _fold_bn(gamma, beta, mean, var)

        def pack3x3(w_folded, cinp, coutp):
            # HWIO (3,3,cin,cout) with BN scale folded -> (3,3,cinp,coutp) bf16
            _, _, cin, cout = w_folded.shape
            wp = jnp.zeros((3, 3, cinp, coutp), jnp.float32)
            wp = wp.at[:, :, :cin, :cout].set(w_folded)
            return wp.astype(jnp.bfloat16)

        # conv1 + BN1 (scale folded into the weight; bias kept for the acc init)
        w1 = 0.1 * jax.random.normal(keys[0], (3, 3, in_planes, mid), jnp.float32)
        scale1, self.bias1 = bn_params(keys[1], mid)
        self.w1f = w1 * scale1
        self.w1p = pack3x3(self.w1f, self.cinp, self.midp)
        self.bias1p = _pad_last(self.bias1, self.midp).reshape(1, self.midp)

        # conv2 + BN2
        w2 = 0.1 * jax.random.normal(keys[2], (3, 3, mid, planes), jnp.float32)
        scale2, self.bias2 = bn_params(keys[3], planes)
        self.w2f = w2 * scale2
        self.w2p = pack3x3(self.w2f, self.midp, self.planesp)

        # 1x1-conv + BN shortcut (fused into the conv2 kernel)
        if self.has_shortcut:
            wsc = 0.1 * jax.random.normal(keys[4], (in_planes, planes), jnp.float32)
            scale_sc, self.bias_sc = bn_params(keys[5], planes)
            self.wscf = wsc * scale_sc
            wscp = jnp.zeros((self.cinp, self.planesp), jnp.float32)
            self.wscp = wscp.at[:in_planes, :planes].set(self.wscf).astype(jnp.bfloat16)
            bias2_total = self.bias2 + self.bias_sc
        else:
            bias2_total = self.bias2
        self.bias2p = _pad_last(bias2_total, self.planesp).reshape(1, self.planesp)

    def __call__(self, x_nchw):
        s = self.stride
        # TODO(synk): in a full network keep activations NHWC, channel-padded,
        # bf16 end-to-end and only convert at the model boundary.
        xb = x_nchw.astype(jnp.bfloat16)             # cast before layout work
        x = jnp.transpose(xb, (0, 2, 3, 1))          # NHWC bf16
        xp = _pad_last(x, self.cinp)

        # conv1 + BN1 + ReLU (row stride handled inside the kernel)
        out = conv3x3_bn_relu(xp, self.w1p, self.bias1p, stride=s)
        if s != 1:
            # TODO(synk): fold the column subsample into the kernel too.
            out = out[:, :, ::s, :]

        if self.has_shortcut:
            res = xp[:, ::s, ::s, :] if s != 1 else xp
            wsc = self.wscp
        else:
            res = xp                                  # identity residual (bf16)
            wsc = None

        y = conv3x3_bn_residual_relu(out, self.w2p, self.bias2p, res, wsc)
        y = y[..., :self.planes]                      # strip channel padding
        return jnp.transpose(y, (0, 3, 1, 2)).astype(jnp.float32)   # NCHW f32


# --------------------------------------------------------------------------
# Pure-JAX reference (same folded-BN / bf16-operand / f32-accumulate numerics)
# --------------------------------------------------------------------------
def reference_forward(block, x_nchw):
    x = jnp.transpose(x_nchw, (0, 2, 3, 1)).astype(jnp.bfloat16)
    s = block.stride

    def conv(v, w, stride, pad):
        return jax.lax.conv_general_dilated(
            v, w.astype(jnp.bfloat16), (stride, stride), ((pad, pad), (pad, pad)),
            dimension_numbers=("NHWC", "HWIO", "NHWC"),
            preferred_element_type=jnp.float32)

    out = conv(x, block.w1f, s, 1) + block.bias1
    out = jnp.maximum(out, 0.0).astype(jnp.bfloat16)
    out = conv(out, block.w2f, 1, 1) + block.bias2
    if block.has_shortcut:
        wsc = block.wscf.reshape(1, 1, block.in_planes, block.planes)
        sc = conv(x, wsc, s, 0) + block.bias_sc
    else:
        sc = x.astype(jnp.float32)
    out = jnp.maximum(out + sc, 0.0).astype(jnp.bfloat16)   # kernel emits bf16
    return jnp.transpose(out, (0, 3, 1, 2)).astype(jnp.float32)


# --------------------------------------------------------------------------
if __name__ == "__main__":
    root = jax.random.PRNGKey(0)

    N, H, W = 2, 16, 16
    configs = [
        # (in_planes, planes, stride)
        (4, 8, 1),   # 1x1-conv + BN shortcut, stride 1
        (8, 8, 1),   # identity residual
        (4, 8, 2),   # shortcut with stride 2 (strided conv1 + strided residual)
    ]
    for idx, (cin, planes, stride) in enumerate(configs):
        root, kx, kp = jax.random.split(root, 3)
        x = jax.random.normal(kx, (N, cin, H, W), jnp.float32)
        block = BasicBlockPallas(in_planes=cin, planes=planes, idx=idx,
                                 stride=stride, expansion=1, key=kp)
        y = jax.block_until_ready(block(x))
        y_ref = jax.block_until_ready(reference_forward(block, x))
        oh = (H + 2 - 3) // stride + 1
        assert y.shape == (N, planes, oh, oh), (y.shape, (N, planes, oh, oh))
        np.testing.assert_allclose(np.asarray(y), np.asarray(y_ref),
                                   rtol=2e-2, atol=2e-2)

    print("KERNEL_OK")
</pallas_src>

<mosaic_0001>
module attributes {stable_mosaic.version = 11 : i64} {
  func.func @_conv1_kernel(%arg0: i32, %arg1: memref<1x16x16x128xbf16, #tpu.memory_space<vmem>>, %arg2: memref<3x3x128x128xbf16, #tpu.memory_space<vmem>>, %arg3: memref<1x128xf32, #tpu.memory_space<vmem>>, %arg4: memref<1x16x16x128xbf16, #tpu.memory_space<vmem>>, %arg5: memref<18x48x128xbf16, #tpu.memory_space<vmem>>) attributes {dimension_semantics = [#tpu.dimension_semantics<parallel>], iteration_bounds = array<i64: 2>, scalar_prefetch = 0 : i64, scratch_operands = 1 : i64, tpu.core_type = #tpu.core_type<tc>, window_params = [{transform_indices = @transform_0, window_bounds = array<i64: 1, 16, 16, 128>}, {pipeline_mode = #tpu.pipeline_mode<synchronous>, transform_indices = @transform_1, window_bounds = array<i64: 3, 3, 128, 128>}, {pipeline_mode = #tpu.pipeline_mode<synchronous>, transform_indices = @transform_2, window_bounds = array<i64: 1, 128>}, {transform_indices = @transform_3, window_bounds = array<i64: 1, 16, 16, 128>}]} {
    %c0 = arith.constant 0 : index
    %c0_0 = arith.constant 0 : index
    %c0_1 = arith.constant 0 : index
    %c0_2 = arith.constant 0 : index
    %0 = vector.load %arg1[%c0, %c0_0, %c0_1, %c0_2] : memref<1x16x16x128xbf16, #tpu.memory_space<vmem>>, vector<1x16x16x128xbf16>
    %1 = vector.shape_cast %0 : vector<1x16x16x128xbf16> to vector<16x16x128xbf16>
    %cst = arith.constant 0.000000e+00 : bf16
    %2 = vector.broadcast %cst : bf16 to vector<48x128xbf16>
    %c0_3 = arith.constant 0 : index
    %c0_4 = arith.constant 0 : index
    %c0_5 = arith.constant 0 : index
    %3 = vector.load %arg5[%c0_3, %c0_4, %c0_5] : memref<18x48x128xbf16, #tpu.memory_space<vmem>>, vector<1x48x128xbf16>
    %4 = vector.shape_cast %3 : vector<1x48x128xbf16> to vector<48x128xbf16>
    %5 = vector.shape_cast %2 : vector<48x128xbf16> to vector<1x48x128xbf16>
    tpu.vector_store %arg5[%c0_3, %c0_4, %c0_5], %5 {strides = array<i32>} : memref<18x48x128xbf16, #tpu.memory_space<vmem>>, vector<1x48x128xbf16>,
    %c17 = arith.constant 17 : index
    %c0_6 = arith.constant 0 : index
    %c0_7 = arith.constant 0 : index
    %6 = vector.load %arg5[%c17, %c0_6, %c0_7] : memref<18x48x128xbf16, #tpu.memory_space<vmem>>, vector<1x48x128xbf16>
    %7 = vector.shape_cast %6 : vector<1x48x128xbf16> to vector<48x128xbf16>
    %8 = vector.shape_cast %2 : vector<48x128xbf16> to vector<1x48x128xbf16>
    tpu.vector_store %arg5[%c17, %c0_6, %c0_7], %8 {strides = array<i32>} : memref<18x48x128xbf16, #tpu.memory_space<vmem>>, vector<1x48x128xbf16>,
    %cst_8 = arith.constant 0.000000e+00 : bf16
    %9 = vector.broadcast %cst_8 : bf16 to vector<16x1x128xbf16>
    %c1 = arith.constant 1 : index
    %c15 = arith.constant 15 : index
    %c0_9 = arith.constant 0 : index
    %10 = vector.load %arg5[%c1, %c15, %c0_9] : memref<18x48x128xbf16, #tpu.memory_space<vmem>>, vector<16x1x128xbf16>
    tpu.vector_store %arg5[%c1, %c15, %c0_9], %9 {strides = array<i32>} : memref<18x48x128xbf16, #tpu.memory_space<vmem>>, vector<16x1x128xbf16>,
    %c1_10 = arith.constant 1 : index
    %c32 = arith.constant 32 : index
    %c0_11 = arith.constant 0 : index
    %11 = vector.load %arg5[%c1_10, %c32, %c0_11] : memref<18x48x128xbf16, #tpu.memory_space<vmem>>, vector<16x1x128xbf16>
    tpu.vector_store %arg5[%c1_10, %c32, %c0_11], %9 {strides = array<i32>} : memref<18x48x128xbf16, #tpu.memory_space<vmem>>, vector<16x1x128xbf16>,
    %c1_12 = arith.constant 1 : index
    %c16 = arith.constant 16 : index
    %c0_13 = arith.constant 0 : index
    %12 = vector.load %arg5[%c1_12, %c16, %c0_13] : memref<18x48x128xbf16, #tpu.memory_space<vmem>>, vector<16x16x128xbf16>
    tpu.vector_store %arg5[%c1_12, %c16, %c0_13], %1 {strides = array<i32>} : memref<18x48x128xbf16, #tpu.memory_space<vmem>>, vector<16x16x128xbf16>,
    %cst_14 = arith.constant 0.000000e+00 : f32
    %13 = vector.broadcast %cst_14 : f32 to vector<256x128xf32>
    %c0_15 = arith.constant 0 : index
    %c0_16 = arith.constant 0 : index
    %14 = vector.load %arg3[%c0_15, %c0_16] : memref<1x128xf32, #tpu.memory_space<vmem>>, vector<1x128xf32>
    %15 = vector.broadcast %14 : vector<1x128xf32> to vector<256x128xf32>
    %16 = arith.addf %13, %15 : vector<256x128xf32>
    %c0_17 = arith.constant 0 : index
    %c15_18 = arith.constant 15 : index
    %c0_19 = arith.constant 0 : index
    %17 = vector.load %arg5[%c0_17, %c15_18, %c0_19] : memref<18x48x128xbf16, #tpu.memory_space<vmem>>, vector<16x16x128xbf16>
    %18 = vector.shape_cast %17 : vector<16x16x128xbf16> to vector<256x128xbf16>
    %c0_20 = arith.constant 0 : index
    %c0_21 = arith.constant 0 : index
    %c0_22 = arith.constant 0 : index
    %c0_23 = arith.constant 0 : index
    %19 = vector.load %arg2[%c0_20, %c0_21, %c0_22, %c0_23] : memref<3x3x128x128xbf16, #tpu.memory_space<vmem>>, vector<1x1x128x128xbf16>
    %20 = vector.shape_cast %19 : vector<1x1x128x128xbf16> to vector<128x128xbf16>
    %cst_24 = arith.constant dense<0.000000e+00> : vector<256x128xf32>
    %21 = tpu.matmul %18, %20, %cst_24 {dimension_numbers = #tpu.dot_dimension_numbers<[1], [0], [0], [1], [0, 0, 1, 1], [], []>} : vector<256x128xbf16>, vector<128x128xbf16>, vector<256x128xf32> -> vector<256x128xf32>
    %22 = arith.addf %16, %21 : vector<256x128xf32>
    %c0_25 = arith.constant 0 : index
    %c16_26 = arith.constant 16 : index
    %c0_27 = arith.constant 0 : index
    %23 = vector.load %arg5[%c0_25, %c16_26, %c0_27] : memref<18x48x128xbf16, #tpu.memory_space<vmem>>, vector<16x16x128xbf16>
    %24 = vector.shape_cast %23 : vector<16x16x128xbf16> to vector<256x128xbf16>
    %c0_28 = arith.constant 0 : index
    %c1_29 = arith.constant 1 : index
    %c0_30 = arith.constant 0 : index
    %c0_31 = arith.constant 0 : index
    %25 = vector.load %arg2[%c0_28, %c1_29, %c0_30, %c0_31] : memref<3x3x128x128xbf16, #tpu.memory_space<vmem>>, vector<1x1x128x128xbf16>
    %26 = vector.shape_cast %25 : vector<1x1x128x128xbf16> to vector<128x128xbf16>
    %cst_32 = arith.constant dense<0.000000e+00> : vector<256x128xf32>
    %27 = tpu.matmul %24, %26, %cst_32 {dimension_numbers = #tpu.dot_dimension_numbers<[1], [0], [0], [1], [0, 0, 1, 1], [], []>} : vector<256x128xbf16>, vector<128x128xbf16>, vector<256x128xf32> -> vector<256x128xf32>
    %28 = arith.addf %22, %27 : vector<256x128xf32>
    %c0_33 = arith.constant 0 : index
    %c17_34 = arith.constant 17 : index
    %c0_35 = arith.constant 0 : index
    %29 = vector.load %arg5[%c0_33, %c17_34, %c0_35] : memref<18x48x128xbf16, #tpu.memory_space<vmem>>, vector<16x16x128xbf16>
    %30 = vector.shape_cast %29 : vector<16x16x128xbf16> to vector<256x128xbf16>
    %c0_36 = arith.constant 0 : index
    %c2 = arith.constant 2 : index
    %c0_37 = arith.constant 0 : index
    %c0_38 = arith.constant 0 : index
    %31 = vector.load %arg2[%c0_36, %c2, %c0_37, %c0_38] : memref<3x3x128x128xbf16, #tpu.memory_space<vmem>>, vector<1x1x128x128xbf16>
    %32 = vector.shape_cast %31 : vector<1x1x128x128xbf16> to vector<128x128xbf16>
    %cst_39 = arith.constant dense<0.000000e+00> : vector<256x128xf32>
    %33 = tpu.matmul %30, %32, %cst_39 {dimension_numbers = #tpu.dot_dimension_numbers<[1], [0], [0], [1], [0, 0, 1, 1], [], []>} : vector<256x128xbf16>, vector<128x128xbf16>, vector<256x128xf32> -> vector<256x128xf32>
    %34 = arith.addf %28, %33 : vector<256x128xf32>
    %c1_40 = arith.constant 1 : index
    %c15_41 = arith.constant 15 : index
    %c0_42 = arith.constant 0 : index
    %35 = vector.load %arg5[%c1_40, %c15_41, %c0_42] : memref<18x48x128xbf16, #tpu.memory_space<vmem>>, vector<16x16x128xbf16>
    %36 = vector.shape_cast %35 : vector<16x16x128xbf16> to vector<256x128xbf16>
    %c1_43 = arith.constant 1 : index
    %c0_44 = arith.constant 0 : index
    %c0_45 = arith.constant 0 : index
    %c0_46 = arith.constant 0 : index
    %37 = vector.load %arg2[%c1_43, %c0_44, %c0_45, %c0_46] : memref<3x3x128x128xbf16, #tpu.memory_space<vmem>>, vector<1x1x128x128xbf16>
    %38 = vector.shape_cast %37 : vector<1x1x128x128xbf16> to vector<128x128xbf16>
    %cst_47 = arith.constant dense<0.000000e+00> : vector<256x128xf32>
    %39 = tpu.matmul %36, %38, %cst_47 {dimension_numbers = #tpu.dot_dimension_numbers<[1], [0], [0], [1], [0, 0, 1, 1], [], []>} : vector<256x128xbf16>, vector<128x128xbf16>, vector<256x128xf32> -> vector<256x128xf32>
    %40 = arith.addf %34, %39 : vector<256x128xf32>
    %c1_48 = arith.constant 1 : index
    %c16_49 = arith.constant 16 : index
    %c0_50 = arith.constant 0 : index
    %41 = vector.load %arg5[%c1_48, %c16_49, %c0_50] : memref<18x48x128xbf16, #tpu.memory_space<vmem>>, vector<16x16x128xbf16>
    %42 = vector.shape_cast %41 : vector<16x16x128xbf16> to vector<256x128xbf16>
    %c1_51 = arith.constant 1 : index
    %c1_52 = arith.constant 1 : index
    %c0_53 = arith.constant 0 : index
    %c0_54 = arith.constant 0 : index
    %43 = vector.load %arg2[%c1_51, %c1_52, %c0_53, %c0_54] : memref<3x3x128x128xbf16, #tpu.memory_space<vmem>>, vector<1x1x128x128xbf16>
    %44 = vector.shape_cast %43 : vector<1x1x128x128xbf16> to vector<128x128xbf16>
    %cst_55 = arith.constant dense<0.000000e+00> : vector<256x128xf32>
    %45 = tpu.matmul %42, %44, %cst_55 {dimension_numbers = #tpu.dot_dimension_numbers<[1], [0], [0], [1], [0, 0, 1, 1], [], []>} : vector<256x128xbf16>, vector<128x128xbf16>, vector<256x128xf32> -> vector<256x128xf32>
    %46 = arith.addf %40, %45 : vector<256x128xf32>
    %c1_56 = arith.constant 1 : index
    %c17_57 = arith.constant 17 : index
    %c0_58 = arith.constant 0 : index
    %47 = vector.load %arg5[%c1_56, %c17_57, %c0_58] : memref<18x48x128xbf16, #tpu.memory_space<vmem>>, vector<16x16x128xbf16>
    %48 = vector.shape_cast %47 : vector<16x16x128xbf16> to vector<256x128xbf16>
    %c1_59 = arith.constant 1 : index
    %c2_60 = arith.constant 2 : index
    %c0_61 = arith.constant 0 : index
    %c0_62 = arith.constant 0 : index
    %49 = vector.load %arg2[%c1_59, %c2_60, %c0_61, %c0_62] : memref<3x3x128x128xbf16, #tpu.memory_space<vmem>>, vector<1x1x128x128xbf16>
    %50 = vector.shape_cast %49 : vector<1x1x128x128xbf16> to vector<128x128xbf16>
    %cst_63 = arith.constant dense<0.000000e+00> : vector<256x128xf32>
    %51 = tpu.matmul %48, %50, %cst_63 {dimension_numbers = #tpu.dot_dimension_numbers<[1], [0], [0], [1], [0, 0, 1, 1], [], []>} : vector<256x128xbf16>, vector<128x128xbf16>, vector<256x128xf32> -> vector<256x128xf32>
    %52 = arith.addf %46, %51 : vector<256x128xf32>
    %c2_64 = arith.constant 2 : index
    %c15_65 = arith.constant 15 : index
    %c0_66 = arith.constant 0 : index
    %53 = vector.load %arg5[%c2_64, %c15_65, %c0_66] : memref<18x48x128xbf16, #tpu.memory_space<vmem>>, vector<16x16x128xbf16>
    %54 = vector.shape_cast %53 : vector<16x16x128xbf16> to vector<256x128xbf16>
    %c2_67 = arith.constant 2 : index
    %c0_68 = arith.constant 0 : index
    %c0_69 = arith.constant 0 : index
    %c0_70 = arith.constant 0 : index
    %55 = vector.load %arg2[%c2_67, %c0_68, %c0_69, %c0_70] : memref<3x3x128x128xbf16, #tpu.memory_space<vmem>>, vector<1x1x128x128xbf16>
    %56 = vector.shape_cast %55 : vector<1x1x128x128xbf16> to vector<128x128xbf16>
    %cst_71 = arith.constant dense<0.000000e+00> : vector<256x128xf32>
    %57 = tpu.matmul %54, %56, %cst_71 {dimension_numbers = #tpu.dot_dimension_numbers<[1], [0], [0], [1], [0, 0, 1, 1], [], []>} : vector<256x128xbf16>, vector<128x128xbf16>, vector<256x128xf32> -> vector<256x128xf32>
    %58 = arith.addf %52, %57 : vector<256x128xf32>
    %c2_72 = arith.constant 2 : index
    %c16_73 = arith.constant 16 : index
    %c0_74 = arith.constant 0 : index
    %59 = vector.load %arg5[%c2_72, %c16_73, %c0_74] : memref<18x48x128xbf16, #tpu.memory_space<vmem>>, vector<16x16x128xbf16>
    %60 = vector.shape_cast %59 : vector<16x16x128xbf16> to vector<256x128xbf16>
    %c2_75 = arith.constant 2 : index
    %c1_76 = arith.constant 1 : index
    %c0_77 = arith.constant 0 : index
    %c0_78 = arith.constant 0 : index
    %61 = vector.load %arg2[%c2_75, %c1_76, %c0_77, %c0_78] : memref<3x3x128x128xbf16, #tpu.memory_space<vmem>>, vector<1x1x128x128xbf16>
    %62 = vector.shape_cast %61 : vector<1x1x128x128xbf16> to vector<128x128xbf16>
    %cst_79 = arith.constant dense<0.000000e+00> : vector<256x128xf32>
    %63 = tpu.matmul %60, %62, %cst_79 {dimension_numbers = #tpu.dot_dimension_numbers<[1], [0], [0], [1], [0, 0, 1, 1], [], []>} : vector<256x128xbf16>, vector<128x128xbf16>, vector<256x128xf32> -> vector<256x128xf32>
    %64 = arith.addf %58, %63 : vector<256x128xf32>
    %c2_80 = arith.constant 2 : index
    %c17_81 = arith.constant 17 : index
    %c0_82 = arith.constant 0 : index
    %65 = vector.load %arg5[%c2_80, %c17_81, %c0_82] : memref<18x48x128xbf16, #tpu.memory_space<vmem>>, vector<16x16x128xbf16>
    %66 = vector.shape_cast %65 : vector<16x16x128xbf16> to vector<256x128xbf16>
    %c2_83 = arith.constant 2 : index
    %c2_84 = arith.constant 2 : index
    %c0_85 = arith.constant 0 : index
    %c0_86 = arith.constant 0 : index
    %67 = vector.load %arg2[%c2_83, %c2_84, %c0_85, %c0_86] : memref<3x3x128x128xbf16, #tpu.memory_space<vmem>>, vector<1x1x128x128xbf16>
    %68 = vector.shape_cast %67 : vector<1x1x128x128xbf16> to vector<128x128xbf16>
    %cst_87 = arith.constant dense<0.000000e+00> : vector<256x128xf32>
    %69 = tpu.matmul %66, %68, %cst_87 {dimension_numbers = #tpu.dot_dimension_numbers<[1], [0], [0], [1], [0, 0, 1, 1], [], []>} : vector<256x128xbf16>, vector<128x128xbf16>, vector<256x128xf32> -> vector<256x128xf32>
    %70 = arith.addf %64, %69 : vector<256x128xf32>
    %cst_88 = arith.constant 0.000000e+00 : f32
    %71 = vector.broadcast %cst_88 : f32 to vector<256x128xf32>
    %72 = arith.maximumf %70, %71 : vector<256x128xf32>
    %73 = vector.shape_cast %72 : vector<256x128xf32> to vector<16x16x128xf32>
    %74 = arith.truncf %73 : vector<16x16x128xf32> to vector<16x16x128xbf16>
    %c0_89 = arith.constant 0 : index
    %c0_90 = arith.constant 0 : index
    %c0_91 = arith.constant 0 : index
    %c0_92 = arith.constant 0 : index
    %75 = vector.load %arg4[%c0_89, %c0_90, %c0_91, %c0_92] : memref<1x16x16x128xbf16, #tpu.memory_space<vmem>>, vector<1x16x16x128xbf16>
    %76 = vector.shape_cast %75 : vector<1x16x16x128xbf16> to vector<16x16x128xbf16>
    %77 = vector.shape_cast %74 : vector<16x16x128xbf16> to vector<1x16x16x128xbf16>
    tpu.vector_store %arg4[%c0_89, %c0_90, %c0_91, %c0_92], %77 {strides = array<i32>} : memref<1x16x16x128xbf16, #tpu.memory_space<vmem>>, vector<1x16x16x128xbf16>,
    return
  }
  func.func @transform_0(%arg0: i32) -> (i32, i32, i32, i32) {
    %c0_i32 = arith.constant 0 : i32
    %c0_i32_0 = arith.constant 0 : i32
    %c0_i32_1 = arith.constant 0 : i32
    %c0_i32_2 = arith.constant 0 : i32
    return %arg0, %c0_i32, %c0_i32_0, %c0_i32_1 : i32, i32, i32, i32
  }
  func.func @transform_1(%arg0: i32) -> (i32, i32, i32, i32) {
    %c0_i32 = arith.constant 0 : i32
    %c0_i32_0 = arith.constant 0 : i32
    %c0_i32_1 = arith.constant 0 : i32
    %c0_i32_2 = arith.constant 0 : i32
    %c0_i32_3 = arith.constant 0 : i32
    return %c0_i32, %c0_i32_0, %c0_i32_1, %c0_i32_2 : i32, i32, i32, i32
  }
  func.func @transform_2(%arg0: i32) -> (i32, i32) {
    %c0_i32 = arith.constant 0 : i32
    %c0_i32_0 = arith.constant 0 : i32
    %c0_i32_1 = arith.constant 0 : i32
    return %c0_i32, %c0_i32_0 : i32, i32
  }
  func.func @transform_3(%arg0: i32) -> (i32, i32, i32, i32) {
    %c0_i32 = arith.constant 0 : i32
    %c0_i32_0 = arith.constant 0 : i32
    %c0_i32_1 = arith.constant 0 : i32
    %c0_i32_2 = arith.constant 0 : i32
    return %arg0, %c0_i32, %c0_i32_0, %c0_i32_1 : i32, i32, i32, i32
  }
}

</mosaic_0001>

<llo_original>
// kernel: tpu_custom_call.1
$region0: #{tpu_custom_call.1}
  #allocation0 [shape = 'u32[]', space=smem, size = 0x4, offset = 0x4, fixed_abs, tag = 'smem constant byte address 0x4 - core index']
  #allocation1 [shape = 'u32[144,128]{1,0:T(1,128)}', space=vmem, size = 0x12000, scoped, tag = 'internal scratch']
  #allocation2 [shape = 'bf16[18,48,128]{2,1,0:T(8,128)(2,1)}', space=vmem, size = 0x36000, scoped, tag = 'scratch operand']
  %s0 = inlined_call_operand.hbm [shape: bf16[2,16,16,128], index: 0, kind: input, shape index: {}]
  %s1 = inlined_call_operand.hbm [shape: bf16[3,3,128,128], index: 1, kind: input, shape index: {}]
  %s2 = inlined_call_operand.vmem [shape: f32[1,128], index: 2, kind: input, shape index: {}]
  %s3 = inlined_call_operand.hbm [shape: bf16[2,16,16,128], index: 3, kind: output, shape index: {}]
  %s4 = sld [smem:[#allocation0]]
  $region53: #{tpu_custom_call.1} parent=0
    _
  %s6 = ssub.s32 1, %s4
  %s7 = scalar_select 0, %s6, %s4
  $region1: #{tpu_custom_call.1} parent=0
    #allocation3 [shape = 'u8[131072]{0}', space=vmem, size = 0x20000, scoped, tag = 'input window, operand 0']
    #allocation4 [shape = 's32[2]{0}', space=sflag, size = 0x8, scoped, tag = 'scoped memory for tpu_custom_call.1']
    #allocation5 [shape = 's32[2]{0}', space=sflag, size = 0x8, scoped, tag = 'scoped memory for tpu_custom_call.1']
    #allocation6 [shape = 'u8[294912]{0}', space=vmem, size = 0x48000, scoped, tag = 'input window, operand 1, single buffered']
    #allocation7 [shape = 's32[1]{0}', space=sflag, size = 0x4, scoped, tag = 'scoped memory for tpu_custom_call.1']
    #allocation8 [shape = 'u8[131072]{0}', space=vmem, size = 0x20000, scoped, tag = 'output window, operand 0']
    %8 = vsyncpa [#allocation4], 0
    %s9 = scalar_lea.sflag [#allocation4], 1
    %10 = vsyncpa %s9, 0
    %11 = vsyncpa [#allocation7], 0
    %12 = vsyncpa [#allocation5], 0
    %s13 = scalar_lea.sflag [#allocation5], 1
    %14 = vsyncpa %s13, 0
    loop: start=0, step=1, limit=4
    $region2: #{tpu_custom_call.1} parent=1 // loop_pre_header
      _
    $region3: #{tpu_custom_call.1} parent=1 // loop_header
      %s16 = sphi 0, %s20
      %p17 = scmp.ge.s32.totalorder %s16, 4
      %s26 = sphi 0, %s28
      %s29 = sphi 0, %s26
      %s30 = sphi 0, %s29
      %s46 = sphi 0, %s30
      %s50 = sphi 0, %s50
      %s52 = sphi 0, %s50
      %s53 = sphi 0, %s52
      %s67 = sphi 0, %s53
      %s71 = sphi 0, %s71
      %s73 = sphi 0, %s71
      %s74 = sphi 0, %s73
      %s88 = sphi 0, %s74
      %s94 = sphi 0, %s96
      %s97 = sphi 0, %s94
      %s98 = sphi 0, %s97
      %s114 = sphi 0, %s98
    $region4: #{tpu_custom_call.1} parent=1 // loop_header_branch
      %19 = sbr.rel (%p17) target = $region8
    $region5: #{tpu_custom_call.1} parent=1 // loop_body
      %s21 = ssub.s32 %s16, 1
      %s22 = ssub.s32 %s16, 2
      %s23 = sadd.s32 %s16, 1
      %s24 = ssub.s32 %s16, %s23
      %p25 = scmp.eq.s32.totalorder %s24, 0
      %s27 = sadd.s32 %s26, 1
      %s28 = scalar_select %p25, %s26, %s27
      %p31 = pneg %p25
      %p32 = scmp.eq.s32.totalorder %s16, 1
      %p33 = por %p31, %p32
      %p34 = scmp.ne.s32.totalorder %s26, %s29
      %p35 = scmp.eq.s32.totalorder %s16, 0
      %p36 = por %p34, %p35
      %p37 = scmp.ne.s32.totalorder %s26, %s29
      %p38 = scmp.eq.s32.totalorder %s21, 1
      %p39 = por %p37, %p38
      %p40 = scmp.ne.s32.totalorder %s29, %s30
      %p41 = scmp.eq.s32.totalorder %s21, 0
      %p42 = por %p40, %p41
      %p43 = scmp.ne.s32.totalorder %s29, %s30
      %p44 = scmp.eq.s32.totalorder %s22, 1
      %p45 = por %p43, %p44
      %p47 = scmp.ne.s32.totalorder %s30, %s46
      %p48 = scmp.eq.s32.totalorder %s22, 0
      %p49 = por %p47, %p48
      %s51 = sadd.s32 %s50, 1
      %p54 = scmp.eq.s32.totalorder %s16, 1
      %p55 = scmp.ne.s32.totalorder %s50, %s52
      %p56 = scmp.eq.s32.totalorder %s16, 0
      %p57 = por %p55, %p56
      %p58 = scmp.ne.s32.totalorder %s50, %s52
      %p59 = scmp.eq.s32.totalorder %s21, 1
      %p60 = por %p58, %p59
      %p61 = scmp.ne.s32.totalorder %s52, %s53
      %p62 = scmp.eq.s32.totalorder %s21, 0
      %p63 = por %p61, %p62
      %p64 = scmp.ne.s32.totalorder %s52, %s53
      %p65 = scmp.eq.s32.totalorder %s22, 1
      %p66 = por %p64, %p65
      %p68 = scmp.ne.s32.totalorder %s53, %s67
      %p69 = scmp.eq.s32.totalorder %s22, 0
      %p70 = por %p68, %p69
      %s72 = sadd.s32 %s71, 1
      %p75 = scmp.eq.s32.totalorder %s16, 1
      %p76 = scmp.ne.s32.totalorder %s71, %s73
      %p77 = scmp.eq.s32.totalorder %s16, 0
      %p78 = por %p76, %p77
      %p79 = scmp.ne.s32.totalorder %s71, %s73
      %p80 = scmp.eq.s32.totalorder %s21, 1
      %p81 = por %p79, %p80
      %p82 = scmp.ne.s32.totalorder %s73, %s74
      %p83 = scmp.eq.s32.totalorder %s21, 0
      %p84 = por %p82, %p83
      %p85 = scmp.ne.s32.totalorder %s73, %s74
      %p86 = scmp.eq.s32.totalorder %s22, 1
      %p87 = por %p85, %p86
      %p89 = scmp.ne.s32.totalorder %s74, %s88
      %p90 = scmp.eq.s32.totalorder %s22, 0
      %p91 = por %p89, %p90
      %s92 = ssub.s32 %s16, %s23
      %p93 = scmp.eq.s32.totalorder %s92, 0
      %s95 = sadd.s32 %s94, 1
      %s96 = scalar_select %p93, %s94, %s95
      %p99 = pneg %p93
      %p100 = scmp.eq.s32.totalorder %s16, 1
      %p101 = por %p99, %p100
      %p102 = scmp.ne.s32.totalorder %s94, %s97
      %p103 = scmp.eq.s32.totalorder %s16, 0
      %p104 = por %p102, %p103
      %p105 = scmp.ne.s32.totalorder %s94, %s97
      %p106 = scmp.eq.s32.totalorder %s21, 1
      %p107 = por %p105, %p106
      %p108 = scmp.ne.s32.totalorder %s97, %s98
      %p109 = scmp.eq.s32.totalorder %s21, 0
      %p110 = por %p108, %p109
      %p111 = scmp.ne.s32.totalorder %s97, %s98
      %p112 = scmp.eq.s32.totalorder %s22, 1
      %p113 = por %p111, %p112
      %p115 = scmp.ne.s32.totalorder %s98, %s114
      %p116 = scmp.eq.s32.totalorder %s22, 0
      %p117 = por %p115, %p116
      %p118 = scmp.le.s32.totalorder 1, %s16
      %p119 = scmp.lt.s32.totalorder %s16, 3
      %p120 = pnand %p118, %p119
      %p121 = pneg %p120
      // Predicated region
      $region9: #{tpu_custom_call.1} parent=5 // pred_check
        _
      $region10: #{tpu_custom_call.1} parent=5 // pred_check_branch
        %123 = sbr.rel (%p120) target = $region12
      $region11: #{tpu_custom_call.1} parent=5 // pred_region
        %s124 = ssub.s32 %s16, 1
        // Predicated region
        $region13: #{tpu_custom_call.1} parent=11 // pred_check
          %p125 = pneg %p63
        $region14: #{tpu_custom_call.1} parent=11 // pred_check_branch
          %127 = sbr.rel (%p125) target = $region16
        $region15: #{tpu_custom_call.1} parent=11 // pred_region
          %s129 = ssub.s32 9216, 9216
          %130 = vsyncadd [#allocation7], %s129
          %s131 = sshll.u32 [#allocation6], 4
          %s132 = int_to_ptr.vmem [resolvable:$true] %s131
          %137 = dma.hbm_to_vmem [thread:$0]  %s1, 9216, %s132, [#allocation7], 64, 64, 4
        $region16: #{tpu_custom_call.1} parent=11 // pred_fallthru
          _
        // Predicated region
        $region17: #{tpu_custom_call.1} parent=11 // pred_check
          %p138 = pneg %p84
        $region18: #{tpu_custom_call.1} parent=11 // pred_check_branch
          %140 = sbr.rel (%p138) target = $region20
        $region19: #{tpu_custom_call.1} parent=11 // pred_region
          _
        $region20: #{tpu_custom_call.1} parent=11 // pred_fallthru
          _
      $region12: #{tpu_custom_call.1} parent=5 // pred_fallthru
        _
      %p141 = scmp.lt.s32.totalorder %s16, 2
      // Predicated region
      $region21: #{tpu_custom_call.1} parent=5 // pred_check
        %p142 = pneg %p141
      $region22: #{tpu_custom_call.1} parent=5 // pred_check_branch
        %144 = sbr.rel (%p142) target = $region24
      $region23: #{tpu_custom_call.1} parent=5 // pred_region
        // Predicated region
        $region25: #{tpu_custom_call.1} parent=23 // pred_check
          %p145 = pneg %p36
        $region26: #{tpu_custom_call.1} parent=23 // pred_check_branch
          %147 = sbr.rel (%p145) target = $region28
        $region27: #{tpu_custom_call.1} parent=23 // pred_region
          %s148 = sand.u32 %s26, 1
          %s149 = scalar_lea.sflag [#allocation4], %s148
          %s150 = sand.u32 %s26, 1
          %s151 = smul.addr %s150, 128
          %s152 = scalar_lea.vmem [#allocation3], %s151
          %s154 = ssub.s32 2048, 2048
          %155 = vsyncadd %s149, %s154
          %s156 = smul.addr %s16, 32
          %s157 = smul.addr %s156, 64
          %s158 = scalar_lea.hbm %s0, %s157
          %s159 = sshll.u32 %s152, 4
          %s160 = int_to_ptr.vmem [resolvable:$true] %s159
          %165 = dma.hbm_to_vmem [thread:$0]  %s158, 2048, %s160, %s149, 64, 64, 4
        $region28: #{tpu_custom_call.1} parent=23 // pred_fallthru
          _
      $region24: #{tpu_custom_call.1} parent=5 // pred_fallthru
        _
      %p166 = scmp.le.s32.totalorder 1, %s16
      %p167 = scmp.lt.s32.totalorder %s16, 3
      %p168 = pnand %p166, %p167
      %p169 = pneg %p168
      // Predicated region
      $region29: #{tpu_custom_call.1} parent=5 // pred_check
        _
      $region30: #{tpu_custom_call.1} parent=5 // pred_check_branch
        %171 = sbr.rel (%p168) target = $region32
      $region31: #{tpu_custom_call.1} parent=5 // pred_region
        %s172 = ssub.s32 %s16, 1
        %s173 = sand.u32 %s29, 1
        %s174 = scalar_lea.sflag [#allocation4], %s173
        %s175 = sand.u32 %s29, 1
        %s176 = smul.addr %s175, 128
        %s177 = scalar_lea.vmem [#allocation3], %s176
        // Predicated region
        $region33: #{tpu_custom_call.1} parent=31 // pred_check
          %p178 = pneg %p42
        $region34: #{tpu_custom_call.1} parent=31 // pred_check_branch
          %180 = sbr.rel (%p178) target = $region36
        $region35: #{tpu_custom_call.1} parent=31 // pred_region
          %181 = dma.done %s174, 2048
        $region36: #{tpu_custom_call.1} parent=31 // pred_fallthru
          _
        // Predicated region
        $region37: #{tpu_custom_call.1} parent=31 // pred_check
          %p182 = pneg %p63
        $region38: #{tpu_custom_call.1} parent=31 // pred_check_branch
          %184 = sbr.rel (%p182) target = $region40
        $region39: #{tpu_custom_call.1} parent=31 // pred_region
          %185 = dma.done [#allocation7], 9216
        $region40: #{tpu_custom_call.1} parent=31 // pred_fallthru
          _
        %s186 = sand.u32 %s29, 1
        %s187 = scalar_lea.sflag [#allocation4], %s186
        %s188 = sand.u32 %s29, 1
        %s189 = smul.addr %s188, 128
        %s190 = scalar_lea.vmem [#allocation3], %s189
        %p191 = pneg %p42
        %p192 = pneg %p39
        %p193 = pneg %p63
        %p194 = pneg %p60
        %p195 = pneg %p84
        %p196 = pneg %p81
        %p197 = pneg %p110
        %p198 = pneg %p107
        %s199 = sand.u32 %s97, 1
        %s200 = scalar_lea.sflag [#allocation5], %s199
        %s201 = sand.u32 %s97, 1
        %s202 = smul.addr %s201, 128
        %s203 = scalar_lea.vmem [#allocation8], %s202
        %v205 = vld [vmem:[%s177] sm:$0xf]
        %v206 = vld [vmem:[%s177 + $0x4] sm:$0xf]
        %v207 = vld [vmem:[%s177 + $0x8] sm:$0xf]
        %v208 = vld [vmem:[%s177 + $0xc] sm:$0xf]
        %v209 = vld [vmem:[%s177 + $0x10] sm:$0xf]
        %v210 = vld [vmem:[%s177 + $0x14] sm:$0xf]
        %v211 = vld [vmem:[%s177 + $0x18] sm:$0xf]
        %v212 = vld [vmem:[%s177 + $0x1c] sm:$0xf]
        %v213 = vld [vmem:[%s177 + $0x20] sm:$0xf]
        %v214 = vld [vmem:[%s177 + $0x24] sm:$0xf]
        %v215 = vld [vmem:[%s177 + $0x28] sm:$0xf]
        %v216 = vld [vmem:[%s177 + $0x2c] sm:$0xf]
        %v217 = vld [vmem:[%s177 + $0x30] sm:$0xf]
        %v218 = vld [vmem:[%s177 + $0x34] sm:$0xf]
        %v219 = vld [vmem:[%s177 + $0x38] sm:$0xf]
        %v220 = vld [vmem:[%s177 + $0x3c] sm:$0xf]
        %v221 = vld [vmem:[%s177 + $0x40] sm:$0xf]
        %v222 = vld [vmem:[%s177 + $0x44] sm:$0xf]
        %v223 = vld [vmem:[%s177 + $0x48] sm:$0xf]
        %v224 = vld [vmem:[%s177 + $0x4c] sm:$0xf]
        %v225 = vld [vmem:[%s177 + $0x50] sm:$0xf]
        %v226 = vld [vmem:[%s177 + $0x54] sm:$0xf]
        %v227 = vld [vmem:[%s177 + $0x58] sm:$0xf]
        %v228 = vld [vmem:[%s177 + $0x5c] sm:$0xf]
        %v229 = vld [vmem:[%s177 + $0x60] sm:$0xf]
        %v230 = vld [vmem:[%s177 + $0x64] sm:$0xf]
        %v231 = vld [vmem:[%s177 + $0x68] sm:$0xf]
        %v232 = vld [vmem:[%s177 + $0x6c] sm:$0xf]
        %v233 = vld [vmem:[%s177 + $0x70] sm:$0xf]
        %v234 = vld [vmem:[%s177 + $0x74] sm:$0xf]
        %v235 = vld [vmem:[%s177 + $0x78] sm:$0xf]
        %v236 = vld [vmem:[%s177 + $0x7c] sm:$0xf]
        %237 = vst [vmem:[#allocation2] sm:$0xf] 0
        %238 = vst [vmem:[#allocation2 + $0x4] sm:$0xf] 0
        %239 = vst [vmem:[#allocation2 + $0x8] sm:$0xf] 0
        %240 = vst [vmem:[#allocation2 + $0xc] sm:$0xf] 0
        %241 = vst [vmem:[#allocation2 + $0x10] sm:$0xf] 0
        %242 = vst [vmem:[#allocation2 + $0x14] sm:$0xf] 0
        %s243 = scalar_lea.vmem [#allocation2], 408
        %244 = vst [vmem:[%s243] sm:$0xf] 0
        %245 = vst [vmem:[%s243 + $0x4] sm:$0xf] 0
        %246 = vst [vmem:[%s243 + $0x8] sm:$0xf] 0
        %247 = vst [vmem:[%s243 + $0xc] sm:$0xf] 0
        %248 = vst [vmem:[%s243 + $0x10] sm:$0xf] 0
        %249 = vst [vmem:[%s243 + $0x14] sm:$0xf] 0
        %s250 = scalar_lea.vmem [#allocation2], 24
        %vm251 = vcmask 1043459
        %vm252 = vsmask.f32 7950
        %vm253 = vmand %vm251, %vm252
        %v254 = vld [vmem:[%s250 + $0x4] sm:$0x8]
        %v255 = vsel %vm253, 0, %v254
        %256 = vst [vmem:[%s250 + $0x4] sm:$0x8] %v255
        %v257 = vld [vmem:[%s250 + $0x1c] sm:$0x8]
        %v258 = vsel %vm253, 0, %v257
        %259 = vst [vmem:[%s250 + $0x1c] sm:$0x8] %v258
        %v260 = vld [vmem:[%s250 + $0x34] sm:$0x8]
        %v261 = vsel %vm253, 0, %v260
        %262 = vst [vmem:[%s250 + $0x34] sm:$0x8] %v261
        %v263 = vld [vmem:[%s250 + $0x4c] sm:$0x8]
        %v264 = vsel %vm253, 0, %v263
        %265 = vst [vmem:[%s250 + $0x4c] sm:$0x8] %v264
        %v266 = vld [vmem:[%s250 + $0x64] sm:$0x8]
        %v267 = vsel %vm253, 0, %v266
        %268 = vst [vmem:[%s250 + $0x64] sm:$0x8] %v267
        %v269 = vld [vmem:[%s250 + $0x7c] sm:$0x8]
        %v270 = vsel %vm253, 0, %v269
        %271 = vst [vmem:[%s250 + $0x7c] sm:$0x8] %v270
        %v272 = vld [vmem:[%s250 + $0x94] sm:$0x8]
        %v273 = vsel %vm253, 0, %v272
        %274 = vst [vmem:[%s250 + $0x94] sm:$0x8] %v273
        %v275 = vld [vmem:[%s250 + $0xac] sm:$0x8]
        %v276 = vsel %vm253, 0, %v275
        %277 = vst [vmem:[%s250 + $0xac] sm:$0x8] %v276
        %v278 = vld [vmem:[%s250 + $0xc4] sm:$0x8]
        %v279 = vsel %vm253, 0, %v278
        %280 = vst [vmem:[%s250 + $0xc4] sm:$0x8] %v279
        %v281 = vld [vmem:[%s250 + $0xdc] sm:$0x8]
        %v282 = vsel %vm253, 0, %v281
        %283 = vst [vmem:[%s250 + $0xdc] sm:$0x8] %v282
        %v284 = vld [vmem:[%s250 + $0xf4] sm:$0x8]
        %v285 = vsel %vm253, 0, %v284
        %286 = vst [vmem:[%s250 + $0xf4] sm:$0x8] %v285
        %v287 = vld [vmem:[%s250 + $0x10c] sm:$0x8]
        %v288 = vsel %vm253, 0, %v287
        %289 = vst [vmem:[%s250 + $0x10c] sm:$0x8] %v288
        %v290 = vld [vmem:[%s250 + $0x124] sm:$0x8]
        %v291 = vsel %vm253, 0, %v290
        %292 = vst [vmem:[%s250 + $0x124] sm:$0x8] %v291
        %v293 = vld [vmem:[%s250 + $0x13c] sm:$0x8]
        %v294 = vsel %vm253, 0, %v293
        %295 = vst [vmem:[%s250 + $0x13c] sm:$0x8] %v294
        %v296 = vld [vmem:[%s250 + $0x154] sm:$0x8]
        %v297 = vsel %vm253, 0, %v296
        %298 = vst [vmem:[%s250 + $0x154] sm:$0x8] %v297
        %v299 = vld [vmem:[%s250 + $0x16c] sm:$0x8]
        %v300 = vsel %vm253, 0, %v299
        %301 = vst [vmem:[%s250 + $0x16c] sm:$0x8] %v300
        %vm302 = vcmask 1040384
        %vm303 = vsmask.f32 256
        %vm304 = vmand %vm302, %vm303
        %v305 = vld [vmem:[%s250 + $0x10] sm:$0x1]
        %v306 = vsel %vm304, 0, %v305
        %307 = vst [vmem:[%s250 + $0x10] sm:$0x1] %v306
        %v308 = vld [vmem:[%s250 + $0x28] sm:$0x1]
        %v309 = vsel %vm304, 0, %v308
        %310 = vst [vmem:[%s250 + $0x28] sm:$0x1] %v309
        %v311 = vld [vmem:[%s250 + $0x40] sm:$0x1]
        %v312 = vsel %vm304, 0, %v311
        %313 = vst [vmem:[%s250 + $0x40] sm:$0x1] %v312
        %v314 = vld [vmem:[%s250 + $0x58] sm:$0x1]
        %v315 = vsel %vm304, 0, %v314
        %316 = vst [vmem:[%s250 + $0x58] sm:$0x1] %v315
        %v317 = vld [vmem:[%s250 + $0x70] sm:$0x1]
        %v318 = vsel %vm304, 0, %v317
        %319 = vst [vmem:[%s250 + $0x70] sm:$0x1] %v318
        %v320 = vld [vmem:[%s250 + $0x88] sm:$0x1]
        %v321 = vsel %vm304, 0, %v320
        %322 = vst [vmem:[%s250 + $0x88] sm:$0x1] %v321
        %v323 = vld [vmem:[%s250 + $0xa0] sm:$0x1]
        %v324 = vsel %vm304, 0, %v323
        %325 = vst [vmem:[%s250 + $0xa0] sm:$0x1] %v324
        %v326 = vld [vmem:[%s250 + $0xb8] sm:$0x1]
        %v327 = vsel %vm304, 0, %v326
        %328 = vst [vmem:[%s250 + $0xb8] sm:$0x1] %v327
        %v329 = vld [vmem:[%s250 + $0xd0] sm:$0x1]
        %v330 = vsel %vm304, 0, %v329
        %331 = vst [vmem:[%s250 + $0xd0] sm:$0x1] %v330
        %v332 = vld [vmem:[%s250 + $0xe8] sm:$0x1]
        %v333 = vsel %vm304, 0, %v332
        %334 = vst [vmem:[%s250 + $0xe8] sm:$0x1] %v333
        %v335 = vld [vmem:[%s250 + $0x100] sm:$0x1]
        %v336 = vsel %vm304, 0, %v335
        %337 = vst [vmem:[%s250 + $0x100] sm:$0x1] %v336
        %v338 = vld [vmem:[%s250 + $0x118] sm:$0x1]
        %v339 = vsel %vm304, 0, %v338
        %340 = vst [vmem:[%s250 + $0x118] sm:$0x1] %v339
        %v341 = vld [vmem:[%s250 + $0x130] sm:$0x1]
        %v342 = vsel %vm304, 0, %v341
        %343 = vst [vmem:[%s250 + $0x130] sm:$0x1] %v342
        %v344 = vld [vmem:[%s250 + $0x148] sm:$0x1]
        %v345 = vsel %vm304, 0, %v344
        %346 = vst [vmem:[%s250 + $0x148] sm:$0x1] %v345
        %v347 = vld [vmem:[%s250 + $0x160] sm:$0x1]
        %v348 = vsel %vm304, 0, %v347
        %349 = vst [vmem:[%s250 + $0x160] sm:$0x1] %v348
        %v350 = vld [vmem:[%s250 + $0x178] sm:$0x1]
        %v351 = vsel %vm304, 0, %v350
        %352 = vst [vmem:[%s250 + $0x178] sm:$0x1] %v351
        %353 = vst [vmem:[%s250 + $0x8] sm:$0xf] %v205
        %354 = vst [vmem:[%s250 + $0xc] sm:$0xf] %v206
        %355 = vst [vmem:[%s250 + $0x20] sm:$0xf] %v207
        %356 = vst [vmem:[%s250 + $0x24] sm:$0xf] %v208
        %357 = vst [vmem:[%s250 + $0x38] sm:$0xf] %v209
        %358 = vst [vmem:[%s250 + $0x3c] sm:$0xf] %v210
        %359 = vst [vmem:[%s250 + $0x50] sm:$0xf] %v211
        %360 = vst [vmem:[%s250 + $0x54] sm:$0xf] %v212
        %361 = vst [vmem:[%s250 + $0x68] sm:$0xf] %v213
        %362 = vst [vmem:[%s250 + $0x6c] sm:$0xf] %v214
        %363 = vst [vmem:[%s250 + $0x80] sm:$0xf] %v215
        %364 = vst [vmem:[%s250 + $0x84] sm:$0xf] %v216
        %365 = vst [vmem:[%s250 + $0x98] sm:$0xf] %v217
        %366 = vst [vmem:[%s250 + $0x9c] sm:$0xf] %v218
        %367 = vst [vmem:[%s250 + $0xb0] sm:$0xf] %v219
        %368 = vst [vmem:[%s250 + $0xb4] sm:$0xf] %v220
        %369 = vst [vmem:[%s250 + $0xc8] sm:$0xf] %v221
        %370 = vst [vmem:[%s250 + $0xcc] sm:$0xf] %v222
        %371 = vst [vmem:[%s250 + $0xe0] sm:$0xf] %v223
        %372 = vst [vmem:[%s250 + $0xe4] sm:$0xf] %v224
        %373 = vst [vmem:[%s250 + $0xf8] sm:$0xf] %v225
        %374 = vst [vmem:[%s250 + $0xfc] sm:$0xf] %v226
        %375 = vst [vmem:[%s250 + $0x110] sm:$0xf] %v227
        %376 = vst [vmem:[%s250 + $0x114] sm:$0xf] %v228
        %377 = vst [vmem:[%s250 + $0x128] sm:$0xf] %v229
        %378 = vst [vmem:[%s250 + $0x12c] sm:$0xf] %v230
        %379 = vst [vmem:[%s250 + $0x140] sm:$0xf] %v231
        %380 = vst [vmem:[%s250 + $0x144] sm:$0xf] %v232
        %381 = vst [vmem:[%s250 + $0x158] sm:$0xf] %v233
        %382 = vst [vmem:[%s250 + $0x15c] sm:$0xf] %v234
        %383 = vst [vmem:[%s250 + $0x170] sm:$0xf] %v235
        %384 = vst [vmem:[%s250 + $0x174] sm:$0xf] %v236
        %v385 = vld [vmem:[%s2] sm:$0x1]
        %v387 = vlaneseq
        %v388 = vshrl.u32 %v387, 7
        %v389 = vsub.s32 0, %v388
        %v390 = vrot.slane %v385, %v389
        %v392 = vadd.f32 %v390, 0.0
        %v393 = vld [vmem:[#allocation2 + $0x4] sm:$0x8]
        %v394 = vld [vmem:[#allocation2 + $0x8] sm:$0xf]
        %v395 = vld [vmem:[#allocation2 + $0xc] sm:$0xf]
        %v396 = vld [vmem:[#allocation2 + $0x1c] sm:$0x8]
        %v397 = vld [vmem:[#allocation2 + $0x20] sm:$0xf]
        %v398 = vld [vmem:[#allocation2 + $0x24] sm:$0xf]
        %v399 = vld [vmem:[#allocation2 + $0x34] sm:$0x8]
        %v400 = vld [vmem:[#allocation2 + $0x38] sm:$0xf]
        %v401 = vld [vmem:[#allocation2 + $0x3c] sm:$0xf]
        %v402 = vld [vmem:[#allocation2 + $0x4c] sm:$0x8]
        %v403 = vld [vmem:[#allocation2 + $0x50] sm:$0xf]
        %v404 = vld [vmem:[#allocation2 + $0x54] sm:$0xf]
        %v405 = vld [vmem:[#allocation2 + $0x64] sm:$0x8]
        %v406 = vld [vmem:[#allocation2 + $0x68] sm:$0xf]
        %v407 = vld [vmem:[#allocation2 + $0x6c] sm:$0xf]
        %v408 = vld [vmem:[#allocation2 + $0x7c] sm:$0x8]
        %v409 = vld [vmem:[#allocation2 + $0x80] sm:$0xf]
        %v410 = vld [vmem:[#allocation2 + $0x84] sm:$0xf]
        %v411 = vld [vmem:[#allocation2 + $0x94] sm:$0x8]
        %v412 = vld [vmem:[#allocation2 + $0x98] sm:$0xf]
        %v413 = vld [vmem:[#allocation2 + $0x9c] sm:$0xf]
        %v414 = vld [vmem:[#allocation2 + $0xac] sm:$0x8]
        %v415 = vld [vmem:[#allocation2 + $0xb0] sm:$0xf]
        %v416 = vld [vmem:[#allocation2 + $0xb4] sm:$0xf]
        %v417 = vld [vmem:[#allocation2 + $0xc4] sm:$0x8]
        %v418 = vld [vmem:[#allocation2 + $0xc8] sm:$0xf]
        %v419 = vld [vmem:[#allocation2 + $0xcc] sm:$0xf]
        %v420 = vld [vmem:[#allocation2 + $0xdc] sm:$0x8]
        %v421 = vld [vmem:[#allocation2 + $0xe0] sm:$0xf]
        %v422 = vld [vmem:[#allocation2 + $0xe4] sm:$0xf]
        %v423 = vld [vmem:[#allocation2 + $0xf4] sm:$0x8]
        %v424 = vld [vmem:[#allocation2 + $0xf8] sm:$0xf]
        %v425 = vld [vmem:[#allocation2 + $0xfc] sm:$0xf]
        %v426 = vld [vmem:[#allocation2 + $0x10c] sm:$0x8]
        %v427 = vld [vmem:[#allocation2 + $0x110] sm:$0xf]
        %v428 = vld [vmem:[#allocation2 + $0x114] sm:$0xf]
        %v429 = vld [vmem:[#allocation2 + $0x124] sm:$0x8]
        %v430 = vld [vmem:[#allocation2 + $0x128] sm:$0xf]
        %v431 = vld [vmem:[#allocation2 + $0x12c] sm:$0xf]
        %v432 = vld [vmem:[#allocation2 + $0x13c] sm:$0x8]
        %v433 = vld [vmem:[#allocation2 + $0x140] sm:$0xf]
        %v434 = vld [vmem:[#allocation2 + $0x144] sm:$0xf]
        %v435 = vld [vmem:[#allocation2 + $0x154] sm:$0x8]
        %v436 = vld [vmem:[#allocation2 + $0x158] sm:$0xf]
        %v437 = vld [vmem:[#allocation2 + $0x15c] sm:$0xf]
        %v438 = vld [vmem:[#allocation2 + $0x16c] sm:$0x8]
        %v439 = vld [vmem:[#allocation2 + $0x170] sm:$0xf]
        %v440 = vld [vmem:[#allocation2 + $0x174] sm:$0xf]
        %vm441 = vsmask.f32 4368
        %vm442 = vmor %vm303, %vm441
        %v444 = vshrl.u32 %v393, 16
        %v446 = vrot.slane %v444, 7
        %v447 = vrot.slane %v446, 4
        %v449 = vshrl.u32 %v394, 16
        %v451 = vrot.slane %v449, 7
        %v452 = vshll.u32 %v394, 16
        %v454 = vor.u32 %v451, %v452
        %v455 = vsel %vm442, %v447, %v454
        %v456 = vrot.slane %v451, 4
        %v458 = vshrl.u32 %v395, 16
        %v460 = vrot.slane %v458, 7
        %v461 = vshll.u32 %v395, 16
        %v463 = vor.u32 %v460, %v461
        %v464 = vsel %vm442, %v456, %v463
        %v466 = vshrl.u32 %v396, 16
        %v468 = vrot.slane %v466, 7
        %v469 = vrot.slane %v468, 4
        %v471 = vshrl.u32 %v397, 16
        %v473 = vrot.slane %v471, 7
        %v474 = vshll.u32 %v397, 16
        %v476 = vor.u32 %v473, %v474
        %v477 = vsel %vm442, %v469, %v476
        %v478 = vrot.slane %v473, 4
        %v480 = vshrl.u32 %v398, 16
        %v482 = vrot.slane %v480, 7
        %v483 = vshll.u32 %v398, 16
        %v485 = vor.u32 %v482, %v483
        %v486 = vsel %vm442, %v478, %v485
        %v488 = vshrl.u32 %v399, 16
        %v490 = vrot.slane %v488, 7
        %v491 = vrot.slane %v490, 4
        %v493 = vshrl.u32 %v400, 16
        %v495 = vrot.slane %v493, 7
        %v496 = vshll.u32 %v400, 16
        %v498 = vor.u32 %v495, %v496
        %v499 = vsel %vm442, %v491, %v498
        %v500 = vrot.slane %v495, 4
        %v502 = vshrl.u32 %v401, 16
        %v504 = vrot.slane %v502, 7
        %v505 = vshll.u32 %v401, 16
        %v507 = vor.u32 %v504, %v505
        %v508 = vsel %vm442, %v500, %v507
        %v510 = vshrl.u32 %v402, 16
        %v512 = vrot.slane %v510, 7
        %v513 = vrot.slane %v512, 4
        %v515 = vshrl.u32 %v403, 16
        %v517 = vrot.slane %v515, 7
        %v518 = vshll.u32 %v403, 16
        %v520 = vor.u32 %v517, %v518
        %v521 = vsel %vm442, %v513, %v520
        %v522 = vrot.slane %v517, 4
        %v524 = vshrl.u32 %v404, 16
        %v526 = vrot.slane %v524, 7
        %v527 = vshll.u32 %v404, 16
        %v529 = vor.u32 %v526, %v527
        %v530 = vsel %vm442, %v522, %v529
        %v532 = vshrl.u32 %v405, 16
        %v534 = vrot.slane %v532, 7
        %v535 = vrot.slane %v534, 4
        %v537 = vshrl.u32 %v406, 16
        %v539 = vrot.slane %v537, 7
        %v540 = vshll.u32 %v406, 16
        %v542 = vor.u32 %v539, %v540
        %v543 = vsel %vm442, %v535, %v542
        %v544 = vrot.slane %v539, 4
        %v546 = vshrl.u32 %v407, 16
        %v548 = vrot.slane %v546, 7
        %v549 = vshll.u32 %v407, 16
        %v551 = vor.u32 %v548, %v549
        %v552 = vsel %vm442, %v544, %v551
        %v554 = vshrl.u32 %v408, 16
        %v556 = vrot.slane %v554, 7
        %v557 = vrot.slane %v556, 4
        %v559 = vshrl.u32 %v409, 16
        %v561 = vrot.slane %v559, 7
        %v562 = vshll.u32 %v409, 16
        %v564 = vor.u32 %v561, %v562
        %v565 = vsel %vm442, %v557, %v564
        %v566 = vrot.slane %v561, 4
        %v568 = vshrl.u32 %v410, 16
        %v570 = vrot.slane %v568, 7
        %v571 = vshll.u32 %v410, 16
        %v573 = vor.u32 %v570, %v571
        %v574 = vsel %vm442, %v566, %v573
        %v576 = vshrl.u32 %v411, 16
        %v578 = vrot.slane %v576, 7
        %v579 = vrot.slane %v578, 4
        %v581 = vshrl.u32 %v412, 16
        %v583 = vrot.slane %v581, 7
        %v584 = vshll.u32 %v412, 16
        %v586 = vor.u32 %v583, %v584
        %v587 = vsel %vm442, %v579, %v586
        %v588 = vrot.slane %v583, 4
        %v590 = vshrl.u32 %v413, 16
        %v592 = vrot.slane %v590, 7
        %v593 = vshll.u32 %v413, 16
        %v595 = vor.u32 %v592, %v593
        %v596 = vsel %vm442, %v588, %v595
        %v598 = vshrl.u32 %v414, 16
        %v600 = vrot.slane %v598, 7
        %v601 = vrot.slane %v600, 4
        %v603 = vshrl.u32 %v415, 16
        %v605 = vrot.slane %v603, 7
        %v606 = vshll.u32 %v415, 16
        %v608 = vor.u32 %v605, %v606
        %v609 = vsel %vm442, %v601, %v608
        %v610 = vrot.slane %v605, 4
        %v612 = vshrl.u32 %v416, 16
        %v614 = vrot.slane %v612, 7
        %v615 = vshll.u32 %v416, 16
        %v617 = vor.u32 %v614, %v615
        %v618 = vsel %vm442, %v610, %v617
        %v620 = vshrl.u32 %v417, 16
        %v622 = vrot.slane %v620, 7
        %v623 = vrot.slane %v622, 4
        %v625 = vshrl.u32 %v418, 16
        %v627 = vrot.slane %v625, 7
        %v628 = vshll.u32 %v418, 16
        %v630 = vor.u32 %v627, %v628
        %v631 = vsel %vm442, %v623, %v630
        %v632 = vrot.slane %v627, 4
        %v634 = vshrl.u32 %v419, 16
        %v636 = vrot.slane %v634, 7
        %v637 = vshll.u32 %v419, 16
        %v639 = vor.u32 %v636, %v637
        %v640 = vsel %vm442, %v632, %v639
        %v642 = vshrl.u32 %v420, 16
        %v644 = vrot.slane %v642, 7
        %v645 = vrot.slane %v644, 4
        %v647 = vshrl.u32 %v421, 16
        %v649 = vrot.slane %v647, 7
        %v650 = vshll.u32 %v421, 16
        %v652 = vor.u32 %v649, %v650
        %v653 = vsel %vm442, %v645, %v652
        %v654 = vrot.slane %v649, 4
        %v656 = vshrl.u32 %v422, 16
        %v658 = vrot.slane %v656, 7
        %v659 = vshll.u32 %v422, 16
        %v661 = vor.u32 %v658, %v659
        %v662 = vsel %vm442, %v654, %v661
        %v664 = vshrl.u32 %v423, 16
        %v666 = vrot.slane %v664, 7
        %v667 = vrot.slane %v666, 4
        %v669 = vshrl.u32 %v424, 16
        %v671 = vrot.slane %v669, 7
        %v672 = vshll.u32 %v424, 16
        %v674 = vor.u32 %v671, %v672
        %v675 = vsel %vm442, %v667, %v674
        %v676 = vrot.slane %v671, 4
        %v678 = vshrl.u32 %v425, 16
        %v680 = vrot.slane %v678, 7
        %v681 = vshll.u32 %v425, 16
        %v683 = vor.u32 %v680, %v681
        %v684 = vsel %vm442, %v676, %v683
        %v686 = vshrl.u32 %v426, 16
        %v688 = vrot.slane %v686, 7
        %v689 = vrot.slane %v688, 4
        %v691 = vshrl.u32 %v427, 16
        %v693 = vrot.slane %v691, 7
        %v694 = vshll.u32 %v427, 16
        %v696 = vor.u32 %v693, %v694
        %v697 = vsel %vm442, %v689, %v696
        %v698 = vrot.slane %v693, 4
        %v700 = vshrl.u32 %v428, 16
        %v702 = vrot.slane %v700, 7
        %v703 = vshll.u32 %v428, 16
        %v705 = vor.u32 %v702, %v703
        %v706 = vsel %vm442, %v698, %v705
        %v708 = vshrl.u32 %v429, 16
        %v710 = vrot.slane %v708, 7
        %v711 = vrot.slane %v710, 4
        %v713 = vshrl.u32 %v430, 16
        %v715 = vrot.slane %v713, 7
        %v716 = vshll.u32 %v430, 16
        %v718 = vor.u32 %v715, %v716
        %v719 = vsel %vm442, %v711, %v718
        %v720 = vrot.slane %v715, 4
        %v722 = vshrl.u32 %v431, 16
        %v724 = vrot.slane %v722, 7
        %v725 = vshll.u32 %v431, 16
        %v727 = vor.u32 %v724, %v725
        %v728 = vsel %vm442, %v720, %v727
        %v730 = vshrl.u32 %v432, 16
        %v732 = vrot.slane %v730, 7
        %v733 = vrot.slane %v732, 4
        %v735 = vshrl.u32 %v433, 16
        %v737 = vrot.slane %v735, 7
        %v738 = vshll.u32 %v433, 16
        %v740 = vor.u32 %v737, %v738
        %v741 = vsel %vm442, %v733, %v740
        %v742 = vrot.slane %v737, 4
        %v744 = vshrl.u32 %v434, 16
        %v746 = vrot.slane %v744, 7
        %v747 = vshll.u32 %v434, 16
        %v749 = vor.u32 %v746, %v747
        %v750 = vsel %vm442, %v742, %v749
        %v752 = vshrl.u32 %v435, 16
        %v754 = vrot.slane %v752, 7
        %v755 = vrot.slane %v754, 4
        %v757 = vshrl.u32 %v436, 16
        %v759 = vrot.slane %v757, 7
        %v760 = vshll.u32 %v436, 16
        %v762 = vor.u32 %v759, %v760
        %v763 = vsel %vm442, %v755, %v762
        %v764 = vrot.slane %v759, 4
        %v766 = vshrl.u32 %v437, 16
        %v768 = vrot.slane %v766, 7
        %v769 = vshll.u32 %v437, 16
        %v771 = vor.u32 %v768, %v769
        %v772 = vsel %vm442, %v764, %v771
        %v774 = vshrl.u32 %v438, 16
        %v776 = vrot.slane %v774, 7
        %v777 = vrot.slane %v776, 4
        %v779 = vshrl.u32 %v439, 16
        %v781 = vrot.slane %v779, 7
        %v782 = vshll.u32 %v439, 16
        %v784 = vor.u32 %v781, %v782
        %v785 = vsel %vm442, %v777, %v784
        %v786 = vrot.slane %v781, 4
        %v788 = vshrl.u32 %v440, 16
        %v790 = vrot.slane %v788, 7
        %v791 = vshll.u32 %v440, 16
        %v793 = vor.u32 %v790, %v791
        %v794 = vsel %vm442, %v786, %v793
        %v795 = vld [vmem:[#allocation6] sm:$0xf]
        %v796 = vld [vmem:[#allocation6 + $0x4] sm:$0xf]
        %v797 = vld [vmem:[#allocation6 + $0x8] sm:$0xf]
        %v798 = vld [vmem:[#allocation6 + $0xc] sm:$0xf]
        %v799 = vld [vmem:[#allocation6 + $0x10] sm:$0xf]
        %v800 = vld [vmem:[#allocation6 + $0x14] sm:$0xf]
        %v801 = vld [vmem:[#allocation6 + $0x18] sm:$0xf]
        %v802 = vld [vmem:[#allocation6 + $0x1c] sm:$0xf]
        %v803 = vld [vmem:[#allocation6 + $0x20] sm:$0xf]
        %v804 = vld [vmem:[#allocation6 + $0x24] sm:$0xf]
        %v805 = vld [vmem:[#allocation6 + $0x28] sm:$0xf]
        %v806 = vld [vmem:[#allocation6 + $0x2c] sm:$0xf]
        %v807 = vld [vmem:[#allocation6 + $0x30] sm:$0xf]
        %v808 = vld [vmem:[#allocation6 + $0x34] sm:$0xf]
        %v809 = vld [vmem:[#allocation6 + $0x38] sm:$0xf]
        %v810 = vld [vmem:[#allocation6 + $0x3c] sm:$0xf]
        %v811 = vunpack.c.l.b16 %v455
        %v812 = vunpack.c.l.b16 %v464
        %v813 = vunpack.c.l.b16 %v477
        %v814 = vunpack.c.l.b16 %v486
        %v815 = vunpack.c.l.b16 %v499
        %v816 = vunpack.c.l.b16 %v508
        %v817 = vunpack.c.l.b16 %v521
        %v818 = vunpack.c.l.b16 %v530
        %v819 = vunpack.c.l.b16 %v543
        %v820 = vunpack.c.l.b16 %v552
        %v821 = vunpack.c.l.b16 %v565
        %v822 = vunpack.c.l.b16 %v574
        %v823 = vunpack.c.l.b16 %v587
        %v824 = vunpack.c.l.b16 %v596
        %v825 = vunpack.c.l.b16 %v609
        %v826 = vunpack.c.l.b16 %v618
        %v827 = vunpack.c.l.b16 %v631
        %v828 = vunpack.c.l.b16 %v640
        %v829 = vunpack.c.l.b16 %v653
        %v830 = vunpack.c.l.b16 %v662
        %v831 = vunpack.c.l.b16 %v675
        %v832 = vunpack.c.l.b16 %v684
        %v833 = vunpack.c.l.b16 %v697
        %v834 = vunpack.c.l.b16 %v706
        %v835 = vunpack.c.l.b16 %v719
        %v836 = vunpack.c.l.b16 %v728
        %v837 = vunpack.c.l.b16 %v741
        %v838 = vunpack.c.l.b16 %v750
        %v839 = vunpack.c.l.b16 %v763
        %v840 = vunpack.c.l.b16 %v772
        %v841 = vunpack.c.l.b16 %v785
        %v842 = vunpack.c.l.b16 %v794
        %v843 = vpack.c.b16 %v812, %v811
        %v844 = vpack.c.b16 %v814, %v813
        %v845 = vpack.c.b16 %v816, %v815
        %v846 = vpack.c.b16 %v818, %v817
        %v847 = vpack.c.b16 %v820, %v819
        %v848 = vpack.c.b16 %v822, %v821
        %v849 = vpack.c.b16 %v824, %v823
        %v850 = vpack.c.b16 %v826, %v825
        %v851 = vpack.c.b16 %v828, %v827
        %v852 = vpack.c.b16 %v830, %v829
        %v853 = vpack.c.b16 %v832, %v831
        %v854 = vpack.c.b16 %v834, %v833
        %v855 = vpack.c.b16 %v836, %v835
        %v856 = vpack.c.b16 %v838, %v837
        %v857 = vpack.c.b16 %v840, %v839
        %v858 = vpack.c.b16 %v842, %v841
        %v891 = vunpack.c.l.b16 %v795
        %v892 = vunpack.c.l.b16 %v796
        %v893 = vunpack.c.l.b16 %v797
        %v894 = vunpack.c.l.b16 %v798
        %v895 = vunpack.c.l.b16 %v799
        %v896 = vunpack.c.l.b16 %v800
        %v897 = vunpack.c.l.b16 %v801
        %v898 = vunpack.c.l.b16 %v802
        %v899 = vunpack.c.l.b16 %v803
        %v900 = vunpack.c.l.b16 %v804
        %v901 = vunpack.c.l.b16 %v805
        %v902 = vunpack.c.l.b16 %v806
        %v903 = vunpack.c.l.b16 %v807
        %v904 = vunpack.c.l.b16 %v808
        %v905 = vunpack.c.l.b16 %v809
        %v906 = vunpack.c.l.b16 %v810
        %v907 = vpack.c.b16 %v892, %v891
        %v908 = vpack.c.b16 %v894, %v893
        %v909 = vpack.c.b16 %v896, %v895
        %v910 = vpack.c.b16 %v898, %v897
        %v911 = vpack.c.b16 %v900, %v899
        %v912 = vpack.c.b16 %v902, %v901
        %v913 = vpack.c.b16 %v904, %v903
        %v914 = vpack.c.b16 %v906, %v905
        %923 = vmatprep.subr.bf16.mxu0 0
        %924 = vmatpush1.bf16.msra.mxu0 %v914
        %925 = vmatprep.subr.bf16.mxu0 0
        %926 = vmatpush1.bf16.msra.mxu0 %v913
        %927 = vmatprep.subr.bf16.mxu0 0
        %928 = vmatpush1.bf16.msra.mxu0 %v912
        %929 = vmatprep.subr.bf16.mxu0 0
        %930 = vmatpush1.bf16.msra.mxu0 %v911
        %931 = vmatprep.subr.bf16.mxu0 0
        %932 = vmatpush1.bf16.msra.mxu0 %v910
        %933 = vmatprep.subr.bf16.mxu0 0
        %934 = vmatpush1.bf16.msra.mxu0 %v909
        %935 = vmatprep.subr.bf16.mxu0 0
        %936 = vmatpush1.bf16.msra.mxu0 %v908
        %937 = vmatprep.subr.bf16.mxu0 0
        %938 = vmatpush1.bf16.msra.mxu0 %v907
        %939 = vmatprep.subr.bf16.mxu0 0
        %940 = vmatpush2.bf16.msra.mxu0 0
        %941 = vmatprep.subr.bf16.mxu0 0
        %942 = vmatpush2.bf16.msra.mxu0 0
        %943 = vmatprep.subr.bf16.mxu0 0
        %944 = vmatpush2.bf16.msra.mxu0 0
        %945 = vmatprep.subr.bf16.mxu0 0
        %946 = vmatpush2.bf16.msra.mxu0 0
        %947 = vmatprep.subr.bf16.mxu0 0
        %948 = vmatpush2.bf16.msra.mxu0 0
        %949 = vmatprep.subr.bf16.mxu0 0
        %950 = vmatpush2.bf16.msra.mxu0 0
        %951 = vmatprep.subr.bf16.mxu0 0
        %952 = vmatpush2.bf16.msra.mxu0 0
        %953 = vmatprep.subr.bf16.mxu0 0
        %954 = vmatpush2.bf16.msra.mxu0 0
        %955 = vmatprep.mubr.bf16.mxu0 0
        %956 = vmatmul.mubr.bf16.gmra.mxu0 %v843
        %v957 = vpop.f32.mrf.mxu0
        %v958 = vadd.f32 0.0, %v957
        %v959 = vpop.f32.mrf.mxu0
        %v960 = vpop.f32.mrf.mxu0
        %v961 = vadd.f32 0.0, %v960
        %v962 = vpop.f32.mrf.mxu0
        %963 = vmatprep.mubr.bf16.mxu0 0
        %964 = vmatmul.mubr.bf16.gmra.mxu0 %v844
        %v965 = vpop.f32.mrf.mxu0
        %v966 = vadd.f32 0.0, %v965
        %v967 = vpop.f32.mrf.mxu0
        %v968 = vpop.f32.mrf.mxu0
        %v969 = vadd.f32 0.0, %v968
        %v970 = vpop.f32.mrf.mxu0
        %971 = vmatprep.mubr.bf16.mxu0 0
        %972 = vmatmul.mubr.bf16.gmra.mxu0 %v845
        %v973 = vpop.f32.mrf.mxu0
        %v974 = vadd.f32 0.0, %v973
        %v975 = vpop.f32.mrf.mxu0
        %v976 = vpop.f32.mrf.mxu0
        %v977 = vadd.f32 0.0, %v976
        %v978 = vpop.f32.mrf.mxu0
        %979 = vmatprep.mubr.bf16.mxu0 0
        %980 = vmatmul.mubr.bf16.gmra.mxu0 %v846
        %v981 = vpop.f32.mrf.mxu0
        %v982 = vadd.f32 0.0, %v981
        %v983 = vpop.f32.mrf.mxu0
        %v984 = vpop.f32.mrf.mxu0
        %v985 = vadd.f32 0.0, %v984
        %v986 = vpop.f32.mrf.mxu0
        %987 = vmatprep.mubr.bf16.mxu0 0
        %988 = vmatmul.mubr.bf16.gmra.mxu0 %v847
        %v989 = vpop.f32.mrf.mxu0
        %v990 = vadd.f32 0.0, %v989
        %v991 = vpop.f32.mrf.mxu0
        %v992 = vpop.f32.mrf.mxu0
        %v993 = vadd.f32 0.0, %v992
        %v994 = vpop.f32.mrf.mxu0
        %995 = vmatprep.mubr.bf16.mxu0 0
        %996 = vmatmul.mubr.bf16.gmra.mxu0 %v848
        %v997 = vpop.f32.mrf.mxu0
        %v998 = vadd.f32 0.0, %v997
        %v999 = vpop.f32.mrf.mxu0
        %v1000 = vpop.f32.mrf.mxu0
        %v1001 = vadd.f32 0.0, %v1000
        %v1002 = vpop.f32.mrf.mxu0
        %1003 = vmatprep.mubr.bf16.mxu0 0
        %1004 = vmatmul.mubr.bf16.gmra.mxu0 %v849
        %v1005 = vpop.f32.mrf.mxu0
        %v1006 = vadd.f32 0.0, %v1005
        %v1007 = vpop.f32.mrf.mxu0
        %v1008 = vpop.f32.mrf.mxu0
        %v1009 = vadd.f32 0.0, %v1008
        %v1010 = vpop.f32.mrf.mxu0
        %1011 = vmatprep.mubr.bf16.mxu0 0
        %1012 = vmatmul.mubr.bf16.gmra.mxu0 %v850
        %v1013 = vpop.f32.mrf.mxu0
        %v1014 = vadd.f32 0.0, %v1013
        %v1015 = vpop.f32.mrf.mxu0
        %v1016 = vpop.f32.mrf.mxu0
        %v1017 = vadd.f32 0.0, %v1016
        %v1018 = vpop.f32.mrf.mxu0
        %1019 = vmatprep.mubr.bf16.mxu0 0
        %1020 = vmatmul.mubr.bf16.gmra.mxu0 %v851
        %v1021 = vpop.f32.mrf.mxu0
        %v1022 = vadd.f32 0.0, %v1021
        %v1023 = vpop.f32.mrf.mxu0
        %v1024 = vpop.f32.mrf.mxu0
        %v1025 = vadd.f32 0.0, %v1024
        %v1026 = vpop.f32.mrf.mxu0
        %1027 = vmatprep.mubr.bf16.mxu0 0
        %1028 = vmatmul.mubr.bf16.gmra.mxu0 %v852
        %v1029 = vpop.f32.mrf.mxu0
        %v1030 = vadd.f32 0.0, %v1029
        %v1031 = vpop.f32.mrf.mxu0
        %v1032 = vpop.f32.mrf.mxu0
        %v1033 = vadd.f32 0.0, %v1032
        %v1034 = vpop.f32.mrf.mxu0
        %1035 = vmatprep.mubr.bf16.mxu0 0
        %1036 = vmatmul.mubr.bf16.gmra.mxu0 %v853
        %v1037 = vpop.f32.mrf.mxu0
        %v1038 = vadd.f32 0.0, %v1037
        %v1039 = vpop.f32.mrf.mxu0
        %v1040 = vpop.f32.mrf.mxu0
        %v1041 = vadd.f32 0.0, %v1040
        %v1042 = vpop.f32.mrf.mxu0
        %1043 = vmatprep.mubr.bf16.mxu0 0
        %1044 = vmatmul.mubr.bf16.gmra.mxu0 %v854
        %v1045 = vpop.f32.mrf.mxu0
        %v1046 = vadd.f32 0.0, %v1045
        %v1047 = vpop.f32.mrf.mxu0
        %v1048 = vpop.f32.mrf.mxu0
        %v1049 = vadd.f32 0.0, %v1048
        %v1050 = vpop.f32.mrf.mxu0
        %1051 = vmatprep.mubr.bf16.mxu0 0
        %1052 = vmatmul.mubr.bf16.gmra.mxu0 %v855
        %v1053 = vpop.f32.mrf.mxu0
        %v1054 = vadd.f32 0.0, %v1053
        %v1055 = vpop.f32.mrf.mxu0
        %v1056 = vpop.f32.mrf.mxu0
        %v1057 = vadd.f32 0.0, %v1056
        %v1058 = vpop.f32.mrf.mxu0
        %1059 = vmatprep.mubr.bf16.mxu0 0
        %1060 = vmatmul.mubr.bf16.gmra.mxu0 %v856
        %v1061 = vpop.f32.mrf.mxu0
        %v1062 = vadd.f32 0.0, %v1061
        %v1063 = vpop.f32.mrf.mxu0
        %v1064 = vpop.f32.mrf.mxu0
        %v1065 = vadd.f32 0.0, %v1064
        %v1066 = vpop.f32.mrf.mxu0
        %1067 = vmatprep.mubr.bf16.mxu0 0
        %1068 = vmatmul.mubr.bf16.gmra.mxu0 %v857
        %v1069 = vpop.f32.mrf.mxu0
        %v1070 = vadd.f32 0.0, %v1069
        %v1071 = vpop.f32.mrf.mxu0
        %v1072 = vpop.f32.mrf.mxu0
        %v1073 = vadd.f32 0.0, %v1072
        %v1074 = vpop.f32.mrf.mxu0
        %1075 = vmatprep.mubr.bf16.mxu0 0
        %1076 = vmatmul.mubr.bf16.gmra.mxu0 %v858
        %v1077 = vpop.f32.mrf.mxu0
        %v1078 = vadd.f32 0.0, %v1077
        %v1079 = vpop.f32.mrf.mxu0
        %v1080 = vpop.f32.mrf.mxu0
        %v1081 = vadd.f32 0.0, %v1080
        %v1082 = vpop.f32.mrf.mxu0
        %1083 = vdwg.mxu0
        %v1084 = vadd.f32 %v392, %v958
        %v1085 = vadd.f32 %v392, %v961
        %v1086 = vadd.f32 %v392, %v966
        %v1087 = vadd.f32 %v392, %v969
        %v1088 = vadd.f32 %v392, %v974
        %v1089 = vadd.f32 %v392, %v977
        %v1090 = vadd.f32 %v392, %v982
        %v1091 = vadd.f32 %v392, %v985
        %v1092 = vadd.f32 %v392, %v990
        %v1093 = vadd.f32 %v392, %v993
        %v1094 = vadd.f32 %v392, %v998
        %v1095 = vadd.f32 %v392, %v1001
        %v1096 = vadd.f32 %v392, %v1006
        %v1097 = vadd.f32 %v392, %v1009
        %v1098 = vadd.f32 %v392, %v1014
        %v1099 = vadd.f32 %v392, %v1017
        %v1100 = vadd.f32 %v392, %v1022
        %v1101 = vadd.f32 %v392, %v1025
        %v1102 = vadd.f32 %v392, %v1030
        %v1103 = vadd.f32 %v392, %v1033
        %v1104 = vadd.f32 %v392, %v1038
        %v1105 = vadd.f32 %v392, %v1041
        %v1106 = vadd.f32 %v392, %v1046
        %v1107 = vadd.f32 %v392, %v1049
        %v1108 = vadd.f32 %v392, %v1054
        %v1109 = vadd.f32 %v392, %v1057
        %v1110 = vadd.f32 %v392, %v1062
        %v1111 = vadd.f32 %v392, %v1065
        %v1112 = vadd.f32 %v392, %v1070
        %v1113 = vadd.f32 %v392, %v1073
        %v1114 = vadd.f32 %v392, %v1078
        %v1115 = vadd.f32 %v392, %v1081
        %s1116 = scalar_lea.vmem [#allocation6], 64
        %v1117 = vld [vmem:[%s1116] sm:$0xf]
        %v1118 = vld [vmem:[%s1116 + $0x4] sm:$0xf]
        %v1119 = vld [vmem:[%s1116 + $0x8] sm:$0xf]
        %v1120 = vld [vmem:[%s1116 + $0xc] sm:$0xf]
        %v1121 = vld [vmem:[%s1116 + $0x10] sm:$0xf]
        %v1122 = vld [vmem:[%s1116 + $0x14] sm:$0xf]
        %v1123 = vld [vmem:[%s1116 + $0x18] sm:$0xf]
        %v1124 = vld [vmem:[%s1116 + $0x1c] sm:$0xf]
        %v1125 = vld [vmem:[%s1116 + $0x20] sm:$0xf]
        %v1126 = vld [vmem:[%s1116 + $0x24] sm:$0xf]
        %v1127 = vld [vmem:[%s1116 + $0x28] sm:$0xf]
        %v1128 = vld [vmem:[%s1116 + $0x2c] sm:$0xf]
        %v1129 = vld [vmem:[%s1116 + $0x30] sm:$0xf]
        %v1130 = vld [vmem:[%s1116 + $0x34] sm:$0xf]
        %v1131 = vld [vmem:[%s1116 + $0x38] sm:$0xf]
        %v1132 = vld [vmem:[%s1116 + $0x3c] sm:$0xf]
        %v1165 = vunpack.c.l.b16 %v394
        %v1166 = vunpack.c.l.b16 %v395
        %v1167 = vunpack.c.l.b16 %v397
        %v1168 = vunpack.c.l.b16 %v398
        %v1169 = vunpack.c.l.b16 %v400
        %v1170 = vunpack.c.l.b16 %v401
        %v1171 = vunpack.c.l.b16 %v403
        %v1172 = vunpack.c.l.b16 %v404
        %v1173 = vunpack.c.l.b16 %v406
        %v1174 = vunpack.c.l.b16 %v407
        %v1175 = vunpack.c.l.b16 %v409
        %v1176 = vunpack.c.l.b16 %v410
        %v1177 = vunpack.c.l.b16 %v412
        %v1178 = vunpack.c.l.b16 %v413
        %v1179 = vunpack.c.l.b16 %v415
        %v1180 = vunpack.c.l.b16 %v416
        %v1181 = vunpack.c.l.b16 %v418
        %v1182 = vunpack.c.l.b16 %v419
        %v1183 = vunpack.c.l.b16 %v421
        %v1184 = vunpack.c.l.b16 %v422
        %v1185 = vunpack.c.l.b16 %v424
        %v1186 = vunpack.c.l.b16 %v425
        %v1187 = vunpack.c.l.b16 %v427
        %v1188 = vunpack.c.l.b16 %v428
        %v1189 = vunpack.c.l.b16 %v430
        %v1190 = vunpack.c.l.b16 %v431
        %v1191 = vunpack.c.l.b16 %v433
        %v1192 = vunpack.c.l.b16 %v434
        %v1193 = vunpack.c.l.b16 %v436
        %v1194 = vunpack.c.l.b16 %v437
        %v1195 = vunpack.c.l.b16 %v439
        %v1196 = vunpack.c.l.b16 %v440
        %v1197 = vpack.c.b16 %v1166, %v1165
        %v1198 = vpack.c.b16 %v1168, %v1167
        %v1199 = vpack.c.b16 %v1170, %v1169
        %v1200 = vpack.c.b16 %v1172, %v1171
        %v1201 = vpack.c.b16 %v1174, %v1173
        %v1202 = vpack.c.b16 %v1176, %v1175
        %v1203 = vpack.c.b16 %v1178, %v1177
        %v1204 = vpack.c.b16 %v1180, %v1179
        %v1205 = vpack.c.b16 %v1182, %v1181
        %v1206 = vpack.c.b16 %v1184, %v1183
        %v1207 = vpack.c.b16 %v1186, %v1185
        %v1208 = vpack.c.b16 %v1188, %v1187
        %v1209 = vpack.c.b16 %v1190, %v1189
        %v1210 = vpack.c.b16 %v1192, %v1191
        %v1211 = vpack.c.b16 %v1194, %v1193
        %v1212 = vpack.c.b16 %v1196, %v1195
        %v1245 = vunpack.c.l.b16 %v1117
        %v1246 = vunpack.c.l.b16 %v1118
        %v1247 = vunpack.c.l.b16 %v1119
        %v1248 = vunpack.c.l.b16 %v1120
        %v1249 = vunpack.c.l.b16 %v1121
        %v1250 = vunpack.c.l.b16 %v1122
        %v1251 = vunpack.c.l.b16 %v1123
        %v1252 = vunpack.c.l.b16 %v1124
        %v1253 = vunpack.c.l.b16 %v1125
        %v1254 = vunpack.c.l.b16 %v1126
        %v1255 = vunpack.c.l.b16 %v1127
        %v1256 = vunpack.c.l.b16 %v1128
        %v1257 = vunpack.c.l.b16 %v1129
        %v1258 = vunpack.c.l.b16 %v1130
        %v1259 = vunpack.c.l.b16 %v1131
        %v1260 = vunpack.c.l.b16 %v1132
        %v1261 = vpack.c.b16 %v1246, %v1245
        %v1262 = vpack.c.b16 %v1248, %v1247
        %v1263 = vpack.c.b16 %v1250, %v1249
        %v1264 = vpack.c.b16 %v1252, %v1251
        %v1265 = vpack.c.b16 %v1254, %v1253
        %v1266 = vpack.c.b16 %v1256, %v1255
        %v1267 = vpack.c.b16 %v1258, %v1257
        %v1268 = vpack.c.b16 %v1260, %v1259
        %1277 = vmatprep.subr.bf16.mxu0 0
        %1278 = vmatpush1.bf16.msra.mxu0 %v1268
        %1279 = vmatprep.subr.bf16.mxu0 0
        %1280 = vmatpush1.bf16.msra.mxu0 %v1267
        %1281 = vmatprep.subr.bf16.mxu0 0
        %1282 = vmatpush1.bf16.msra.mxu0 %v1266
        %1283 = vmatprep.subr.bf16.mxu0 0
        %1284 = vmatpush1.bf16.msra.mxu0 %v1265
        %1285 = vmatprep.subr.bf16.mxu0 0
        %1286 = vmatpush1.bf16.msra.mxu0 %v1264
        %1287 = vmatprep.subr.bf16.mxu0 0
        %1288 = vmatpush1.bf16.msra.mxu0 %v1263
        %1289 = vmatprep.subr.bf16.mxu0 0
        %1290 = vmatpush1.bf16.msra.mxu0 %v1262
        %1291 = vmatprep.subr.bf16.mxu0 0
        %1292 = vmatpush1.bf16.msra.mxu0 %v1261
        %1293 = vmatprep.subr.bf16.mxu0 0
        %1294 = vmatpush2.bf16.msra.mxu0 0
        %1295 = vmatprep.subr.bf16.mxu0 0
        %1296 = vmatpush2.bf16.msra.mxu0 0
        %1297 = vmatprep.subr.bf16.mxu0 0
        %1298 = vmatpush2.bf16.msra.mxu0 0
        %1299 = vmatprep.subr.bf16.mxu0 0
        %1300 = vmatpush2.bf16.msra.mxu0 0
        %1301 = vmatprep.subr.bf16.mxu0 0
        %1302 = vmatpush2.bf16.msra.mxu0 0
        %1303 = vmatprep.subr.bf16.mxu0 0
        %1304 = vmatpush2.bf16.msra.mxu0 0
        %1305 = vmatprep.subr.bf16.mxu0 0
        %1306 = vmatpush2.bf16.msra.mxu0 0
        %1307 = vmatprep.subr.bf16.mxu0 0
        %1308 = vmatpush2.bf16.msra.mxu0 0
        %1309 = vmatprep.mubr.bf16.mxu0 0
        %1310 = vmatmul.mubr.bf16.gmra.mxu0 %v1197
        %v1311 = vpop.f32.mrf.mxu0
        %v1312 = vadd.f32 0.0, %v1311
        %v1313 = vpop.f32.mrf.mxu0
        %v1314 = vpop.f32.mrf.mxu0
        %v1315 = vadd.f32 0.0, %v1314
        %v1316 = vpop.f32.mrf.mxu0
        %1317 = vmatprep.mubr.bf16.mxu0 0
        %1318 = vmatmul.mubr.bf16.gmra.mxu0 %v1198
        %v1319 = vpop.f32.mrf.mxu0
        %v1320 = vadd.f32 0.0, %v1319
        %v1321 = vpop.f32.mrf.mxu0
        %v1322 = vpop.f32.mrf.mxu0
        %v1323 = vadd.f32 0.0, %v1322
        %v1324 = vpop.f32.mrf.mxu0
        %1325 = vmatprep.mubr.bf16.mxu0 0
        %1326 = vmatmul.mubr.bf16.gmra.mxu0 %v1199
        %v1327 = vpop.f32.mrf.mxu0
        %v1328 = vadd.f32 0.0, %v1327
        %v1329 = vpop.f32.mrf.mxu0
        %v1330 = vpop.f32.mrf.mxu0
        %v1331 = vadd.f32 0.0, %v1330
        %v1332 = vpop.f32.mrf.mxu0
        %1333 = vmatprep.mubr.bf16.mxu0 0
        %1334 = vmatmul.mubr.bf16.gmra.mxu0 %v1200
        %v1335 = vpop.f32.mrf.mxu0
        %v1336 = vadd.f32 0.0, %v1335
        %v1337 = vpop.f32.mrf.mxu0
        %v1338 = vpop.f32.mrf.mxu0
        %v1339 = vadd.f32 0.0, %v1338
        %v1340 = vpop.f32.mrf.mxu0
        %1341 = vmatprep.mubr.bf16.mxu0 0
        %1342 = vmatmul.mubr.bf16.gmra.mxu0 %v1201
        %v1343 = vpop.f32.mrf.mxu0
        %v1344 = vadd.f32 0.0, %v1343
        %v1345 = vpop.f32.mrf.mxu0
        %v1346 = vpop.f32.mrf.mxu0
        %v1347 = vadd.f32 0.0, %v1346
        %v1348 = vpop.f32.mrf.mxu0
        %1349 = vmatprep.mubr.bf16.mxu0 0
        %1350 = vmatmul.mubr.bf16.gmra.mxu0 %v1202
        %v1351 = vpop.f32.mrf.mxu0
        %v1352 = vadd.f32 0.0, %v1351
        %v1353 = vpop.f32.mrf.mxu0
        %v1354 = vpop.f32.mrf.mxu0
        %v1355 = vadd.f32 0.0, %v1354
        %v1356 = vpop.f32.mrf.mxu0
        %1357 = vmatprep.mubr.bf16.mxu0 0
        %1358 = vmatmul.mubr.bf16.gmra.mxu0 %v1203
        %v1359 = vpop.f32.mrf.mxu0
        %v1360 = vadd.f32 0.0, %v1359
        %v1361 = vpop.f32.mrf.mxu0
        %v1362 = vpop.f32.mrf.mxu0
        %v1363 = vadd.f32 0.0, %v1362
        %v1364 = vpop.f32.mrf.mxu0
        %1365 = vmatprep.mubr.bf16.mxu0 0
        %1366 = vmatmul.mubr.bf16.gmra.mxu0 %v1204
        %v1367 = vpop.f32.mrf.mxu0
        %v1368 = vadd.f32 0.0, %v1367
        %v1369 = vpop.f32.mrf.mxu0
        %v1370 = vpop.f32.mrf.mxu0
        %v1371 = vadd.f32 0.0, %v1370
        %v1372 = vpop.f32.mrf.mxu0
        %1373 = vmatprep.mubr.bf16.mxu0 0
        %1374 = vmatmul.mubr.bf16.gmra.mxu0 %v1205
        %v1375 = vpop.f32.mrf.mxu0
        %v1376 = vadd.f32 0.0, %v1375
        %v1377 = vpop.f32.mrf.mxu0
        %v1378 = vpop.f32.mrf.mxu0
        %v1379 = vadd.f32 0.0, %v1378
        %v1380 = vpop.f32.mrf.mxu0
        %1381 = vmatprep.mubr.bf16.mxu0 0
        %1382 = vmatmul.mubr.bf16.gmra.mxu0 %v1206
        %v1383 = vpop.f32.mrf.mxu0
        %v1384 = vadd.f32 0.0, %v1383
        %v1385 = vpop.f32.mrf.mxu0
        %v1386 = vpop.f32.mrf.mxu0
        %v1387 = vadd.f32 0.0, %v1386
        %v1388 = vpop.f32.mrf.mxu0
        %1389 = vmatprep.mubr.bf16.mxu0 0
        %1390 = vmatmul.mubr.bf16.gmra.mxu0 %v1207
        %v1391 = vpop.f32.mrf.mxu0
        %v1392 = vadd.f32 0.0, %v1391
        %v1393 = vpop.f32.mrf.mxu0
        %v1394 = vpop.f32.mrf.mxu0
        %v1395 = vadd.f32 0.0, %v1394
        %v1396 = vpop.f32.mrf.mxu0
        %1397 = vmatprep.mubr.bf16.mxu0 0
        %1398 = vmatmul.mubr.bf16.gmra.mxu0 %v1208
        %v1399 = vpop.f32.mrf.mxu0
        %v1400 = vadd.f32 0.0, %v1399
        %v1401 = vpop.f32.mrf.mxu0
        %v1402 = vpop.f32.mrf.mxu0
        %v1403 = vadd.f32 0.0, %v1402
        %v1404 = vpop.f32.mrf.mxu0
        %1405 = vmatprep.mubr.bf16.mxu0 0
        %1406 = vmatmul.mubr.bf16.gmra.mxu0 %v1209
        %v1407 = vpop.f32.mrf.mxu0
        %v1408 = vadd.f32 0.0, %v1407
        %v1409 = vpop.f32.mrf.mxu0
        %v1410 = vpop.f32.mrf.mxu0
        %v1411 = vadd.f32 0.0, %v1410
        %v1412 = vpop.f32.mrf.mxu0
        %1413 = vmatprep.mubr.bf16.mxu0 0
        %1414 = vmatmul.mubr.bf16.gmra.mxu0 %v1210
        %v1415 = vpop.f32.mrf.mxu0
        %v1416 = vadd.f32 0.0, %v1415
        %v1417 = vpop.f32.mrf.mxu0
        %v1418 = vpop.f32.mrf.mxu0
        %v1419 = vadd.f32 0.0, %v1418
        %v1420 = vpop.f32.mrf.mxu0
        %1421 = vmatprep.mubr.bf16.mxu0 0
        %1422 = vmatmul.mubr.bf16.gmra.mxu0 %v1211
        %v1423 = vpop.f32.mrf.mxu0
        %v1424 = vadd.f32 0.0, %v1423
        %v1425 = vpop.f32.mrf.mxu0
        %v1426 = vpop.f32.mrf.mxu0
        %v1427 = vadd.f32 0.0, %v1426
        %v1428 = vpop.f32.mrf.mxu0
        %1429 = vmatprep.mubr.bf16.mxu0 0
        %1430 = vmatmul.mubr.bf16.gmra.mxu0 %v1212
        %v1431 = vpop.f32.mrf.mxu0
        %v1432 = vadd.f32 0.0, %v1431
        %v1433 = vpop.f32.mrf.mxu0
        %v1434 = vpop.f32.mrf.mxu0
        %v1435 = vadd.f32 0.0, %v1434
        %v1436 = vpop.f32.mrf.mxu0
        %1437 = vdwg.mxu0
        %v1438 = vadd.f32 %v1084, %v1312
        %v1439 = vadd.f32 %v1085, %v1315
        %v1440 = vadd.f32 %v1086, %v1320
        %v1441 = vadd.f32 %v1087, %v1323
        %v1442 = vadd.f32 %v1088, %v1328
        %v1443 = vadd.f32 %v1089, %v1331
        %v1444 = vadd.f32 %v1090, %v1336
        %v1445 = vadd.f32 %v1091, %v1339
        %v1446 = vadd.f32 %v1092, %v1344
        %v1447 = vadd.f32 %v1093, %v1347
        %v1448 = vadd.f32 %v1094, %v1352
        %v1449 = vadd.f32 %v1095, %v1355
        %v1450 = vadd.f32 %v1096, %v1360
        %v1451 = vadd.f32 %v1097, %v1363
        %v1452 = vadd.f32 %v1098, %v1368
        %v1453 = vadd.f32 %v1099, %v1371
        %v1454 = vadd.f32 %v1100, %v1376
        %v1455 = vadd.f32 %v1101, %v1379
        %v1456 = vadd.f32 %v1102, %v1384
        %v1457 = vadd.f32 %v1103, %v1387
        %v1458 = vadd.f32 %v1104, %v1392
        %v1459 = vadd.f32 %v1105, %v1395
        %v1460 = vadd.f32 %v1106, %v1400
        %v1461 = vadd.f32 %v1107, %v1403
        %v1462 = vadd.f32 %v1108, %v1408
        %v1463 = vadd.f32 %v1109, %v1411
        %v1464 = vadd.f32 %v1110, %v1416
        %v1465 = vadd.f32 %v1111, %v1419
        %v1466 = vadd.f32 %v1112, %v1424
        %v1467 = vadd.f32 %v1113, %v1427
        %v1468 = vadd.f32 %v1114, %v1432
        %v1469 = vadd.f32 %v1115, %v1435
        %v1470 = vld [vmem:[#allocation2 + $0x8] sm:$0xf]
        %v1471 = vld [vmem:[#allocation2 + $0xc] sm:$0xf]
        %v1472 = vld [vmem:[#allocation2 + $0x10] sm:$0x1]
        %v1473 = vld [vmem:[#allocation2 + $0x20] sm:$0xf]
        %v1474 = vld [vmem:[#allocation2 + $0x24] sm:$0xf]
        %v1475 = vld [vmem:[#allocation2 + $0x28] sm:$0x1]
        %v1476 = vld [vmem:[#allocation2 + $0x38] sm:$0xf]
        %v1477 = vld [vmem:[#allocation2 + $0x3c] sm:$0xf]
        %v1478 = vld [vmem:[#allocation2 + $0x40] sm:$0x1]
        %v1479 = vld [vmem:[#allocation2 + $0x50] sm:$0xf]
        %v1480 = vld [vmem:[#allocation2 + $0x54] sm:$0xf]
        %v1481 = vld [vmem:[#allocation2 + $0x58] sm:$0x1]
        %v1482 = vld [vmem:[#allocation2 + $0x68] sm:$0xf]
        %v1483 = vld [vmem:[#allocation2 + $0x6c] sm:$0xf]
        %v1484 = vld [vmem:[#allocation2 + $0x70] sm:$0x1]
        %v1485 = vld [vmem:[#allocation2 + $0x80] sm:$0xf]
        %v1486 = vld [vmem:[#allocation2 + $0x84] sm:$0xf]
        %v1487 = vld [vmem:[#allocation2 + $0x88] sm:$0x1]
        %v1488 = vld [vmem:[#allocation2 + $0x98] sm:$0xf]
        %v1489 = vld [vmem:[#allocation2 + $0x9c] sm:$0xf]
        %v1490 = vld [vmem:[#allocation2 + $0xa0] sm:$0x1]
        %v1491 = vld [vmem:[#allocation2 + $0xb0] sm:$0xf]
        %v1492 = vld [vmem:[#allocation2 + $0xb4] sm:$0xf]
        %v1493 = vld [vmem:[#allocation2 + $0xb8] sm:$0x1]
        %v1494 = vld [vmem:[#allocation2 + $0xc8] sm:$0xf]
        %v1495 = vld [vmem:[#allocation2 + $0xcc] sm:$0xf]
        %v1496 = vld [vmem:[#allocation2 + $0xd0] sm:$0x1]
        %v1497 = vld [vmem:[#allocation2 + $0xe0] sm:$0xf]
        %v1498 = vld [vmem:[#allocation2 + $0xe4] sm:$0xf]
        %v1499 = vld [vmem:[#allocation2 + $0xe8] sm:$0x1]
        %v1500 = vld [vmem:[#allocation2 + $0xf8] sm:$0xf]
        %v1501 = vld [vmem:[#allocation2 + $0xfc] sm:$0xf]
        %v1502 = vld [vmem:[#allocation2 + $0x100] sm:$0x1]
        %v1503 = vld [vmem:[#allocation2 + $0x110] sm:$0xf]
        %v1504 = vld [vmem:[#allocation2 + $0x114] sm:$0xf]
        %v1505 = vld [vmem:[#allocation2 + $0x118] sm:$0x1]
        %v1506 = vld [vmem:[#allocation2 + $0x128] sm:$0xf]
        %v1507 = vld [vmem:[#allocation2 + $0x12c] sm:$0xf]
        %v1508 = vld [vmem:[#allocation2 + $0x130] sm:$0x1]
        %v1509 = vld [vmem:[#allocation2 + $0x140] sm:$0xf]
        %v1510 = vld [vmem:[#allocation2 + $0x144] sm:$0xf]
        %v1511 = vld [vmem:[#allocation2 + $0x148] sm:$0x1]
        %v1512 = vld [vmem:[#allocation2 + $0x158] sm:$0xf]
        %v1513 = vld [vmem:[#allocation2 + $0x15c] sm:$0xf]
        %v1514 = vld [vmem:[#allocation2 + $0x160] sm:$0x1]
        %v1515 = vld [vmem:[#allocation2 + $0x170] sm:$0xf]
        %v1516 = vld [vmem:[#allocation2 + $0x174] sm:$0xf]
        %v1517 = vld [vmem:[#allocation2 + $0x178] sm:$0x1]
        %vm1518 = vsmask.f32 3328
        %vm1519 = vsmask.f32 7440
        %vm1520 = vmor %vm1518, %vm1519
        %v1522 = vshrl.u32 %v1470, 16
        %v1524 = vrot.slane %v1522, 4
        %v1525 = vshll.u32 %v1470, 16
        %v1527 = vrot.slane %v1525, 5
        %v1528 = vor.u32 %v1524, %v1527
        %v1529 = vrot.slane %v1528, 4
        %v1531 = vshll.u32 %v1471, 16
        %v1533 = vrot.slane %v1531, 5
        %v1534 = vsel %vm1520, %v1529, %v1533
        %v1535 = vshrl.u32 %v1471, 16
        %v1537 = vrot.slane %v1535, 4
        %v1538 = vor.u32 %v1537, %v1533
        %v1539 = vrot.slane %v1538, 4
        %v1541 = vshll.u32 %v1472, 16
        %v1543 = vrot.slane %v1541, 5
        %v1544 = vsel %vm1520, %v1539, %v1543
        %v1546 = vshrl.u32 %v1473, 16
        %v1548 = vrot.slane %v1546, 4
        %v1549 = vshll.u32 %v1473, 16
        %v1551 = vrot.slane %v1549, 5
        %v1552 = vor.u32 %v1548, %v1551
        %v1553 = vrot.slane %v1552, 4
        %v1555 = vshll.u32 %v1474, 16
        %v1557 = vrot.slane %v1555, 5
        %v1558 = vsel %vm1520, %v1553, %v1557
        %v1559 = vshrl.u32 %v1474, 16
        %v1561 = vrot.slane %v1559, 4
        %v1562 = vor.u32 %v1561, %v1557
        %v1563 = vrot.slane %v1562, 4
        %v1565 = vshll.u32 %v1475, 16
        %v1567 = vrot.slane %v1565, 5
        %v1568 = vsel %vm1520, %v1563, %v1567
        %v1570 = vshrl.u32 %v1476, 16
        %v1572 = vrot.slane %v1570, 4
        %v1573 = vshll.u32 %v1476, 16
        %v1575 = vrot.slane %v1573, 5
        %v1576 = vor.u32 %v1572, %v1575
        %v1577 = vrot.slane %v1576, 4
        %v1579 = vshll.u32 %v1477, 16
        %v1581 = vrot.slane %v1579, 5
        %v1582 = vsel %vm1520, %v1577, %v1581
        %v1583 = vshrl.u32 %v1477, 16
        %v1585 = vrot.slane %v1583, 4
        %v1586 = vor.u32 %v1585, %v1581
        %v1587 = vrot.slane %v1586, 4
        %v1589 = vshll.u32 %v1478, 16
        %v1591 = vrot.slane %v1589, 5
        %v1592 = vsel %vm1520, %v1587, %v1591
        %v1594 = vshrl.u32 %v1479, 16
        %v1596 = vrot.slane %v1594, 4
        %v1597 = vshll.u32 %v1479, 16
        %v1599 = vrot.slane %v1597, 5
        %v1600 = vor.u32 %v1596, %v1599
        %v1601 = vrot.slane %v1600, 4
        %v1603 = vshll.u32 %v1480, 16
        %v1605 = vrot.slane %v1603, 5
        %v1606 = vsel %vm1520, %v1601, %v1605
        %v1607 = vshrl.u32 %v1480, 16
        %v1609 = vrot.slane %v1607, 4
        %v1610 = vor.u32 %v1609, %v1605
        %v1611 = vrot.slane %v1610, 4
        %v1613 = vshll.u32 %v1481, 16
        %v1615 = vrot.slane %v1613, 5
        %v1616 = vsel %vm1520, %v1611, %v1615
        %v1618 = vshrl.u32 %v1482, 16
        %v1620 = vrot.slane %v1618, 4
        %v1621 = vshll.u32 %v1482, 16
        %v1623 = vrot.slane %v1621, 5
        %v1624 = vor.u32 %v1620, %v1623
        %v1625 = vrot.slane %v1624, 4
        %v1627 = vshll.u32 %v1483, 16
        %v1629 = vrot.slane %v1627, 5
        %v1630 = vsel %vm1520, %v1625, %v1629
        %v1631 = vshrl.u32 %v1483, 16
        %v1633 = vrot.slane %v1631, 4
        %v1634 = vor.u32 %v1633, %v1629
        %v1635 = vrot.slane %v1634, 4
        %v1637 = vshll.u32 %v1484, 16
        %v1639 = vrot.slane %v1637, 5
        %v1640 = vsel %vm1520, %v1635, %v1639
        %v1642 = vshrl.u32 %v1485, 16
        %v1644 = vrot.slane %v1642, 4
        %v1645 = vshll.u32 %v1485, 16
        %v1647 = vrot.slane %v1645, 5
        %v1648 = vor.u32 %v1644, %v1647
        %v1649 = vrot.slane %v1648, 4
        %v1651 = vshll.u32 %v1486, 16
        %v1653 = vrot.slane %v1651, 5
        %v1654 = vsel %vm1520, %v1649, %v1653
        %v1655 = vshrl.u32 %v1486, 16
        %v1657 = vrot.slane %v1655, 4
        %v1658 = vor.u32 %v1657, %v1653
        %v1659 = vrot.slane %v1658, 4
        %v1661 = vshll.u32 %v1487, 16
        %v1663 = vrot.slane %v1661, 5
        %v1664 = vsel %vm1520, %v1659, %v1663
        %v1666 = vshrl.u32 %v1488, 16
        %v1668 = vrot.slane %v1666, 4
        %v1669 = vshll.u32 %v1488, 16
        %v1671 = vrot.slane %v1669, 5
        %v1672 = vor.u32 %v1668, %v1671
        %v1673 = vrot.slane %v1672, 4
        %v1675 = vshll.u32 %v1489, 16
        %v1677 = vrot.slane %v1675, 5
        %v1678 = vsel %vm1520, %v1673, %v1677
        %v1679 = vshrl.u32 %v1489, 16
        %v1681 = vrot.slane %v1679, 4
        %v1682 = vor.u32 %v1681, %v1677
        %v1683 = vrot.slane %v1682, 4
        %v1685 = vshll.u32 %v1490, 16
        %v1687 = vrot.slane %v1685, 5
        %v1688 = vsel %vm1520, %v1683, %v1687
        %v1690 = vshrl.u32 %v1491, 16
        %v1692 = vrot.slane %v1690, 4
        %v1693 = vshll.u32 %v1491, 16
        %v1695 = vrot.slane %v1693, 5
        %v1696 = vor.u32 %v1692, %v1695
        %v1697 = vrot.slane %v1696, 4
        %v1699 = vshll.u32 %v1492, 16
        %v1701 = vrot.slane %v1699, 5
        %v1702 = vsel %vm1520, %v1697, %v1701
        %v1703 = vshrl.u32 %v1492, 16
        %v1705 = vrot.slane %v1703, 4
        %v1706 = vor.u32 %v1705, %v1701
        %v1707 = vrot.slane %v1706, 4
        %v1709 = vshll.u32 %v1493, 16
        %v1711 = vrot.slane %v1709, 5
        %v1712 = vsel %vm1520, %v1707, %v1711
        %v1714 = vshrl.u32 %v1494, 16
        %v1716 = vrot.slane %v1714, 4
        %v1717 = vshll.u32 %v1494, 16
        %v1719 = vrot.slane %v1717, 5
        %v1720 = vor.u32 %v1716, %v1719
        %v1721 = vrot.slane %v1720, 4
        %v1723 = vshll.u32 %v1495, 16
        %v1725 = vrot.slane %v1723, 5
        %v1726 = vsel %vm1520, %v1721, %v1725
        %v1727 = vshrl.u32 %v1495, 16
        %v1729 = vrot.slane %v1727, 4
        %v1730 = vor.u32 %v1729, %v1725
        %v1731 = vrot.slane %v1730, 4
        %v1733 = vshll.u32 %v1496, 16
        %v1735 = vrot.slane %v1733, 5
        %v1736 = vsel %vm1520, %v1731, %v1735
        %v1738 = vshrl.u32 %v1497, 16
        %v1740 = vrot.slane %v1738, 4
        %v1741 = vshll.u32 %v1497, 16
        %v1743 = vrot.slane %v1741, 5
        %v1744 = vor.u32 %v1740, %v1743
        %v1745 = vrot.slane %v1744, 4
        %v1747 = vshll.u32 %v1498, 16
        %v1749 = vrot.slane %v1747, 5
        %v1750 = vsel %vm1520, %v1745, %v1749
        %v1751 = vshrl.u32 %v1498, 16
        %v1753 = vrot.slane %v1751, 4
        %v1754 = vor.u32 %v1753, %v1749
        %v1755 = vrot.slane %v1754, 4
        %v1757 = vshll.u32 %v1499, 16
        %v1759 = vrot.slane %v1757, 5
        %v1760 = vsel %vm1520, %v1755, %v1759
        %v1762 = vshrl.u32 %v1500, 16
        %v1764 = vrot.slane %v1762, 4
        %v1765 = vshll.u32 %v1500, 16
        %v1767 = vrot.slane %v1765, 5
        %v1768 = vor.u32 %v1764, %v1767
        %v1769 = vrot.slane %v1768, 4
        %v1771 = vshll.u32 %v1501, 16
        %v1773 = vrot.slane %v1771, 5
        %v1774 = vsel %vm1520, %v1769, %v1773
        %v1775 = vshrl.u32 %v1501, 16
        %v1777 = vrot.slane %v1775, 4
        %v1778 = vor.u32 %v1777, %v1773
        %v1779 = vrot.slane %v1778, 4
        %v1781 = vshll.u32 %v1502, 16
        %v1783 = vrot.slane %v1781, 5
        %v1784 = vsel %vm1520, %v1779, %v1783
        %v1786 = vshrl.u32 %v1503, 16
        %v1788 = vrot.slane %v1786, 4
        %v1789 = vshll.u32 %v1503, 16
        %v1791 = vrot.slane %v1789, 5
        %v1792 = vor.u32 %v1788, %v1791
        %v1793 = vrot.slane %v1792, 4
        %v1795 = vshll.u32 %v1504, 16
        %v1797 = vrot.slane %v1795, 5
        %v1798 = vsel %vm1520, %v1793, %v1797
        %v1799 = vshrl.u32 %v1504, 16
        %v1801 = vrot.slane %v1799, 4
        %v1802 = vor.u32 %v1801, %v1797
        %v1803 = vrot.slane %v1802, 4
        %v1805 = vshll.u32 %v1505, 16
        %v1807 = vrot.slane %v1805, 5
        %v1808 = vsel %vm1520, %v1803, %v1807
        %v1810 = vshrl.u32 %v1506, 16
        %v1812 = vrot.slane %v1810, 4
        %v1813 = vshll.u32 %v1506, 16
        %v1815 = vrot.slane %v1813, 5
        %v1816 = vor.u32 %v1812, %v1815
        %v1817 = vrot.slane %v1816, 4
        %v1819 = vshll.u32 %v1507, 16
        %v1821 = vrot.slane %v1819, 5
        %v1822 = vsel %vm1520, %v1817, %v1821
        %v1823 = vshrl.u32 %v1507, 16
        %v1825 = vrot.slane %v1823, 4
        %v1826 = vor.u32 %v1825, %v1821
        %v1827 = vrot.slane %v1826, 4
        %v1829 = vshll.u32 %v1508, 16
        %v1831 = vrot.slane %v1829, 5
        %v1832 = vsel %vm1520, %v1827, %v1831
        %v1834 = vshrl.u32 %v1509, 16
        %v1836 = vrot.slane %v1834, 4
        %v1837 = vshll.u32 %v1509, 16
        %v1839 = vrot.slane %v1837, 5
        %v1840 = vor.u32 %v1836, %v1839
        %v1841 = vrot.slane %v1840, 4
        %v1843 = vshll.u32 %v1510, 16
        %v1845 = vrot.slane %v1843, 5
        %v1846 = vsel %vm1520, %v1841, %v1845
        %v1847 = vshrl.u32 %v1510, 16
        %v1849 = vrot.slane %v1847, 4
        %v1850 = vor.u32 %v1849, %v1845
        %v1851 = vrot.slane %v1850, 4
        %v1853 = vshll.u32 %v1511, 16
        %v1855 = vrot.slane %v1853, 5
        %v1856 = vsel %vm1520, %v1851, %v1855
        %v1858 = vshrl.u32 %v1512, 16
        %v1860 = vrot.slane %v1858, 4
        %v1861 = vshll.u32 %v1512, 16
        %v1863 = vrot.slane %v1861, 5
        %v1864 = vor.u32 %v1860, %v1863
        %v1865 = vrot.slane %v1864, 4
        %v1867 = vshll.u32 %v1513, 16
        %v1869 = vrot.slane %v1867, 5
        %v1870 = vsel %vm1520, %v1865, %v1869
        %v1871 = vshrl.u32 %v1513, 16
        %v1873 = vrot.slane %v1871, 4
        %v1874 = vor.u32 %v1873, %v1869
        %v1875 = vrot.slane %v1874, 4
        %v1877 = vshll.u32 %v1514, 16
        %v1879 = vrot.slane %v1877, 5
        %v1880 = vsel %vm1520, %v1875, %v1879
        %v1882 = vshrl.u32 %v1515, 16
        %v1884 = vrot.slane %v1882, 4
        %v1885 = vshll.u32 %v1515, 16
        %v1887 = vrot.slane %v1885, 5
        %v1888 = vor.u32 %v1884, %v1887
        %v1889 = vrot.slane %v1888, 4
        %v1891 = vshll.u32 %v1516, 16
        %v1893 = vrot.slane %v1891, 5
        %v1894 = vsel %vm1520, %v1889, %v1893
        %v1895 = vshrl.u32 %v1516, 16
        %v1897 = vrot.slane %v1895, 4
        %v1898 = vor.u32 %v1897, %v1893
        %v1899 = vrot.slane %v1898, 4
        %v1901 = vshll.u32 %v1517, 16
        %v1903 = vrot.slane %v1901, 5
        %v1904 = vsel %vm1520, %v1899, %v1903
        %s1905 = scalar_lea.vmem [#allocation6], 128
        %v1906 = vld [vmem:[%s1905] sm:$0xf]
        %v1907 = vld [vmem:[%s1905 + $0x4] sm:$0xf]
        %v1908 = vld [vmem:[%s1905 + $0x8] sm:$0xf]
        %v1909 = vld [vmem:[%s1905 + $0xc] sm:$0xf]
        %v1910 = vld [vmem:[%s1905 + $0x10] sm:$0xf]
        %v1911 = vld [vmem:[%s1905 + $0x14] sm:$0xf]
        %v1912 = vld [vmem:[%s1905 + $0x18] sm:$0xf]
        %v1913 = vld [vmem:[%s1905 + $0x1c] sm:$0xf]
        %v1914 = vld [vmem:[%s1905 + $0x20] sm:$0xf]
        %v1915 = vld [vmem:[%s1905 + $0x24] sm:$0xf]
        %v1916 = vld [vmem:[%s1905 + $0x28] sm:$0xf]
        %v1917 = vld [vmem:[%s1905 + $0x2c] sm:$0xf]
        %v1918 = vld [vmem:[%s1905 + $0x30] sm:$0xf]
        %v1919 = vld [vmem:[%s1905 + $0x34] sm:$0xf]
        %v1920 = vld [vmem:[%s1905 + $0x38] sm:$0xf]
        %v1921 = vld [vmem:[%s1905 + $0x3c] sm:$0xf]
        %v1922 = vunpack.c.l.b16 %v1534
        %v1923 = vunpack.c.l.b16 %v1544
        %v1924 = vunpack.c.l.b16 %v1558
        %v1925 = vunpack.c.l.b16 %v1568
        %v1926 = vunpack.c.l.b16 %v1582
        %v1927 = vunpack.c.l.b16 %v1592
        %v1928 = vunpack.c.l.b16 %v1606
        %v1929 = vunpack.c.l.b16 %v1616
        %v1930 = vunpack.c.l.b16 %v1630
        %v1931 = vunpack.c.l.b16 %v1640
        %v1932 = vunpack.c.l.b16 %v1654
        %v1933 = vunpack.c.l.b16 %v1664
        %v1934 = vunpack.c.l.b16 %v1678
        %v1935 = vunpack.c.l.b16 %v1688
        %v1936 = vunpack.c.l.b16 %v1702
        %v1937 = vunpack.c.l.b16 %v1712
        %v1938 = vunpack.c.l.b16 %v1726
        %v1939 = vunpack.c.l.b16 %v1736
        %v1940 = vunpack.c.l.b16 %v1750
        %v1941 = vunpack.c.l.b16 %v1760
        %v1942 = vunpack.c.l.b16 %v1774
        %v1943 = vunpack.c.l.b16 %v1784
        %v1944 = vunpack.c.l.b16 %v1798
        %v1945 = vunpack.c.l.b16 %v1808
        %v1946 = vunpack.c.l.b16 %v1822
        %v1947 = vunpack.c.l.b16 %v1832
        %v1948 = vunpack.c.l.b16 %v1846
        %v1949 = vunpack.c.l.b16 %v1856
        %v1950 = vunpack.c.l.b16 %v1870
        %v1951 = vunpack.c.l.b16 %v1880
        %v1952 = vunpack.c.l.b16 %v1894
        %v1953 = vunpack.c.l.b16 %v1904
        %v1954 = vpack.c.b16 %v1923, %v1922
        %v1955 = vpack.c.b16 %v1925, %v1924
        %v1956 = vpack.c.b16 %v1927, %v1926
        %v1957 = vpack.c.b16 %v1929, %v1928
        %v1958 = vpack.c.b16 %v1931, %v1930
        %v1959 = vpack.c.b16 %v1933, %v1932
        %v1960 = vpack.c.b16 %v1935, %v1934
        %v1961 = vpack.c.b16 %v1937, %v1936
        %v1962 = vpack.c.b16 %v1939, %v1938
        %v1963 = vpack.c.b16 %v1941, %v1940
        %v1964 = vpack.c.b16 %v1943, %v1942
        %v1965 = vpack.c.b16 %v1945, %v1944
        %v1966 = vpack.c.b16 %v1947, %v1946
        %v1967 = vpack.c.b16 %v1949, %v1948
        %v1968 = vpack.c.b16 %v1951, %v1950
        %v1969 = vpack.c.b16 %v1953, %v1952
        %v2002 = vunpack.c.l.b16 %v1906
        %v2003 = vunpack.c.l.b16 %v1907
        %v2004 = vunpack.c.l.b16 %v1908
        %v2005 = vunpack.c.l.b16 %v1909
        %v2006 = vunpack.c.l.b16 %v1910
        %v2007 = vunpack.c.l.b16 %v1911
        %v2008 = vunpack.c.l.b16 %v1912
        %v2009 = vunpack.c.l.b16 %v1913
        %v2010 = vunpack.c.l.b16 %v1914
        %v2011 = vunpack.c.l.b16 %v1915
        %v2012 = vunpack.c.l.b16 %v1916
        %v2013 = vunpack.c.l.b16 %v1917
        %v2014 = vunpack.c.l.b16 %v1918
        %v2015 = vunpack.c.l.b16 %v1919
        %v2016 = vunpack.c.l.b16 %v1920
        %v2017 = vunpack.c.l.b16 %v1921
        %v2018 = vpack.c.b16 %v2003, %v2002
        %v2019 = vpack.c.b16 %v2005, %v2004
        %v2020 = vpack.c.b16 %v2007, %v2006
        %v2021 = vpack.c.b16 %v2009, %v2008
        %v2022 = vpack.c.b16 %v2011, %v2010
        %v2023 = vpack.c.b16 %v2013, %v2012
        %v2024 = vpack.c.b16 %v2015, %v2014
        %v2025 = vpack.c.b16 %v2017, %v2016
        %2034 = vmatprep.subr.bf16.mxu0 0
        %2035 = vmatpush1.bf16.msra.mxu0 %v2025
        %2036 = vmatprep.subr.bf16.mxu0 0
        %2037 = vmatpush1.bf16.msra.mxu0 %v2024
        %2038 = vmatprep.subr.bf16.mxu0 0
        %2039 = vmatpush1.bf16.msra.mxu0 %v2023
        %2040 = vmatprep.subr.bf16.mxu0 0
        %2041 = vmatpush1.bf16.msra.mxu0 %v2022
        %2042 = vmatprep.subr.bf16.mxu0 0
        %2043 = vmatpush1.bf16.msra.mxu0 %v2021
        %2044 = vmatprep.subr.bf16.mxu0 0
        %2045 = vmatpush1.bf16.msra.mxu0 %v2020
        %2046 = vmatprep.subr.bf16.mxu0 0
        %2047 = vmatpush1.bf16.msra.mxu0 %v2019
        %2048 = vmatprep.subr.bf16.mxu0 0
        %2049 = vmatpush1.bf16.msra.mxu0 %v2018
        %2050 = vmatprep.subr.bf16.mxu0 0
        %2051 = vmatpush2.bf16.msra.mxu0 0
        %2052 = vmatprep.subr.bf16.mxu0 0
        %2053 = vmatpush2.bf16.msra.mxu0 0
        %2054 = vmatprep.subr.bf16.mxu0 0
        %2055 = vmatpush2.bf16.msra.mxu0 0
        %2056 = vmatprep.subr.bf16.mxu0 0
        %2057 = vmatpush2.bf16.msra.mxu0 0
        %2058 = vmatprep.subr.bf16.mxu0 0
        %2059 = vmatpush2.bf16.msra.mxu0 0
        %2060 = vmatprep.subr.bf16.mxu0 0
        %2061 = vmatpush2.bf16.msra.mxu0 0
        %2062 = vmatprep.subr.bf16.mxu0 0
        %2063 = vmatpush2.bf16.msra.mxu0 0
        %2064 = vmatprep.subr.bf16.mxu0 0
        %2065 = vmatpush2.bf16.msra.mxu0 0
        %2066 = vmatprep.mubr.bf16.mxu0 0
        %2067 = vmatmul.mubr.bf16.gmra.mxu0 %v1954
        %v2068 = vpop.f32.mrf.mxu0
        %v2069 = vadd.f32 0.0, %v2068
        %v2070 = vpop.f32.mrf.mxu0
        %v2071 = vpop.f32.mrf.mxu0
        %v2072 = vadd.f32 0.0, %v2071
        %v2073 = vpop.f32.mrf.mxu0
        %2074 = vmatprep.mubr.bf16.mxu0 0
        %2075 = vmatmul.mubr.bf16.gmra.mxu0 %v1955
        %v2076 = vpop.f32.mrf.mxu0
        %v2077 = vadd.f32 0.0, %v2076
        %v2078 = vpop.f32.mrf.mxu0
        %v2079 = vpop.f32.mrf.mxu0
        %v2080 = vadd.f32 0.0, %v2079
        %v2081 = vpop.f32.mrf.mxu0
        %2082 = vmatprep.mubr.bf16.mxu0 0
        %2083 = vmatmul.mubr.bf16.gmra.mxu0 %v1956
        %v2084 = vpop.f32.mrf.mxu0
        %v2085 = vadd.f32 0.0, %v2084
        %v2086 = vpop.f32.mrf.mxu0
        %v2087 = vpop.f32.mrf.mxu0
        %v2088 = vadd.f32 0.0, %v2087
        %v2089 = vpop.f32.mrf.mxu0
        %2090 = vmatprep.mubr.bf16.mxu0 0
        %2091 = vmatmul.mubr.bf16.gmra.mxu0 %v1957
        %v2092 = vpop.f32.mrf.mxu0
        %v2093 = vadd.f32 0.0, %v2092
        %v2094 = vpop.f32.mrf.mxu0
        %v2095 = vpop.f32.mrf.mxu0
        %v2096 = vadd.f32 0.0, %v2095
        %v2097 = vpop.f32.mrf.mxu0
        %2098 = vmatprep.mubr.bf16.mxu0 0
        %2099 = vmatmul.mubr.bf16.gmra.mxu0 %v1958
        %v2100 = vpop.f32.mrf.mxu0
        %v2101 = vadd.f32 0.0, %v2100
        %v2102 = vpop.f32.mrf.mxu0
        %v2103 = vpop.f32.mrf.mxu0
        %v2104 = vadd.f32 0.0, %v2103
        %v2105 = vpop.f32.mrf.mxu0
        %2106 = vmatprep.mubr.bf16.mxu0 0
        %2107 = vmatmul.mubr.bf16.gmra.mxu0 %v1959
        %v2108 = vpop.f32.mrf.mxu0
        %v2109 = vadd.f32 0.0, %v2108
        %v2110 = vpop.f32.mrf.mxu0
        %v2111 = vpop.f32.mrf.mxu0
        %v2112 = vadd.f32 0.0, %v2111
        %v2113 = vpop.f32.mrf.mxu0
        %2114 = vmatprep.mubr.bf16.mxu0 0
        %2115 = vmatmul.mubr.bf16.gmra.mxu0 %v1960
        %v2116 = vpop.f32.mrf.mxu0
        %v2117 = vadd.f32 0.0, %v2116
        %v2118 = vpop.f32.mrf.mxu0
        %v2119 = vpop.f32.mrf.mxu0
        %v2120 = vadd.f32 0.0, %v2119
        %v2121 = vpop.f32.mrf.mxu0
        %2122 = vmatprep.mubr.bf16.mxu0 0
        %2123 = vmatmul.mubr.bf16.gmra.mxu0 %v1961
        %v2124 = vpop.f32.mrf.mxu0
        %v2125 = vadd.f32 0.0, %v2124
        %v2126 = vpop.f32.mrf.mxu0
        %v2127 = vpop.f32.mrf.mxu0
        %v2128 = vadd.f32 0.0, %v2127
        %v2129 = vpop.f32.mrf.mxu0
        %2130 = vmatprep.mubr.bf16.mxu0 0
        %2131 = vmatmul.mubr.bf16.gmra.mxu0 %v1962
        %v2132 = vpop.f32.mrf.mxu0
        %v2133 = vadd.f32 0.0, %v2132
        %v2134 = vpop.f32.mrf.mxu0
        %v2135 = vpop.f32.mrf.mxu0
        %v2136 = vadd.f32 0.0, %v2135
        %v2137 = vpop.f32.mrf.mxu0
        %2138 = vmatprep.mubr.bf16.mxu0 0
        %2139 = vmatmul.mubr.bf16.gmra.mxu0 %v1963
        %v2140 = vpop.f32.mrf.mxu0
        %v2141 = vadd.f32 0.0, %v2140
        %v2142 = vpop.f32.mrf.mxu0
        %v2143 = vpop.f32.mrf.mxu0
        %v2144 = vadd.f32 0.0, %v2143
        %v2145 = vpop.f32.mrf.mxu0
        %2146 = vmatprep.mubr.bf16.mxu0 0
        %2147 = vmatmul.mubr.bf16.gmra.mxu0 %v1964
        %v2148 = vpop.f32.mrf.mxu0
        %v2149 = vadd.f32 0.0, %v2148
        %v2150 = vpop.f32.mrf.mxu0
        %v2151 = vpop.f32.mrf.mxu0
        %v2152 = vadd.f32 0.0, %v2151
        %v2153 = vpop.f32.mrf.mxu0
        %2154 = vmatprep.mubr.bf16.mxu0 0
        %2155 = vmatmul.mubr.bf16.gmra.mxu0 %v1965
        %v2156 = vpop.f32.mrf.mxu0
        %v2157 = vadd.f32 0.0, %v2156
        %v2158 = vpop.f32.mrf.mxu0
        %v2159 = vpop.f32.mrf.mxu0
        %v2160 = vadd.f32 0.0, %v2159
        %v2161 = vpop.f32.mrf.mxu0
        %2162 = vmatprep.mubr.bf16.mxu0 0
        %2163 = vmatmul.mubr.bf16.gmra.mxu0 %v1966
        %v2164 = vpop.f32.mrf.mxu0
        %v2165 = vadd.f32 0.0, %v2164
        %v2166 = vpop.f32.mrf.mxu0
        %v2167 = vpop.f32.mrf.mxu0
        %v2168 = vadd.f32 0.0, %v2167
        %v2169 = vpop.f32.mrf.mxu0
        %2170 = vmatprep.mubr.bf16.mxu0 0
        %2171 = vmatmul.mubr.bf16.gmra.mxu0 %v1967
        %v2172 = vpop.f32.mrf.mxu0
        %v2173 = vadd.f32 0.0, %v2172
        %v2174 = vpop.f32.mrf.mxu0
        %v2175 = vpop.f32.mrf.mxu0
        %v2176 = vadd.f32 0.0, %v2175
        %v2177 = vpop.f32.mrf.mxu0
        %2178 = vmatprep.mubr.bf16.mxu0 0
        %2179 = vmatmul.mubr.bf16.gmra.mxu0 %v1968
        %v2180 = vpop.f32.mrf.mxu0
        %v2181 = vadd.f32 0.0, %v2180
        %v2182 = vpop.f32.mrf.mxu0
        %v2183 = vpop.f32.mrf.mxu0
        %v2184 = vadd.f32 0.0, %v2183
        %v2185 = vpop.f32.mrf.mxu0
        %2186 = vmatprep.mubr.bf16.mxu0 0
        %2187 = vmatmul.mubr.bf16.gmra.mxu0 %v1969
        %v2188 = vpop.f32.mrf.mxu0
        %v2189 = vadd.f32 0.0, %v2188
        %v2190 = vpop.f32.mrf.mxu0
        %v2191 = vpop.f32.mrf.mxu0
        %v2192 = vadd.f32 0.0, %v2191
        %v2193 = vpop.f32.mrf.mxu0
        %2194 = vdwg.mxu0
        %v2195 = vadd.f32 %v1438, %v2069
        %v2196 = vadd.f32 %v1439, %v2072
        %v2197 = vadd.f32 %v1440, %v2077
        %v2198 = vadd.f32 %v1441, %v2080
        %v2199 = vadd.f32 %v1442, %v2085
        %v2200 = vadd.f32 %v1443, %v2088
        %v2201 = vadd.f32 %v1444, %v2093
        %v2202 = vadd.f32 %v1445, %v2096
        %v2203 = vadd.f32 %v1446, %v2101
        %v2204 = vadd.f32 %v1447, %v2104
        %v2205 = vadd.f32 %v1448, %v2109
        %v2206 = vadd.f32 %v1449, %v2112
        %v2207 = vadd.f32 %v1450, %v2117
        %v2208 = vadd.f32 %v1451, %v2120
        %v2209 = vadd.f32 %v1452, %v2125
        %v2210 = vadd.f32 %v1453, %v2128
        %v2211 = vadd.f32 %v1454, %v2133
        %v2212 = vadd.f32 %v1455, %v2136
        %v2213 = vadd.f32 %v1456, %v2141
        %v2214 = vadd.f32 %v1457, %v2144
        %v2215 = vadd.f32 %v1458, %v2149
        %v2216 = vadd.f32 %v1459, %v2152
        %v2217 = vadd.f32 %v1460, %v2157
        %v2218 = vadd.f32 %v1461, %v2160
        %v2219 = vadd.f32 %v1462, %v2165
        %v2220 = vadd.f32 %v1463, %v2168
        %v2221 = vadd.f32 %v1464, %v2173
        %v2222 = vadd.f32 %v1465, %v2176
        %v2223 = vadd.f32 %v1466, %v2181
        %v2224 = vadd.f32 %v1467, %v2184
        %v2225 = vadd.f32 %v1468, %v2189
        %v2226 = vadd.f32 %v1469, %v2192
        %v2227 = vld [vmem:[%s250 + $0x4] sm:$0x8]
        %v2228 = vld [vmem:[%s250 + $0x8] sm:$0xf]
        %v2229 = vld [vmem:[%s250 + $0xc] sm:$0xf]
        %v2230 = vld [vmem:[%s250 + $0x1c] sm:$0x8]
        %v2231 = vld [vmem:[%s250 + $0x20] sm:$0xf]
        %v2232 = vld [vmem:[%s250 + $0x24] sm:$0xf]
        %v2233 = vld [vmem:[%s250 + $0x34] sm:$0x8]
        %v2234 = vld [vmem:[%s250 + $0x38] sm:$0xf]
        %v2235 = vld [vmem:[%s250 + $0x3c] sm:$0xf]
        %v2236 = vld [vmem:[%s250 + $0x4c] sm:$0x8]
        %v2237 = vld [vmem:[%s250 + $0x50] sm:$0xf]
        %v2238 = vld [vmem:[%s250 + $0x54] sm:$0xf]
        %v2239 = vld [vmem:[%s250 + $0x64] sm:$0x8]
        %v2240 = vld [vmem:[%s250 + $0x68] sm:$0xf]
        %v2241 = vld [vmem:[%s250 + $0x6c] sm:$0xf]
        %v2242 = vld [vmem:[%s250 + $0x7c] sm:$0x8]
        %v2243 = vld [vmem:[%s250 + $0x80] sm:$0xf]
        %v2244 = vld [vmem:[%s250 + $0x84] sm:$0xf]
        %v2245 = vld [vmem:[%s250 + $0x94] sm:$0x8]
        %v2246 = vld [vmem:[%s250 + $0x98] sm:$0xf]
        %v2247 = vld [vmem:[%s250 + $0x9c] sm:$0xf]
        %v2248 = vld [vmem:[%s250 + $0xac] sm:$0x8]
        %v2249 = vld [vmem:[%s250 + $0xb0] sm:$0xf]
        %v2250 = vld [vmem:[%s250 + $0xb4] sm:$0xf]
        %v2251 = vld [vmem:[%s250 + $0xc4] sm:$0x8]
        %v2252 = vld [vmem:[%s250 + $0xc8] sm:$0xf]
        %v2253 = vld [vmem:[%s250 + $0xcc] sm:$0xf]
        %v2254 = vld [vmem:[%s250 + $0xdc] sm:$0x8]
        %v2255 = vld [vmem:[%s250 + $0xe0] sm:$0xf]
        %v2256 = vld [vmem:[%s250 + $0xe4] sm:$0xf]
        %v2257 = vld [vmem:[%s250 + $0xf4] sm:$0x8]
        %v2258 = vld [vmem:[%s250 + $0xf8] sm:$0xf]
        %v2259 = vld [vmem:[%s250 + $0xfc] sm:$0xf]
        %v2260 = vld [vmem:[%s250 + $0x10c] sm:$0x8]
        %v2261 = vld [vmem:[%s250 + $0x110] sm:$0xf]
        %v2262 = vld [vmem:[%s250 + $0x114] sm:$0xf]
        %v2263 = vld [vmem:[%s250 + $0x124] sm:$0x8]
        %v2264 = vld [vmem:[%s250 + $0x128] sm:$0xf]
        %v2265 = vld [vmem:[%s250 + $0x12c] sm:$0xf]
        %v2266 = vld [vmem:[%s250 + $0x13c] sm:$0x8]
        %v2267 = vld [vmem:[%s250 + $0x140] sm:$0xf]
        %v2268 = vld [vmem:[%s250 + $0x144] sm:$0xf]
        %v2269 = vld [vmem:[%s250 + $0x154] sm:$0x8]
        %v2270 = vld [vmem:[%s250 + $0x158] sm:$0xf]
        %v2271 = vld [vmem:[%s250 + $0x15c] sm:$0xf]
        %v2272 = vld [vmem:[%s250 + $0x16c] sm:$0x8]
        %v2273 = vld [vmem:[%s250 + $0x170] sm:$0xf]
        %v2274 = vld [vmem:[%s250 + $0x174] sm:$0xf]
        %v2276 = vshrl.u32 %v2227, 16
        %v2278 = vrot.slane %v2276, 7
        %v2279 = vrot.slane %v2278, 4
        %v2281 = vshrl.u32 %v2228, 16
        %v2283 = vrot.slane %v2281, 7
        %v2284 = vshll.u32 %v2228, 16
        %v2286 = vor.u32 %v2283, %v2284
        %v2287 = vsel %vm442, %v2279, %v2286
        %v2288 = vrot.slane %v2283, 4
        %v2290 = vshrl.u32 %v2229, 16
        %v2292 = vrot.slane %v2290, 7
        %v2293 = vshll.u32 %v2229, 16
        %v2295 = vor.u32 %v2292, %v2293
        %v2296 = vsel %vm442, %v2288, %v2295
        %v2298 = vshrl.u32 %v2230, 16
        %v2300 = vrot.slane %v2298, 7
        %v2301 = vrot.slane %v2300, 4
        %v2303 = vshrl.u32 %v2231, 16
        %v2305 = vrot.slane %v2303, 7
        %v2306 = vshll.u32 %v2231, 16
        %v2308 = vor.u32 %v2305, %v2306
        %v2309 = vsel %vm442, %v2301, %v2308
        %v2310 = vrot.slane %v2305, 4
        %v2312 = vshrl.u32 %v2232, 16
        %v2314 = vrot.slane %v2312, 7
        %v2315 = vshll.u32 %v2232, 16
        %v2317 = vor.u32 %v2314, %v2315
        %v2318 = vsel %vm442, %v2310, %v2317
        %v2320 = vshrl.u32 %v2233, 16
        %v2322 = vrot.slane %v2320, 7
        %v2323 = vrot.slane %v2322, 4
        %v2325 = vshrl.u32 %v2234, 16
        %v2327 = vrot.slane %v2325, 7
        %v2328 = vshll.u32 %v2234, 16
        %v2330 = vor.u32 %v2327, %v2328
        %v2331 = vsel %vm442, %v2323, %v2330
        %v2332 = vrot.slane %v2327, 4
        %v2334 = vshrl.u32 %v2235, 16
        %v2336 = vrot.slane %v2334, 7
        %v2337 = vshll.u32 %v2235, 16
        %v2339 = vor.u32 %v2336, %v2337
        %v2340 = vsel %vm442, %v2332, %v2339
        %v2342 = vshrl.u32 %v2236, 16
        %v2344 = vrot.slane %v2342, 7
        %v2345 = vrot.slane %v2344, 4
        %v2347 = vshrl.u32 %v2237, 16
        %v2349 = vrot.slane %v2347, 7
        %v2350 = vshll.u32 %v2237, 16
        %v2352 = vor.u32 %v2349, %v2350
        %v2353 = vsel %vm442, %v2345, %v2352
        %v2354 = vrot.slane %v2349, 4
        %v2356 = vshrl.u32 %v2238, 16
        %v2358 = vrot.slane %v2356, 7
        %v2359 = vshll.u32 %v2238, 16
        %v2361 = vor.u32 %v2358, %v2359
        %v2362 = vsel %vm442, %v2354, %v2361
        %v2364 = vshrl.u32 %v2239, 16
        %v2366 = vrot.slane %v2364, 7
        %v2367 = vrot.slane %v2366, 4
        %v2369 = vshrl.u32 %v2240, 16
        %v2371 = vrot.slane %v2369, 7
        %v2372 = vshll.u32 %v2240, 16
        %v2374 = vor.u32 %v2371, %v2372
        %v2375 = vsel %vm442, %v2367, %v2374
        %v2376 = vrot.slane %v2371, 4
        %v2378 = vshrl.u32 %v2241, 16
        %v2380 = vrot.slane %v2378, 7
        %v2381 = vshll.u32 %v2241, 16
        %v2383 = vor.u32 %v2380, %v2381
        %v2384 = vsel %vm442, %v2376, %v2383
        %v2386 = vshrl.u32 %v2242, 16
        %v2388 = vrot.slane %v2386, 7
        %v2389 = vrot.slane %v2388, 4
        %v2391 = vshrl.u32 %v2243, 16
        %v2393 = vrot.slane %v2391, 7
        %v2394 = vshll.u32 %v2243, 16
        %v2396 = vor.u32 %v2393, %v2394
        %v2397 = vsel %vm442, %v2389, %v2396
        %v2398 = vrot.slane %v2393, 4
        %v2400 = vshrl.u32 %v2244, 16
        %v2402 = vrot.slane %v2400, 7
        %v2403 = vshll.u32 %v2244, 16
        %v2405 = vor.u32 %v2402, %v2403
        %v2406 = vsel %vm442, %v2398, %v2405
        %v2408 = vshrl.u32 %v2245, 16
        %v2410 = vrot.slane %v2408, 7
        %v2411 = vrot.slane %v2410, 4
        %v2413 = vshrl.u32 %v2246, 16
        %v2415 = vrot.slane %v2413, 7
        %v2416 = vshll.u32 %v2246, 16
        %v2418 = vor.u32 %v2415, %v2416
        %v2419 = vsel %vm442, %v2411, %v2418
        %v2420 = vrot.slane %v2415, 4
        %v2422 = vshrl.u32 %v2247, 16
        %v2424 = vrot.slane %v2422, 7
        %v2425 = vshll.u32 %v2247, 16
        %v2427 = vor.u32 %v2424, %v2425
        %v2428 = vsel %vm442, %v2420, %v2427
        %v2430 = vshrl.u32 %v2248, 16
        %v2432 = vrot.slane %v2430, 7
        %v2433 = vrot.slane %v2432, 4
        %v2435 = vshrl.u32 %v2249, 16
        %v2437 = vrot.slane %v2435, 7
        %v2438 = vshll.u32 %v2249, 16
        %v2440 = vor.u32 %v2437, %v2438
        %v2441 = vsel %vm442, %v2433, %v2440
        %v2442 = vrot.slane %v2437, 4
        %v2444 = vshrl.u32 %v2250, 16
        %v2446 = vrot.slane %v2444, 7
        %v2447 = vshll.u32 %v2250, 16
        %v2449 = vor.u32 %v2446, %v2447
        %v2450 = vsel %vm442, %v2442, %v2449
        %v2452 = vshrl.u32 %v2251, 16
        %v2454 = vrot.slane %v2452, 7
        %v2455 = vrot.slane %v2454, 4
        %v2457 = vshrl.u32 %v2252, 16
        %v2459 = vrot.slane %v2457, 7
        %v2460 = vshll.u32 %v2252, 16
        %v2462 = vor.u32 %v2459, %v2460
        %v2463 = vsel %vm442, %v2455, %v2462
        %v2464 = vrot.slane %v2459, 4
        %v2466 = vshrl.u32 %v2253, 16
        %v2468 = vrot.slane %v2466, 7
        %v2469 = vshll.u32 %v2253, 16
        %v2471 = vor.u32 %v2468, %v2469
        %v2472 = vsel %vm442, %v2464, %v2471
        %v2474 = vshrl.u32 %v2254, 16
        %v2476 = vrot.slane %v2474, 7
        %v2477 = vrot.slane %v2476, 4
        %v2479 = vshrl.u32 %v2255, 16
        %v2481 = vrot.slane %v2479, 7
        %v2482 = vshll.u32 %v2255, 16
        %v2484 = vor.u32 %v2481, %v2482
        %v2485 = vsel %vm442, %v2477, %v2484
        %v2486 = vrot.slane %v2481, 4
        %v2488 = vshrl.u32 %v2256, 16
        %v2490 = vrot.slane %v2488, 7
        %v2491 = vshll.u32 %v2256, 16
        %v2493 = vor.u32 %v2490, %v2491
        %v2494 = vsel %vm442, %v2486, %v2493
        %v2496 = vshrl.u32 %v2257, 16
        %v2498 = vrot.slane %v2496, 7
        %v2499 = vrot.slane %v2498, 4
        %v2501 = vshrl.u32 %v2258, 16
        %v2503 = vrot.slane %v2501, 7
        %v2504 = vshll.u32 %v2258, 16
        %v2506 = vor.u32 %v2503, %v2504
        %v2507 = vsel %vm442, %v2499, %v2506
        %v2508 = vrot.slane %v2503, 4
        %v2510 = vshrl.u32 %v2259, 16
        %v2512 = vrot.slane %v2510, 7
        %v2513 = vshll.u32 %v2259, 16
        %v2515 = vor.u32 %v2512, %v2513
        %v2516 = vsel %vm442, %v2508, %v2515
        %v2518 = vshrl.u32 %v2260, 16
        %v2520 = vrot.slane %v2518, 7
        %v2521 = vrot.slane %v2520, 4
        %v2523 = vshrl.u32 %v2261, 16
        %v2525 = vrot.slane %v2523, 7
        %v2526 = vshll.u32 %v2261, 16
        %v2528 = vor.u32 %v2525, %v2526
        %v2529 = vsel %vm442, %v2521, %v2528
        %v2530 = vrot.slane %v2525, 4
        %v2532 = vshrl.u32 %v2262, 16
        %v2534 = vrot.slane %v2532, 7
        %v2535 = vshll.u32 %v2262, 16
        %v2537 = vor.u32 %v2534, %v2535
        %v2538 = vsel %vm442, %v2530, %v2537
        %v2540 = vshrl.u32 %v2263, 16
        %v2542 = vrot.slane %v2540, 7
        %v2543 = vrot.slane %v2542, 4
        %v2545 = vshrl.u32 %v2264, 16
        %v2547 = vrot.slane %v2545, 7
        %v2548 = vshll.u32 %v2264, 16
        %v2550 = vor.u32 %v2547, %v2548
        %v2551 = vsel %vm442, %v2543, %v2550
        %v2552 = vrot.slane %v2547, 4
        %v2554 = vshrl.u32 %v2265, 16
        %v2556 = vrot.slane %v2554, 7
        %v2557 = vshll.u32 %v2265, 16
        %v2559 = vor.u32 %v2556, %v2557
        %v2560 = vsel %vm442, %v2552, %v2559
        %v2562 = vshrl.u32 %v2266, 16
        %v2564 = vrot.slane %v2562, 7
        %v2565 = vrot.slane %v2564, 4
        %v2567 = vshrl.u32 %v2267, 16
        %v2569 = vrot.slane %v2567, 7
        %v2570 = vshll.u32 %v2267, 16
        %v2572 = vor.u32 %v2569, %v2570
        %v2573 = vsel %vm442, %v2565, %v2572
        %v2574 = vrot.slane %v2569, 4
        %v2576 = vshrl.u32 %v2268, 16
        %v2578 = vrot.slane %v2576, 7
        %v2579 = vshll.u32 %v2268, 16
        %v2581 = vor.u32 %v2578, %v2579
        %v2582 = vsel %vm442, %v2574, %v2581
        %v2584 = vshrl.u32 %v2269, 16
        %v2586 = vrot.slane %v2584, 7
        %v2587 = vrot.slane %v2586, 4
        %v2589 = vshrl.u32 %v2270, 16
        %v2591 = vrot.slane %v2589, 7
        %v2592 = vshll.u32 %v2270, 16
        %v2594 = vor.u32 %v2591, %v2592
        %v2595 = vsel %vm442, %v2587, %v2594
        %v2596 = vrot.slane %v2591, 4
        %v2598 = vshrl.u32 %v2271, 16
        %v2600 = vrot.slane %v2598, 7
        %v2601 = vshll.u32 %v2271, 16
        %v2603 = vor.u32 %v2600, %v2601
        %v2604 = vsel %vm442, %v2596, %v2603
        %v2606 = vshrl.u32 %v2272, 16
        %v2608 = vrot.slane %v2606, 7
        %v2609 = vrot.slane %v2608, 4
        %v2611 = vshrl.u32 %v2273, 16
        %v2613 = vrot.slane %v2611, 7
        %v2614 = vshll.u32 %v2273, 16
        %v2616 = vor.u32 %v2613, %v2614
        %v2617 = vsel %vm442, %v2609, %v2616
        %v2618 = vrot.slane %v2613, 4
        %v2620 = vshrl.u32 %v2274, 16
        %v2622 = vrot.slane %v2620, 7
        %v2623 = vshll.u32 %v2274, 16
        %v2625 = vor.u32 %v2622, %v2623
        %v2626 = vsel %vm442, %v2618, %v2625
        %s2627 = scalar_lea.vmem [#allocation6], 192
        %v2628 = vld [vmem:[%s2627] sm:$0xf]
        %v2629 = vld [vmem:[%s2627 + $0x4] sm:$0xf]
        %v2630 = vld [vmem:[%s2627 + $0x8] sm:$0xf]
        %v2631 = vld [vmem:[%s2627 + $0xc] sm:$0xf]
        %v2632 = vld [vmem:[%s2627 + $0x10] sm:$0xf]
        %v2633 = vld [vmem:[%s2627 + $0x14] sm:$0xf]
        %v2634 = vld [vmem:[%s2627 + $0x18] sm:$0xf]
        %v2635 = vld [vmem:[%s2627 + $0x1c] sm:$0xf]
        %v2636 = vld [vmem:[%s2627 + $0x20] sm:$0xf]
        %v2637 = vld [vmem:[%s2627 + $0x24] sm:$0xf]
        %v2638 = vld [vmem:[%s2627 + $0x28] sm:$0xf]
        %v2639 = vld [vmem:[%s2627 + $0x2c] sm:$0xf]
        %v2640 = vld [vmem:[%s2627 + $0x30] sm:$0xf]
        %v2641 = vld [vmem:[%s2627 + $0x34] sm:$0xf]
        %v2642 = vld [vmem:[%s2627 + $0x38] sm:$0xf]
        %v2643 = vld [vmem:[%s2627 + $0x3c] sm:$0xf]
        %v2644 = vunpack.c.l.b16 %v2287
        %v2645 = vunpack.c.l.b16 %v2296
        %v2646 = vunpack.c.l.b16 %v2309
        %v2647 = vunpack.c.l.b16 %v2318
        %v2648 = vunpack.c.l.b16 %v2331
        %v2649 = vunpack.c.l.b16 %v2340
        %v2650 = vunpack.c.l.b16 %v2353
        %v2651 = vunpack.c.l.b16 %v2362
        %v2652 = vunpack.c.l.b16 %v2375
        %v2653 = vunpack.c.l.b16 %v2384
        %v2654 = vunpack.c.l.b16 %v2397
        %v2655 = vunpack.c.l.b16 %v2406
        %v2656 = vunpack.c.l.b16 %v2419
        %v2657 = vunpack.c.l.b16 %v2428
        %v2658 = vunpack.c.l.b16 %v2441
        %v2659 = vunpack.c.l.b16 %v2450
        %v2660 = vunpack.c.l.b16 %v2463
        %v2661 = vunpack.c.l.b16 %v2472
        %v2662 = vunpack.c.l.b16 %v2485
        %v2663 = vunpack.c.l.b16 %v2494
        %v2664 = vunpack.c.l.b16 %v2507
        %v2665 = vunpack.c.l.b16 %v2516
        %v2666 = vunpack.c.l.b16 %v2529
        %v2667 = vunpack.c.l.b16 %v2538
        %v2668 = vunpack.c.l.b16 %v2551
        %v2669 = vunpack.c.l.b16 %v2560
        %v2670 = vunpack.c.l.b16 %v2573
        %v2671 = vunpack.c.l.b16 %v2582
        %v2672 = vunpack.c.l.b16 %v2595
        %v2673 = vunpack.c.l.b16 %v2604
        %v2674 = vunpack.c.l.b16 %v2617
        %v2675 = vunpack.c.l.b16 %v2626
        %v2676 = vpack.c.b16 %v2645, %v2644
        %v2677 = vpack.c.b16 %v2647, %v2646
        %v2678 = vpack.c.b16 %v2649, %v2648
        %v2679 = vpack.c.b16 %v2651, %v2650
        %v2680 = vpack.c.b16 %v2653, %v2652
        %v2681 = vpack.c.b16 %v2655, %v2654
        %v2682 = vpack.c.b16 %v2657, %v2656
        %v2683 = vpack.c.b16 %v2659, %v2658
        %v2684 = vpack.c.b16 %v2661, %v2660
        %v2685 = vpack.c.b16 %v2663, %v2662
        %v2686 = vpack.c.b16 %v2665, %v2664
        %v2687 = vpack.c.b16 %v2667, %v2666
        %v2688 = vpack.c.b16 %v2669, %v2668
        %v2689 = vpack.c.b16 %v2671, %v2670
        %v2690 = vpack.c.b16 %v2673, %v2672
        %v2691 = vpack.c.b16 %v2675, %v2674
        %v2724 = vunpack.c.l.b16 %v2628
        %v2725 = vunpack.c.l.b16 %v2629
        %v2726 = vunpack.c.l.b16 %v2630
        %v2727 = vunpack.c.l.b16 %v2631
        %v2728 = vunpack.c.l.b16 %v2632
        %v2729 = vunpack.c.l.b16 %v2633
        %v2730 = vunpack.c.l.b16 %v2634
        %v2731 = vunpack.c.l.b16 %v2635
        %v2732 = vunpack.c.l.b16 %v2636
        %v2733 = vunpack.c.l.b16 %v2637
        %v2734 = vunpack.c.l.b16 %v2638
        %v2735 = vunpack.c.l.b16 %v2639
        %v2736 = vunpack.c.l.b16 %v2640
        %v2737 = vunpack.c.l.b16 %v2641
        %v2738 = vunpack.c.l.b16 %v2642
        %v2739 = vunpack.c.l.b16 %v2643
        %v2740 = vpack.c.b16 %v2725, %v2724
        %v2741 = vpack.c.b16 %v2727, %v2726
        %v2742 = vpack.c.b16 %v2729, %v2728
        %v2743 = vpack.c.b16 %v2731, %v2730
        %v2744 = vpack.c.b16 %v2733, %v2732
        %v2745 = vpack.c.b16 %v2735, %v2734
        %v2746 = vpack.c.b16 %v2737, %v2736
        %v2747 = vpack.c.b16 %v2739, %v2738
        %2756 = vmatprep.subr.bf16.mxu0 0
        %2757 = vmatpush1.bf16.msra.mxu0 %v2747
        %2758 = vmatprep.subr.bf16.mxu0 0
        %2759 = vmatpush1.bf16.msra.mxu0 %v2746
        %2760 = vmatprep.subr.bf16.mxu0 0
        %2761 = vmatpush1.bf16.msra.mxu0 %v2745
        %2762 = vmatprep.subr.bf16.mxu0 0
        %2763 = vmatpush1.bf16.msra.mxu0 %v2744
        %2764 = vmatprep.subr.bf16.mxu0 0
        %2765 = vmatpush1.bf16.msra.mxu0 %v2743
        %2766 = vmatprep.subr.bf16.mxu0 0
        %2767 = vmatpush1.bf16.msra.mxu0 %v2742
        %2768 = vmatprep.subr.bf16.mxu0 0
        %2769 = vmatpush1.bf16.msra.mxu0 %v2741
        %2770 = vmatprep.subr.bf16.mxu0 0
        %2771 = vmatpush1.bf16.msra.mxu0 %v2740
        %2772 = vmatprep.subr.bf16.mxu0 0
        %2773 = vmatpush2.bf16.msra.mxu0 0
        %2774 = vmatprep.subr.bf16.mxu0 0
        %2775 = vmatpush2.bf16.msra.mxu0 0
        %2776 = vmatprep.subr.bf16.mxu0 0
        %2777 = vmatpush2.bf16.msra.mxu0 0
        %2778 = vmatprep.subr.bf16.mxu0 0
        %2779 = vmatpush2.bf16.msra.mxu0 0
        %2780 = vmatprep.subr.bf16.mxu0 0
        %2781 = vmatpush2.bf16.msra.mxu0 0
        %2782 = vmatprep.subr.bf16.mxu0 0
        %2783 = vmatpush2.bf16.msra.mxu0 0
        %2784 = vmatprep.subr.bf16.mxu0 0
        %2785 = vmatpush2.bf16.msra.mxu0 0
        %2786 = vmatprep.subr.bf16.mxu0 0
        %2787 = vmatpush2.bf16.msra.mxu0 0
        %2788 = vmatprep.mubr.bf16.mxu0 0
        %2789 = vmatmul.mubr.bf16.gmra.mxu0 %v2676
        %v2790 = vpop.f32.mrf.mxu0
        %v2791 = vadd.f32 0.0, %v2790
        %v2792 = vpop.f32.mrf.mxu0
        %v2793 = vpop.f32.mrf.mxu0
        %v2794 = vadd.f32 0.0, %v2793
        %v2795 = vpop.f32.mrf.mxu0
        %2796 = vmatprep.mubr.bf16.mxu0 0
        %2797 = vmatmul.mubr.bf16.gmra.mxu0 %v2677
        %v2798 = vpop.f32.mrf.mxu0
        %v2799 = vadd.f32 0.0, %v2798
        %v2800 = vpop.f32.mrf.mxu0
        %v2801 = vpop.f32.mrf.mxu0
        %v2802 = vadd.f32 0.0, %v2801
        %v2803 = vpop.f32.mrf.mxu0
        %2804 = vmatprep.mubr.bf16.mxu0 0
        %2805 = vmatmul.mubr.bf16.gmra.mxu0 %v2678
        %v2806 = vpop.f32.mrf.mxu0
        %v2807 = vadd.f32 0.0, %v2806
        %v2808 = vpop.f32.mrf.mxu0
        %v2809 = vpop.f32.mrf.mxu0
        %v2810 = vadd.f32 0.0, %v2809
        %v2811 = vpop.f32.mrf.mxu0
        %2812 = vmatprep.mubr.bf16.mxu0 0
        %2813 = vmatmul.mubr.bf16.gmra.mxu0 %v2679
        %v2814 = vpop.f32.mrf.mxu0
        %v2815 = vadd.f32 0.0, %v2814
        %v2816 = vpop.f32.mrf.mxu0
        %v2817 = vpop.f32.mrf.mxu0
        %v2818 = vadd.f32 0.0, %v2817
        %v2819 = vpop.f32.mrf.mxu0
        %2820 = vmatprep.mubr.bf16.mxu0 0
        %2821 = vmatmul.mubr.bf16.gmra.mxu0 %v2680
        %v2822 = vpop.f32.mrf.mxu0
        %v2823 = vadd.f32 0.0, %v2822
        %v2824 = vpop.f32.mrf.mxu0
        %v2825 = vpop.f32.mrf.mxu0
        %v2826 = vadd.f32 0.0, %v2825
        %v2827 = vpop.f32.mrf.mxu0
        %2828 = vmatprep.mubr.bf16.mxu0 0
        %2829 = vmatmul.mubr.bf16.gmra.mxu0 %v2681
        %v2830 = vpop.f32.mrf.mxu0
        %v2831 = vadd.f32 0.0, %v2830
        %v2832 = vpop.f32.mrf.mxu0
        %v2833 = vpop.f32.mrf.mxu0
        %v2834 = vadd.f32 0.0, %v2833
        %v2835 = vpop.f32.mrf.mxu0
        %2836 = vmatprep.mubr.bf16.mxu0 0
        %2837 = vmatmul.mubr.bf16.gmra.mxu0 %v2682
        %v2838 = vpop.f32.mrf.mxu0
        %v2839 = vadd.f32 0.0, %v2838
        %v2840 = vpop.f32.mrf.mxu0
        %v2841 = vpop.f32.mrf.mxu0
        %v2842 = vadd.f32 0.0, %v2841
        %v2843 = vpop.f32.mrf.mxu0
        %2844 = vmatprep.mubr.bf16.mxu0 0
        %2845 = vmatmul.mubr.bf16.gmra.mxu0 %v2683
        %v2846 = vpop.f32.mrf.mxu0
        %v2847 = vadd.f32 0.0, %v2846
        %v2848 = vpop.f32.mrf.mxu0
        %v2849 = vpop.f32.mrf.mxu0
        %v2850 = vadd.f32 0.0, %v2849
        %v2851 = vpop.f32.mrf.mxu0
        %2852 = vmatprep.mubr.bf16.mxu0 0
        %2853 = vmatmul.mubr.bf16.gmra.mxu0 %v2684
        %v2854 = vpop.f32.mrf.mxu0
        %v2855 = vadd.f32 0.0, %v2854
        %v2856 = vpop.f32.mrf.mxu0
        %v2857 = vpop.f32.mrf.mxu0
        %v2858 = vadd.f32 0.0, %v2857
        %v2859 = vpop.f32.mrf.mxu0
        %2860 = vmatprep.mubr.bf16.mxu0 0
        %2861 = vmatmul.mubr.bf16.gmra.mxu0 %v2685
        %v2862 = vpop.f32.mrf.mxu0
        %v2863 = vadd.f32 0.0, %v2862
        %v2864 = vpop.f32.mrf.mxu0
        %v2865 = vpop.f32.mrf.mxu0
        %v2866 = vadd.f32 0.0, %v2865
        %v2867 = vpop.f32.mrf.mxu0
        %2868 = vmatprep.mubr.bf16.mxu0 0
        %2869 = vmatmul.mubr.bf16.gmra.mxu0 %v2686
        %v2870 = vpop.f32.mrf.mxu0
        %v2871 = vadd.f32 0.0, %v2870
        %v2872 = vpop.f32.mrf.mxu0
        %v2873 = vpop.f32.mrf.mxu0
        %v2874 = vadd.f32 0.0, %v2873
        %v2875 = vpop.f32.mrf.mxu0
        %2876 = vmatprep.mubr.bf16.mxu0 0
        %2877 = vmatmul.mubr.bf16.gmra.mxu0 %v2687
        %v2878 = vpop.f32.mrf.mxu0
        %v2879 = vadd.f32 0.0, %v2878
        %v2880 = vpop.f32.mrf.mxu0
        %v2881 = vpop.f32.mrf.mxu0
        %v2882 = vadd.f32 0.0, %v2881
        %v2883 = vpop.f32.mrf.mxu0
        %2884 = vmatprep.mubr.bf16.mxu0 0
        %2885 = vmatmul.mubr.bf16.gmra.mxu0 %v2688
        %v2886 = vpop.f32.mrf.mxu0
        %v2887 = vadd.f32 0.0, %v2886
        %v2888 = vpop.f32.mrf.mxu0
        %v2889 = vpop.f32.mrf.mxu0
        %v2890 = vadd.f32 0.0, %v2889
        %v2891 = vpop.f32.mrf.mxu0
        %2892 = vmatprep.mubr.bf16.mxu0 0
        %2893 = vmatmul.mubr.bf16.gmra.mxu0 %v2689
        %v2894 = vpop.f32.mrf.mxu0
        %v2895 = vadd.f32 0.0, %v2894
        %v2896 = vpop.f32.mrf.mxu0
        %v2897 = vpop.f32.mrf.mxu0
        %v2898 = vadd.f32 0.0, %v2897
        %v2899 = vpop.f32.mrf.mxu0
        %2900 = vmatprep.mubr.bf16.mxu0 0
        %2901 = vmatmul.mubr.bf16.gmra.mxu0 %v2690
        %v2902 = vpop.f32.mrf.mxu0
        %v2903 = vadd.f32 0.0, %v2902
        %v2904 = vpop.f32.mrf.mxu0
        %v2905 = vpop.f32.mrf.mxu0
        %v2906 = vadd.f32 0.0, %v2905
        %v2907 = vpop.f32.mrf.mxu0
        %2908 = vmatprep.mubr.bf16.mxu0 0
        %2909 = vmatmul.mubr.bf16.gmra.mxu0 %v2691
        %v2910 = vpop.f32.mrf.mxu0
        %v2911 = vadd.f32 0.0, %v2910
        %v2912 = vpop.f32.mrf.mxu0
        %v2913 = vpop.f32.mrf.mxu0
        %v2914 = vadd.f32 0.0, %v2913
        %v2915 = vpop.f32.mrf.mxu0
        %2916 = vdwg.mxu0
        %v2917 = vadd.f32 %v2195, %v2791
        %v2918 = vadd.f32 %v2196, %v2794
        %v2919 = vadd.f32 %v2197, %v2799
        %v2920 = vadd.f32 %v2198, %v2802
        %v2921 = vadd.f32 %v2199, %v2807
        %v2922 = vadd.f32 %v2200, %v2810
        %v2923 = vadd.f32 %v2201, %v2815
        %v2924 = vadd.f32 %v2202, %v2818
        %v2925 = vadd.f32 %v2203, %v2823
        %v2926 = vadd.f32 %v2204, %v2826
        %v2927 = vadd.f32 %v2205, %v2831
        %v2928 = vadd.f32 %v2206, %v2834
        %v2929 = vadd.f32 %v2207, %v2839
        %v2930 = vadd.f32 %v2208, %v2842
        %v2931 = vadd.f32 %v2209, %v2847
        %v2932 = vadd.f32 %v2210, %v2850
        %v2933 = vadd.f32 %v2211, %v2855
        %v2934 = vadd.f32 %v2212, %v2858
        %v2935 = vadd.f32 %v2213, %v2863
        %v2936 = vadd.f32 %v2214, %v2866
        %v2937 = vadd.f32 %v2215, %v2871
        %v2938 = vadd.f32 %v2216, %v2874
        %v2939 = vadd.f32 %v2217, %v2879
        %v2940 = vadd.f32 %v2218, %v2882
        %v2941 = vadd.f32 %v2219, %v2887
        %v2942 = vadd.f32 %v2220, %v2890
        %v2943 = vadd.f32 %v2221, %v2895
        %v2944 = vadd.f32 %v2222, %v2898
        %v2945 = vadd.f32 %v2223, %v2903
        %v2946 = vadd.f32 %v2224, %v2906
        %v2947 = vadd.f32 %v2225, %v2911
        %v2948 = vadd.f32 %v2226, %v2914
        %s2949 = scalar_lea.vmem [#allocation6], 256
        %v2950 = vld [vmem:[%s2949] sm:$0xf]
        %v2951 = vld [vmem:[%s2949 + $0x4] sm:$0xf]
        %v2952 = vld [vmem:[%s2949 + $0x8] sm:$0xf]
        %v2953 = vld [vmem:[%s2949 + $0xc] sm:$0xf]
        %v2954 = vld [vmem:[%s2949 + $0x10] sm:$0xf]
        %v2955 = vld [vmem:[%s2949 + $0x14] sm:$0xf]
        %v2956 = vld [vmem:[%s2949 + $0x18] sm:$0xf]
        %v2957 = vld [vmem:[%s2949 + $0x1c] sm:$0xf]
        %v2958 = vld [vmem:[%s2949 + $0x20] sm:$0xf]
        %v2959 = vld [vmem:[%s2949 + $0x24] sm:$0xf]
        %v2960 = vld [vmem:[%s2949 + $0x28] sm:$0xf]
        %v2961 = vld [vmem:[%s2949 + $0x2c] sm:$0xf]
        %v2962 = vld [vmem:[%s2949 + $0x30] sm:$0xf]
        %v2963 = vld [vmem:[%s2949 + $0x34] sm:$0xf]
        %v2964 = vld [vmem:[%s2949 + $0x38] sm:$0xf]
        %v2965 = vld [vmem:[%s2949 + $0x3c] sm:$0xf]
        %v2998 = vunpack.c.l.b16 %v2228
        %v2999 = vunpack.c.l.b16 %v2229
        %v3000 = vunpack.c.l.b16 %v2231
        %v3001 = vunpack.c.l.b16 %v2232
        %v3002 = vunpack.c.l.b16 %v2234
        %v3003 = vunpack.c.l.b16 %v2235
        %v3004 = vunpack.c.l.b16 %v2237
        %v3005 = vunpack.c.l.b16 %v2238
        %v3006 = vunpack.c.l.b16 %v2240
        %v3007 = vunpack.c.l.b16 %v2241
        %v3008 = vunpack.c.l.b16 %v2243
        %v3009 = vunpack.c.l.b16 %v2244
        %v3010 = vunpack.c.l.b16 %v2246
        %v3011 = vunpack.c.l.b16 %v2247
        %v3012 = vunpack.c.l.b16 %v2249
        %v3013 = vunpack.c.l.b16 %v2250
        %v3014 = vunpack.c.l.b16 %v2252
        %v3015 = vunpack.c.l.b16 %v2253
        %v3016 = vunpack.c.l.b16 %v2255
        %v3017 = vunpack.c.l.b16 %v2256
        %v3018 = vunpack.c.l.b16 %v2258
        %v3019 = vunpack.c.l.b16 %v2259
        %v3020 = vunpack.c.l.b16 %v2261
        %v3021 = vunpack.c.l.b16 %v2262
        %v3022 = vunpack.c.l.b16 %v2264
        %v3023 = vunpack.c.l.b16 %v2265
        %v3024 = vunpack.c.l.b16 %v2267
        %v3025 = vunpack.c.l.b16 %v2268
        %v3026 = vunpack.c.l.b16 %v2270
        %v3027 = vunpack.c.l.b16 %v2271
        %v3028 = vunpack.c.l.b16 %v2273
        %v3029 = vunpack.c.l.b16 %v2274
        %v3030 = vpack.c.b16 %v2999, %v2998
        %v3031 = vpack.c.b16 %v3001, %v3000
        %v3032 = vpack.c.b16 %v3003, %v3002
        %v3033 = vpack.c.b16 %v3005, %v3004
        %v3034 = vpack.c.b16 %v3007, %v3006
        %v3035 = vpack.c.b16 %v3009, %v3008
        %v3036 = vpack.c.b16 %v3011, %v3010
        %v3037 = vpack.c.b16 %v3013, %v3012
        %v3038 = vpack.c.b16 %v3015, %v3014
        %v3039 = vpack.c.b16 %v3017, %v3016
        %v3040 = vpack.c.b16 %v3019, %v3018
        %v3041 = vpack.c.b16 %v3021, %v3020
        %v3042 = vpack.c.b16 %v3023, %v3022
        %v3043 = vpack.c.b16 %v3025, %v3024
        %v3044 = vpack.c.b16 %v3027, %v3026
        %v3045 = vpack.c.b16 %v3029, %v3028
        %v3078 = vunpack.c.l.b16 %v2950
        %v3079 = vunpack.c.l.b16 %v2951
        %v3080 = vunpack.c.l.b16 %v2952
        %v3081 = vunpack.c.l.b16 %v2953
        %v3082 = vunpack.c.l.b16 %v2954
        %v3083 = vunpack.c.l.b16 %v2955
        %v3084 = vunpack.c.l.b16 %v2956
        %v3085 = vunpack.c.l.b16 %v2957
        %v3086 = vunpack.c.l.b16 %v2958
        %v3087 = vunpack.c.l.b16 %v2959
        %v3088 = vunpack.c.l.b16 %v2960
        %v3089 = vunpack.c.l.b16 %v2961
        %v3090 = vunpack.c.l.b16 %v2962
        %v3091 = vunpack.c.l.b16 %v2963
        %v3092 = vunpack.c.l.b16 %v2964
        %v3093 = vunpack.c.l.b16 %v2965
        %v3094 = vpack.c.b16 %v3079, %v3078
        %v3095 = vpack.c.b16 %v3081, %v3080
        %v3096 = vpack.c.b16 %v3083, %v3082
        %v3097 = vpack.c.b16 %v3085, %v3084
        %v3098 = vpack.c.b16 %v3087, %v3086
        %v3099 = vpack.c.b16 %v3089, %v3088
        %v3100 = vpack.c.b16 %v3091, %v3090
        %v3101 = vpack.c.b16 %v3093, %v3092
        %3110 = vmatprep.subr.bf16.mxu0 0
        %3111 = vmatpush1.bf16.msra.mxu0 %v3101
        %3112 = vmatprep.subr.bf16.mxu0 0
        %3113 = vmatpush1.bf16.msra.mxu0 %v3100
        %3114 = vmatprep.subr.bf16.mxu0 0
        %3115 = vmatpush1.bf16.msra.mxu0 %v3099
        %3116 = vmatprep.subr.bf16.mxu0 0
        %3117 = vmatpush1.bf16.msra.mxu0 %v3098
        %3118 = vmatprep.subr.bf16.mxu0 0
        %3119 = vmatpush1.bf16.msra.mxu0 %v3097
        %3120 = vmatprep.subr.bf16.mxu0 0
        %3121 = vmatpush1.bf16.msra.mxu0 %v3096
        %3122 = vmatprep.subr.bf16.mxu0 0
        %3123 = vmatpush1.bf16.msra.mxu0 %v3095
        %3124 = vmatprep.subr.bf16.mxu0 0
        %3125 = vmatpush1.bf16.msra.mxu0 %v3094
        %3126 = vmatprep.subr.bf16.mxu0 0
        %3127 = vmatpush2.bf16.msra.mxu0 0
        %3128 = vmatprep.subr.bf16.mxu0 0
        %3129 = vmatpush2.bf16.msra.mxu0 0
        %3130 = vmatprep.subr.bf16.mxu0 0
        %3131 = vmatpush2.bf16.msra.mxu0 0
        %3132 = vmatprep.subr.bf16.mxu0 0
        %3133 = vmatpush2.bf16.msra.mxu0 0
        %3134 = vmatprep.subr.bf16.mxu0 0
        %3135 = vmatpush2.bf16.msra.mxu0 0
        %3136 = vmatprep.subr.bf16.mxu0 0
        %3137 = vmatpush2.bf16.msra.mxu0 0
        %3138 = vmatprep.subr.bf16.mxu0 0
        %3139 = vmatpush2.bf16.msra.mxu0 0
        %3140 = vmatprep.subr.bf16.mxu0 0
        %3141 = vmatpush2.bf16.msra.mxu0 0
        %3142 = vmatprep.mubr.bf16.mxu0 0
        %3143 = vmatmul.mubr.bf16.gmra.mxu0 %v3030
        %v3144 = vpop.f32.mrf.mxu0
        %v3145 = vadd.f32 0.0, %v3144
        %v3146 = vpop.f32.mrf.mxu0
        %v3147 = vpop.f32.mrf.mxu0
        %v3148 = vadd.f32 0.0, %v3147
        %v3149 = vpop.f32.mrf.mxu0
        %3150 = vmatprep.mubr.bf16.mxu0 0
        %3151 = vmatmul.mubr.bf16.gmra.mxu0 %v3031
        %v3152 = vpop.f32.mrf.mxu0
        %v3153 = vadd.f32 0.0, %v3152
        %v3154 = vpop.f32.mrf.mxu0
        %v3155 = vpop.f32.mrf.mxu0
        %v3156 = vadd.f32 0.0, %v3155
        %v3157 = vpop.f32.mrf.mxu0
        %3158 = vmatprep.mubr.bf16.mxu0 0
        %3159 = vmatmul.mubr.bf16.gmra.mxu0 %v3032
        %v3160 = vpop.f32.mrf.mxu0
        %v3161 = vadd.f32 0.0, %v3160
        %v3162 = vpop.f32.mrf.mxu0
        %v3163 = vpop.f32.mrf.mxu0
        %v3164 = vadd.f32 0.0, %v3163
        %v3165 = vpop.f32.mrf.mxu0
        %3166 = vmatprep.mubr.bf16.mxu0 0
        %3167 = vmatmul.mubr.bf16.gmra.mxu0 %v3033
        %v3168 = vpop.f32.mrf.mxu0
        %v3169 = vadd.f32 0.0, %v3168
        %v3170 = vpop.f32.mrf.mxu0
        %v3171 = vpop.f32.mrf.mxu0
        %v3172 = vadd.f32 0.0, %v3171
        %v3173 = vpop.f32.mrf.mxu0
        %3174 = vmatprep.mubr.bf16.mxu0 0
        %3175 = vmatmul.mubr.bf16.gmra.mxu0 %v3034
        %v3176 = vpop.f32.mrf.mxu0
        %v3177 = vadd.f32 0.0, %v3176
        %v3178 = vpop.f32.mrf.mxu0
        %v3179 = vpop.f32.mrf.mxu0
        %v3180 = vadd.f32 0.0, %v3179
        %v3181 = vpop.f32.mrf.mxu0
        %3182 = vmatprep.mubr.bf16.mxu0 0
        %3183 = vmatmul.mubr.bf16.gmra.mxu0 %v3035
        %v3184 = vpop.f32.mrf.mxu0
        %v3185 = vadd.f32 0.0, %v3184
        %v3186 = vpop.f32.mrf.mxu0
        %v3187 = vpop.f32.mrf.mxu0
        %v3188 = vadd.f32 0.0, %v3187
        %v3189 = vpop.f32.mrf.mxu0
        %3190 = vmatprep.mubr.bf16.mxu0 0
        %3191 = vmatmul.mubr.bf16.gmra.mxu0 %v3036
        %v3192 = vpop.f32.mrf.mxu0
        %v3193 = vadd.f32 0.0, %v3192
        %v3194 = vpop.f32.mrf.mxu0
        %v3195 = vpop.f32.mrf.mxu0
        %v3196 = vadd.f32 0.0, %v3195
        %v3197 = vpop.f32.mrf.mxu0
        %3198 = vmatprep.mubr.bf16.mxu0 0
        %3199 = vmatmul.mubr.bf16.gmra.mxu0 %v3037
        %v3200 = vpop.f32.mrf.mxu0
        %v3201 = vadd.f32 0.0, %v3200
        %v3202 = vpop.f32.mrf.mxu0
        %v3203 = vpop.f32.mrf.mxu0
        %v3204 = vadd.f32 0.0, %v3203
        %v3205 = vpop.f32.mrf.mxu0
        %3206 = vmatprep.mubr.bf16.mxu0 0
        %3207 = vmatmul.mubr.bf16.gmra.mxu0 %v3038
        %v3208 = vpop.f32.mrf.mxu0
        %v3209 = vadd.f32 0.0, %v3208
        %v3210 = vpop.f32.mrf.mxu0
        %v3211 = vpop.f32.mrf.mxu0
        %v3212 = vadd.f32 0.0, %v3211
        %v3213 = vpop.f32.mrf.mxu0
        %3214 = vmatprep.mubr.bf16.mxu0 0
        %3215 = vmatmul.mubr.bf16.gmra.mxu0 %v3039
        %v3216 = vpop.f32.mrf.mxu0
        %v3217 = vadd.f32 0.0, %v3216
        %v3218 = vpop.f32.mrf.mxu0
        %v3219 = vpop.f32.mrf.mxu0
        %v3220 = vadd.f32 0.0, %v3219
        %v3221 = vpop.f32.mrf.mxu0
        %3222 = vmatprep.mubr.bf16.mxu0 0
        %3223 = vmatmul.mubr.bf16.gmra.mxu0 %v3040
        %v3224 = vpop.f32.mrf.mxu0
        %v3225 = vadd.f32 0.0, %v3224
        %v3226 = vpop.f32.mrf.mxu0
        %v3227 = vpop.f32.mrf.mxu0
        %v3228 = vadd.f32 0.0, %v3227
        %v3229 = vpop.f32.mrf.mxu0
        %3230 = vmatprep.mubr.bf16.mxu0 0
        %3231 = vmatmul.mubr.bf16.gmra.mxu0 %v3041
        %v3232 = vpop.f32.mrf.mxu0
        %v3233 = vadd.f32 0.0, %v3232
        %v3234 = vpop.f32.mrf.mxu0
        %v3235 = vpop.f32.mrf.mxu0
        %v3236 = vadd.f32 0.0, %v3235
        %v3237 = vpop.f32.mrf.mxu0
        %3238 = vmatprep.mubr.bf16.mxu0 0
        %3239 = vmatmul.mubr.bf16.gmra.mxu0 %v3042
        %v3240 = vpop.f32.mrf.mxu0
        %v3241 = vadd.f32 0.0, %v3240
        %v3242 = vpop.f32.mrf.mxu0
        %v3243 = vpop.f32.mrf.mxu0
        %v3244 = vadd.f32 0.0, %v3243
        %v3245 = vpop.f32.mrf.mxu0
        %3246 = vmatprep.mubr.bf16.mxu0 0
        %3247 = vmatmul.mubr.bf16.gmra.mxu0 %v3043
        %v3248 = vpop.f32.mrf.mxu0
        %v3249 = vadd.f32 0.0, %v3248
        %v3250 = vpop.f32.mrf.mxu0
        %v3251 = vpop.f32.mrf.mxu0
        %v3252 = vadd.f32 0.0, %v3251
        %v3253 = vpop.f32.mrf.mxu0
        %3254 = vmatprep.mubr.bf16.mxu0 0
        %3255 = vmatmul.mubr.bf16.gmra.mxu0 %v3044
        %v3256 = vpop.f32.mrf.mxu0
        %v3257 = vadd.f32 0.0, %v3256
        %v3258 = vpop.f32.mrf.mxu0
        %v3259 = vpop.f32.mrf.mxu0
        %v3260 = vadd.f32 0.0, %v3259
        %v3261 = vpop.f32.mrf.mxu0
        %3262 = vmatprep.mubr.bf16.mxu0 0
        %3263 = vmatmul.mubr.bf16.gmra.mxu0 %v3045
        %v3264 = vpop.f32.mrf.mxu0
        %v3265 = vadd.f32 0.0, %v3264
        %v3266 = vpop.f32.mrf.mxu0
        %v3267 = vpop.f32.mrf.mxu0
        %v3268 = vadd.f32 0.0, %v3267
        %v3269 = vpop.f32.mrf.mxu0
        %3270 = vdwg.mxu0
        %v3271 = vadd.f32 %v2917, %v3145
        %v3272 = vadd.f32 %v2918, %v3148
        %v3273 = vadd.f32 %v2919, %v3153
        %v3274 = vadd.f32 %v2920, %v3156
        %v3275 = vadd.f32 %v2921, %v3161
        %v3276 = vadd.f32 %v2922, %v3164
        %v3277 = vadd.f32 %v2923, %v3169
        %v3278 = vadd.f32 %v2924, %v3172
        %v3279 = vadd.f32 %v2925, %v3177
        %v3280 = vadd.f32 %v2926, %v3180
        %v3281 = vadd.f32 %v2927, %v3185
        %v3282 = vadd.f32 %v2928, %v3188
        %v3283 = vadd.f32 %v2929, %v3193
        %v3284 = vadd.f32 %v2930, %v3196
        %v3285 = vadd.f32 %v2931, %v3201
        %v3286 = vadd.f32 %v2932, %v3204
        %v3287 = vadd.f32 %v2933, %v3209
        %v3288 = vadd.f32 %v2934, %v3212
        %v3289 = vadd.f32 %v2935, %v3217
        %v3290 = vadd.f32 %v2936, %v3220
        %v3291 = vadd.f32 %v2937, %v3225
        %v3292 = vadd.f32 %v2938, %v3228
        %v3293 = vadd.f32 %v2939, %v3233
        %v3294 = vadd.f32 %v2940, %v3236
        %v3295 = vadd.f32 %v2941, %v3241
        %v3296 = vadd.f32 %v2942, %v3244
        %v3297 = vadd.f32 %v2943, %v3249
        %v3298 = vadd.f32 %v2944, %v3252
        %v3299 = vadd.f32 %v2945, %v3257
        %v3300 = vadd.f32 %v2946, %v3260
        %v3301 = vadd.f32 %v2947, %v3265
        %v3302 = vadd.f32 %v2948, %v3268
        %v3303 = vld [vmem:[%s250 + $0x8] sm:$0xf]
        %v3304 = vld [vmem:[%s250 + $0xc] sm:$0xf]
        %v3305 = vld [vmem:[%s250 + $0x10] sm:$0x1]
        %v3306 = vld [vmem:[%s250 + $0x20] sm:$0xf]
        %v3307 = vld [vmem:[%s250 + $0x24] sm:$0xf]
        %v3308 = vld [vmem:[%s250 + $0x28] sm:$0x1]
        %v3309 = vld [vmem:[%s250 + $0x38] sm:$0xf]
        %v3310 = vld [vmem:[%s250 + $0x3c] sm:$0xf]
        %v3311 = vld [vmem:[%s250 + $0x40] sm:$0x1]
        %v3312 = vld [vmem:[%s250 + $0x50] sm:$0xf]
        %v3313 = vld [vmem:[%s250 + $0x54] sm:$0xf]
        %v3314 = vld [vmem:[%s250 + $0x58] sm:$0x1]
        %v3315 = vld [vmem:[%s250 + $0x68] sm:$0xf]
        %v3316 = vld [vmem:[%s250 + $0x6c] sm:$0xf]
        %v3317 = vld [vmem:[%s250 + $0x70] sm:$0x1]
        %v3318 = vld [vmem:[%s250 + $0x80] sm:$0xf]
        %v3319 = vld [vmem:[%s250 + $0x84] sm:$0xf]
        %v3320 = vld [vmem:[%s250 + $0x88] sm:$0x1]
        %v3321 = vld [vmem:[%s250 + $0x98] sm:$0xf]
        %v3322 = vld [vmem:[%s250 + $0x9c] sm:$0xf]
        %v3323 = vld [vmem:[%s250 + $0xa0] sm:$0x1]
        %v3324 = vld [vmem:[%s250 + $0xb0] sm:$0xf]
        %v3325 = vld [vmem:[%s250 + $0xb4] sm:$0xf]
        %v3326 = vld [vmem:[%s250 + $0xb8] sm:$0x1]
        %v3327 = vld [vmem:[%s250 + $0xc8] sm:$0xf]
        %v3328 = vld [vmem:[%s250 + $0xcc] sm:$0xf]
        %v3329 = vld [vmem:[%s250 + $0xd0] sm:$0x1]
        %v3330 = vld [vmem:[%s250 + $0xe0] sm:$0xf]
        %v3331 = vld [vmem:[%s250 + $0xe4] sm:$0xf]
        %v3332 = vld [vmem:[%s250 + $0xe8] sm:$0x1]
        %v3333 = vld [vmem:[%s250 + $0xf8] sm:$0xf]
        %v3334 = vld [vmem:[%s250 + $0xfc] sm:$0xf]
        %v3335 = vld [vmem:[%s250 + $0x100] sm:$0x1]
        %v3336 = vld [vmem:[%s250 + $0x110] sm:$0xf]
        %v3337 = vld [vmem:[%s250 + $0x114] sm:$0xf]
        %v3338 = vld [vmem:[%s250 + $0x118] sm:$0x1]
        %v3339 = vld [vmem:[%s250 + $0x128] sm:$0xf]
        %v3340 = vld [vmem:[%s250 + $0x12c] sm:$0xf]
        %v3341 = vld [vmem:[%s250 + $0x130] sm:$0x1]
        %v3342 = vld [vmem:[%s250 + $0x140] sm:$0xf]
        %v3343 = vld [vmem:[%s250 + $0x144] sm:$0xf]
        %v3344 = vld [vmem:[%s250 + $0x148] sm:$0x1]
        %v3345 = vld [vmem:[%s250 + $0x158] sm:$0xf]
        %v3346 = vld [vmem:[%s250 + $0x15c] sm:$0xf]
        %v3347 = vld [vmem:[%s250 + $0x160] sm:$0x1]
        %v3348 = vld [vmem:[%s250 + $0x170] sm:$0xf]
        %v3349 = vld [vmem:[%s250 + $0x174] sm:$0xf]
        %v3350 = vld [vmem:[%s250 + $0x178] sm:$0x1]
        %v3352 = vshrl.u32 %v3303, 16
        %v3354 = vrot.slane %v3352, 4
        %v3355 = vshll.u32 %v3303, 16
        %v3357 = vrot.slane %v3355, 5
        %v3358 = vor.u32 %v3354, %v3357
        %v3359 = vrot.slane %v3358, 4
        %v3361 = vshll.u32 %v3304, 16
        %v3363 = vrot.slane %v3361, 5
        %v3364 = vsel %vm1520, %v3359, %v3363
        %v3365 = vshrl.u32 %v3304, 16
        %v3367 = vrot.slane %v3365, 4
        %v3368 = vor.u32 %v3367, %v3363
        %v3369 = vrot.slane %v3368, 4
        %v3371 = vshll.u32 %v3305, 16
        %v3373 = vrot.slane %v3371, 5
        %v3374 = vsel %vm1520, %v3369, %v3373
        %v3376 = vshrl.u32 %v3306, 16
        %v3378 = vrot.slane %v3376, 4
        %v3379 = vshll.u32 %v3306, 16
        %v3381 = vrot.slane %v3379, 5
        %v3382 = vor.u32 %v3378, %v3381
        %v3383 = vrot.slane %v3382, 4
        %v3385 = vshll.u32 %v3307, 16
        %v3387 = vrot.slane %v3385, 5
        %v3388 = vsel %vm1520, %v3383, %v3387
        %v3389 = vshrl.u32 %v3307, 16
        %v3391 = vrot.slane %v3389, 4
        %v3392 = vor.u32 %v3391, %v3387
        %v3393 = vrot.slane %v3392, 4
        %v3395 = vshll.u32 %v3308, 16
        %v3397 = vrot.slane %v3395, 5
        %v3398 = vsel %vm1520, %v3393, %v3397
        %v3400 = vshrl.u32 %v3309, 16
        %v3402 = vrot.slane %v3400, 4
        %v3403 = vshll.u32 %v3309, 16
        %v3405 = vrot.slane %v3403, 5
        %v3406 = vor.u32 %v3402, %v3405
        %v3407 = vrot.slane %v3406, 4
        %v3409 = vshll.u32 %v3310, 16
        %v3411 = vrot.slane %v3409, 5
        %v3412 = vsel %vm1520, %v3407, %v3411
        %v3413 = vshrl.u32 %v3310, 16
        %v3415 = vrot.slane %v3413, 4
        %v3416 = vor.u32 %v3415, %v3411
        %v3417 = vrot.slane %v3416, 4
        %v3419 = vshll.u32 %v3311, 16
        %v3421 = vrot.slane %v3419, 5
        %v3422 = vsel %vm1520, %v3417, %v3421
        %v3424 = vshrl.u32 %v3312, 16
        %v3426 = vrot.slane %v3424, 4
        %v3427 = vshll.u32 %v3312, 16
        %v3429 = vrot.slane %v3427, 5
        %v3430 = vor.u32 %v3426, %v3429
        %v3431 = vrot.slane %v3430, 4
        %v3433 = vshll.u32 %v3313, 16
        %v3435 = vrot.slane %v3433, 5
        %v3436 = vsel %vm1520, %v3431, %v3435
        %v3437 = vshrl.u32 %v3313, 16
        %v3439 = vrot.slane %v3437, 4
        %v3440 = vor.u32 %v3439, %v3435
        %v3441 = vrot.slane %v3440, 4
        %v3443 = vshll.u32 %v3314, 16
        %v3445 = vrot.slane %v3443, 5
        %v3446 = vsel %vm1520, %v3441, %v3445
        %v3448 = vshrl.u32 %v3315, 16
        %v3450 = vrot.slane %v3448, 4
        %v3451 = vshll.u32 %v3315, 16
        %v3453 = vrot.slane %v3451, 5
        %v3454 = vor.u32 %v3450, %v3453
        %v3455 = vrot.slane %v3454, 4
        %v3457 = vshll.u32 %v3316, 16
        %v3459 = vrot.slane %v3457, 5
        %v3460 = vsel %vm1520, %v3455, %v3459
        %v3461 = vshrl.u32 %v3316, 16
        %v3463 = vrot.slane %v3461, 4
        %v3464 = vor.u32 %v3463, %v3459
        %v3465 = vrot.slane %v3464, 4
        %v3467 = vshll.u32 %v3317, 16
        %v3469 = vrot.slane %v3467, 5
        %v3470 = vsel %vm1520, %v3465, %v3469
        %v3472 = vshrl.u32 %v3318, 16
        %v3474 = vrot.slane %v3472, 4
        %v3475 = vshll.u32 %v3318, 16
        %v3477 = vrot.slane %v3475, 5
        %v3478 = vor.u32 %v3474, %v3477
        %v3479 = vrot.slane %v3478, 4
        %v3481 = vshll.u32 %v3319, 16
        %v3483 = vrot.slane %v3481, 5
        %v3484 = vsel %vm1520, %v3479, %v3483
        %v3485 = vshrl.u32 %v3319, 16
        %v3487 = vrot.slane %v3485, 4
        %v3488 = vor.u32 %v3487, %v3483
        %v3489 = vrot.slane %v3488, 4
        %v3491 = vshll.u32 %v3320, 16
        %v3493 = vrot.slane %v3491, 5
        %v3494 = vsel %vm1520, %v3489, %v3493
        %v3496 = vshrl.u32 %v3321, 16
        %v3498 = vrot.slane %v3496, 4
        %v3499 = vshll.u32 %v3321, 16
        %v3501 = vrot.slane %v3499, 5
        %v3502 = vor.u32 %v3498, %v3501
        %v3503 = vrot.slane %v3502, 4
        %v3505 = vshll.u32 %v3322, 16
        %v3507 = vrot.slane %v3505, 5
        %v3508 = vsel %vm1520, %v3503, %v3507
        %v3509 = vshrl.u32 %v3322, 16
        %v3511 = vrot.slane %v3509, 4
        %v3512 = vor.u32 %v3511, %v3507
        %v3513 = vrot.slane %v3512, 4
        %v3515 = vshll.u32 %v3323, 16
        %v3517 = vrot.slane %v3515, 5
        %v3518 = vsel %vm1520, %v3513, %v3517
        %v3520 = vshrl.u32 %v3324, 16
        %v3522 = vrot.slane %v3520, 4
        %v3523 = vshll.u32 %v3324, 16
        %v3525 = vrot.slane %v3523, 5
        %v3526 = vor.u32 %v3522, %v3525
        %v3527 = vrot.slane %v3526, 4
        %v3529 = vshll.u32 %v3325, 16
        %v3531 = vrot.slane %v3529, 5
        %v3532 = vsel %vm1520, %v3527, %v3531
        %v3533 = vshrl.u32 %v3325, 16
        %v3535 = vrot.slane %v3533, 4
        %v3536 = vor.u32 %v3535, %v3531
        %v3537 = vrot.slane %v3536, 4
        %v3539 = vshll.u32 %v3326, 16
        %v3541 = vrot.slane %v3539, 5
        %v3542 = vsel %vm1520, %v3537, %v3541
        %v3544 = vshrl.u32 %v3327, 16
        %v3546 = vrot.slane %v3544, 4
        %v3547 = vshll.u32 %v3327, 16
        %v3549 = vrot.slane %v3547, 5
        %v3550 = vor.u32 %v3546, %v3549
        %v3551 = vrot.slane %v3550, 4
        %v3553 = vshll.u32 %v3328, 16
        %v3555 = vrot.slane %v3553, 5
        %v3556 = vsel %vm1520, %v3551, %v3555
        %v3557 = vshrl.u32 %v3328, 16
        %v3559 = vrot.slane %v3557, 4
        %v3560 = vor.u32 %v3559, %v3555
        %v3561 = vrot.slane %v3560, 4
        %v3563 = vshll.u32 %v3329, 16
        %v3565 = vrot.slane %v3563, 5
        %v3566 = vsel %vm1520, %v3561, %v3565
        %v3568 = vshrl.u32 %v3330, 16
        %v3570 = vrot.slane %v3568, 4
        %v3571 = vshll.u32 %v3330, 16
        %v3573 = vrot.slane %v3571, 5
        %v3574 = vor.u32 %v3570, %v3573
        %v3575 = vrot.slane %v3574, 4
        %v3577 = vshll.u32 %v3331, 16
        %v3579 = vrot.slane %v3577, 5
        %v3580 = vsel %vm1520, %v3575, %v3579
        %v3581 = vshrl.u32 %v3331, 16
        %v3583 = vrot.slane %v3581, 4
        %v3584 = vor.u32 %v3583, %v3579
        %v3585 = vrot.slane %v3584, 4
        %v3587 = vshll.u32 %v3332, 16
        %v3589 = vrot.slane %v3587, 5
        %v3590 = vsel %vm1520, %v3585, %v3589
        %v3592 = vshrl.u32 %v3333, 16
        %v3594 = vrot.slane %v3592, 4
        %v3595 = vshll.u32 %v3333, 16
        %v3597 = vrot.slane %v3595, 5
        %v3598 = vor.u32 %v3594, %v3597
        %v3599 = vrot.slane %v3598, 4
        %v3601 = vshll.u32 %v3334, 16
        %v3603 = vrot.slane %v3601, 5
        %v3604 = vsel %vm1520, %v3599, %v3603
        %v3605 = vshrl.u32 %v3334, 16
        %v3607 = vrot.slane %v3605, 4
        %v3608 = vor.u32 %v3607, %v3603
        %v3609 = vrot.slane %v3608, 4
        %v3611 = vshll.u32 %v3335, 16
        %v3613 = vrot.slane %v3611, 5
        %v3614 = vsel %vm1520, %v3609, %v3613
        %v3616 = vshrl.u32 %v3336, 16
        %v3618 = vrot.slane %v3616, 4
        %v3619 = vshll.u32 %v3336, 16
        %v3621 = vrot.slane %v3619, 5
        %v3622 = vor.u32 %v3618, %v3621
        %v3623 = vrot.slane %v3622, 4
        %v3625 = vshll.u32 %v3337, 16
        %v3627 = vrot.slane %v3625, 5
        %v3628 = vsel %vm1520, %v3623, %v3627
        %v3629 = vshrl.u32 %v3337, 16
        %v3631 = vrot.slane %v3629, 4
        %v3632 = vor.u32 %v3631, %v3627
        %v3633 = vrot.slane %v3632, 4
        %v3635 = vshll.u32 %v3338, 16
        %v3637 = vrot.slane %v3635, 5
        %v3638 = vsel %vm1520, %v3633, %v3637
        %v3640 = vshrl.u32 %v3339, 16
        %v3642 = vrot.slane %v3640, 4
        %v3643 = vshll.u32 %v3339, 16
        %v3645 = vrot.slane %v3643, 5
        %v3646 = vor.u32 %v3642, %v3645
        %v3647 = vrot.slane %v3646, 4
        %v3649 = vshll.u32 %v3340, 16
        %v3651 = vrot.slane %v3649, 5
        %v3652 = vsel %vm1520, %v3647, %v3651
        %v3653 = vshrl.u32 %v3340, 16
        %v3655 = vrot.slane %v3653, 4
        %v3656 = vor.u32 %v3655, %v3651
        %v3657 = vrot.slane %v3656, 4
        %v3659 = vshll.u32 %v3341, 16
        %v3661 = vrot.slane %v3659, 5
        %v3662 = vsel %vm1520, %v3657, %v3661
        %v3664 = vshrl.u32 %v3342, 16
        %v3666 = vrot.slane %v3664, 4
        %v3667 = vshll.u32 %v3342, 16
        %v3669 = vrot.slane %v3667, 5
        %v3670 = vor.u32 %v3666, %v3669
        %v3671 = vrot.slane %v3670, 4
        %v3673 = vshll.u32 %v3343, 16
        %v3675 = vrot.slane %v3673, 5
        %v3676 = vsel %vm1520, %v3671, %v3675
        %v3677 = vshrl.u32 %v3343, 16
        %v3679 = vrot.slane %v3677, 4
        %v3680 = vor.u32 %v3679, %v3675
        %v3681 = vrot.slane %v3680, 4
        %v3683 = vshll.u32 %v3344, 16
        %v3685 = vrot.slane %v3683, 5
        %v3686 = vsel %vm1520, %v3681, %v3685
        %v3688 = vshrl.u32 %v3345, 16
        %v3690 = vrot.slane %v3688, 4
        %v3691 = vshll.u32 %v3345, 16
        %v3693 = vrot.slane %v3691, 5
        %v3694 = vor.u32 %v3690, %v3693
        %v3695 = vrot.slane %v3694, 4
        %v3697 = vshll.u32 %v3346, 16
        %v3699 = vrot.slane %v3697, 5
        %v3700 = vsel %vm1520, %v3695, %v3699
        %v3701 = vshrl.u32 %v3346, 16
        %v3703 = vrot.slane %v3701, 4
        %v3704 = vor.u32 %v3703, %v3699
        %v3705 = vrot.slane %v3704, 4
        %v3707 = vshll.u32 %v3347, 16
        %v3709 = vrot.slane %v3707, 5
        %v3710 = vsel %vm1520, %v3705, %v3709
        %v3712 = vshrl.u32 %v3348, 16
        %v3714 = vrot.slane %v3712, 4
        %v3715 = vshll.u32 %v3348, 16
        %v3717 = vrot.slane %v3715, 5
        %v3718 = vor.u32 %v3714, %v3717
        %v3719 = vrot.slane %v3718, 4
        %v3721 = vshll.u32 %v3349, 16
        %v3723 = vrot.slane %v3721, 5
        %v3724 = vsel %vm1520, %v3719, %v3723
        %v3725 = vshrl.u32 %v3349, 16
        %v3727 = vrot.slane %v3725, 4
        %v3728 = vor.u32 %v3727, %v3723
        %v3729 = vrot.slane %v3728, 4
        %v3731 = vshll.u32 %v3350, 16
        %v3733 = vrot.slane %v3731, 5
        %v3734 = vsel %vm1520, %v3729, %v3733
        %s3735 = scalar_lea.vmem [#allocation6], 320
        %v3736 = vld [vmem:[%s3735] sm:$0xf]
        %v3737 = vld [vmem:[%s3735 + $0x4] sm:$0xf]
        %v3738 = vld [vmem:[%s3735 + $0x8] sm:$0xf]
        %v3739 = vld [vmem:[%s3735 + $0xc] sm:$0xf]
        %v3740 = vld [vmem:[%s3735 + $0x10] sm:$0xf]
        %v3741 = vld [vmem:[%s3735 + $0x14] sm:$0xf]
        %v3742 = vld [vmem:[%s3735 + $0x18] sm:$0xf]
        %v3743 = vld [vmem:[%s3735 + $0x1c] sm:$0xf]
        %v3744 = vld [vmem:[%s3735 + $0x20] sm:$0xf]
        %v3745 = vld [vmem:[%s3735 + $0x24] sm:$0xf]
        %v3746 = vld [vmem:[%s3735 + $0x28] sm:$0xf]
        %v3747 = vld [vmem:[%s3735 + $0x2c] sm:$0xf]
        %v3748 = vld [vmem:[%s3735 + $0x30] sm:$0xf]
        %v3749 = vld [vmem:[%s3735 + $0x34] sm:$0xf]
        %v3750 = vld [vmem:[%s3735 + $0x38] sm:$0xf]
        %v3751 = vld [vmem:[%s3735 + $0x3c] sm:$0xf]
        %v3752 = vunpack.c.l.b16 %v3364
        %v3753 = vunpack.c.l.b16 %v3374
        %v3754 = vunpack.c.l.b16 %v3388
        %v3755 = vunpack.c.l.b16 %v3398
        %v3756 = vunpack.c.l.b16 %v3412
        %v3757 = vunpack.c.l.b16 %v3422
        %v3758 = vunpack.c.l.b16 %v3436
        %v3759 = vunpack.c.l.b16 %v3446
        %v3760 = vunpack.c.l.b16 %v3460
        %v3761 = vunpack.c.l.b16 %v3470
        %v3762 = vunpack.c.l.b16 %v3484
        %v3763 = vunpack.c.l.b16 %v3494
        %v3764 = vunpack.c.l.b16 %v3508
        %v3765 = vunpack.c.l.b16 %v3518
        %v3766 = vunpack.c.l.b16 %v3532
        %v3767 = vunpack.c.l.b16 %v3542
        %v3768 = vunpack.c.l.b16 %v3556
        %v3769 = vunpack.c.l.b16 %v3566
        %v3770 = vunpack.c.l.b16 %v3580
        %v3771 = vunpack.c.l.b16 %v3590
        %v3772 = vunpack.c.l.b16 %v3604
        %v3773 = vunpack.c.l.b16 %v3614
        %v3774 = vunpack.c.l.b16 %v3628
        %v3775 = vunpack.c.l.b16 %v3638
        %v3776 = vunpack.c.l.b16 %v3652
        %v3777 = vunpack.c.l.b16 %v3662
        %v3778 = vunpack.c.l.b16 %v3676
        %v3779 = vunpack.c.l.b16 %v3686
        %v3780 = vunpack.c.l.b16 %v3700
        %v3781 = vunpack.c.l.b16 %v3710
        %v3782 = vunpack.c.l.b16 %v3724
        %v3783 = vunpack.c.l.b16 %v3734
        %v3784 = vpack.c.b16 %v3753, %v3752
        %v3785 = vpack.c.b16 %v3755, %v3754
        %v3786 = vpack.c.b16 %v3757, %v3756
        %v3787 = vpack.c.b16 %v3759, %v3758
        %v3788 = vpack.c.b16 %v3761, %v3760
        %v3789 = vpack.c.b16 %v3763, %v3762
        %v3790 = vpack.c.b16 %v3765, %v3764
        %v3791 = vpack.c.b16 %v3767, %v3766
        %v3792 = vpack.c.b16 %v3769, %v3768
        %v3793 = vpack.c.b16 %v3771, %v3770
        %v3794 = vpack.c.b16 %v3773, %v3772
        %v3795 = vpack.c.b16 %v3775, %v3774
        %v3796 = vpack.c.b16 %v3777, %v3776
        %v3797 = vpack.c.b16 %v3779, %v3778
        %v3798 = vpack.c.b16 %v3781, %v3780
        %v3799 = vpack.c.b16 %v3783, %v3782
        %v3832 = vunpack.c.l.b16 %v3736
        %v3833 = vunpack.c.l.b16 %v3737
        %v3834 = vunpack.c.l.b16 %v3738
        %v3835 = vunpack.c.l.b16 %v3739
        %v3836 = vunpack.c.l.b16 %v3740
        %v3837 = vunpack.c.l.b16 %v3741
        %v3838 = vunpack.c.l.b16 %v3742
        %v3839 = vunpack.c.l.b16 %v3743
        %v3840 = vunpack.c.l.b16 %v3744
        %v3841 = vunpack.c.l.b16 %v3745
        %v3842 = vunpack.c.l.b16 %v3746
        %v3843 = vunpack.c.l.b16 %v3747
        %v3844 = vunpack.c.l.b16 %v3748
        %v3845 = vunpack.c.l.b16 %v3749
        %v3846 = vunpack.c.l.b16 %v3750
        %v3847 = vunpack.c.l.b16 %v3751
        %v3848 = vpack.c.b16 %v3833, %v3832
        %v3849 = vpack.c.b16 %v3835, %v3834
        %v3850 = vpack.c.b16 %v3837, %v3836
        %v3851 = vpack.c.b16 %v3839, %v3838
        %v3852 = vpack.c.b16 %v3841, %v3840
        %v3853 = vpack.c.b16 %v3843, %v3842
        %v3854 = vpack.c.b16 %v3845, %v3844
        %v3855 = vpack.c.b16 %v3847, %v3846
        %3864 = vmatprep.subr.bf16.mxu0 0
        %3865 = vmatpush1.bf16.msra.mxu0 %v3855
        %3866 = vmatprep.subr.bf16.mxu0 0
        %3867 = vmatpush1.bf16.msra.mxu0 %v3854
        %3868 = vmatprep.subr.bf16.mxu0 0
        %3869 = vmatpush1.bf16.msra.mxu0 %v3853
        %3870 = vmatprep.subr.bf16.mxu0 0
        %3871 = vmatpush1.bf16.msra.mxu0 %v3852
        %3872 = vmatprep.subr.bf16.mxu0 0
        %3873 = vmatpush1.bf16.msra.mxu0 %v3851
        %3874 = vmatprep.subr.bf16.mxu0 0
        %3875 = vmatpush1.bf16.msra.mxu0 %v3850
        %3876 = vmatprep.subr.bf16.mxu0 0
        %3877 = vmatpush1.bf16.msra.mxu0 %v3849
        %3878 = vmatprep.subr.bf16.mxu0 0
        %3879 = vmatpush1.bf16.msra.mxu0 %v3848
        %3880 = vmatprep.subr.bf16.mxu0 0
        %3881 = vmatpush2.bf16.msra.mxu0 0
        %3882 = vmatprep.subr.bf16.mxu0 0
        %3883 = vmatpush2.bf16.msra.mxu0 0
        %3884 = vmatprep.subr.bf16.mxu0 0
        %3885 = vmatpush2.bf16.msra.mxu0 0
        %3886 = vmatprep.subr.bf16.mxu0 0
        %3887 = vmatpush2.bf16.msra.mxu0 0
        %3888 = vmatprep.subr.bf16.mxu0 0
        %3889 = vmatpush2.bf16.msra.mxu0 0
        %3890 = vmatprep.subr.bf16.mxu0 0
        %3891 = vmatpush2.bf16.msra.mxu0 0
        %3892 = vmatprep.subr.bf16.mxu0 0
        %3893 = vmatpush2.bf16.msra.mxu0 0
        %3894 = vmatprep.subr.bf16.mxu0 0
        %3895 = vmatpush2.bf16.msra.mxu0 0
        %3896 = vmatprep.mubr.bf16.mxu0 0
        %3897 = vmatmul.mubr.bf16.gmra.mxu0 %v3784
        %v3898 = vpop.f32.mrf.mxu0
        %v3899 = vadd.f32 0.0, %v3898
        %v3900 = vpop.f32.mrf.mxu0
        %v3901 = vpop.f32.mrf.mxu0
        %v3902 = vadd.f32 0.0, %v3901
        %v3903 = vpop.f32.mrf.mxu0
        %3904 = vmatprep.mubr.bf16.mxu0 0
        %3905 = vmatmul.mubr.bf16.gmra.mxu0 %v3785
        %v3906 = vpop.f32.mrf.mxu0
        %v3907 = vadd.f32 0.0, %v3906
        %v3908 = vpop.f32.mrf.mxu0
        %v3909 = vpop.f32.mrf.mxu0
        %v3910 = vadd.f32 0.0, %v3909
        %v3911 = vpop.f32.mrf.mxu0
        %3912 = vmatprep.mubr.bf16.mxu0 0
        %3913 = vmatmul.mubr.bf16.gmra.mxu0 %v3786
        %v3914 = vpop.f32.mrf.mxu0
        %v3915 = vadd.f32 0.0, %v3914
        %v3916 = vpop.f32.mrf.mxu0
        %v3917 = vpop.f32.mrf.mxu0
        %v3918 = vadd.f32 0.0, %v3917
        %v3919 = vpop.f32.mrf.mxu0
        %3920 = vmatprep.mubr.bf16.mxu0 0
        %3921 = vmatmul.mubr.bf16.gmra.mxu0 %v3787
        %v3922 = vpop.f32.mrf.mxu0
        %v3923 = vadd.f32 0.0, %v3922
        %v3924 = vpop.f32.mrf.mxu0
        %v3925 = vpop.f32.mrf.mxu0
        %v3926 = vadd.f32 0.0, %v3925
        %v3927 = vpop.f32.mrf.mxu0
        %3928 = vmatprep.mubr.bf16.mxu0 0
        %3929 = vmatmul.mubr.bf16.gmra.mxu0 %v3788
        %v3930 = vpop.f32.mrf.mxu0
        %v3931 = vadd.f32 0.0, %v3930
        %v3932 = vpop.f32.mrf.mxu0
        %v3933 = vpop.f32.mrf.mxu0
        %v3934 = vadd.f32 0.0, %v3933
        %v3935 = vpop.f32.mrf.mxu0
        %3936 = vmatprep.mubr.bf16.mxu0 0
        %3937 = vmatmul.mubr.bf16.gmra.mxu0 %v3789
        %v3938 = vpop.f32.mrf.mxu0
        %v3939 = vadd.f32 0.0, %v3938
        %v3940 = vpop.f32.mrf.mxu0
        %v3941 = vpop.f32.mrf.mxu0
        %v3942 = vadd.f32 0.0, %v3941
        %v3943 = vpop.f32.mrf.mxu0
        %3944 = vmatprep.mubr.bf16.mxu0 0
        %3945 = vmatmul.mubr.bf16.gmra.mxu0 %v3790
        %v3946 = vpop.f32.mrf.mxu0
        %v3947 = vadd.f32 0.0, %v3946
        %v3948 = vpop.f32.mrf.mxu0
        %v3949 = vpop.f32.mrf.mxu0
        %v3950 = vadd.f32 0.0, %v3949
        %v3951 = vpop.f32.mrf.mxu0
        %3952 = vmatprep.mubr.bf16.mxu0 0
        %3953 = vmatmul.mubr.bf16.gmra.mxu0 %v3791
        %v3954 = vpop.f32.mrf.mxu0
        %v3955 = vadd.f32 0.0, %v3954
        %v3956 = vpop.f32.mrf.mxu0
        %v3957 = vpop.f32.mrf.mxu0
        %v3958 = vadd.f32 0.0, %v3957
        %v3959 = vpop.f32.mrf.mxu0
        %3960 = vmatprep.mubr.bf16.mxu0 0
        %3961 = vmatmul.mubr.bf16.gmra.mxu0 %v3792
        %v3962 = vpop.f32.mrf.mxu0
        %v3963 = vadd.f32 0.0, %v3962
        %v3964 = vpop.f32.mrf.mxu0
        %v3965 = vpop.f32.mrf.mxu0
        %v3966 = vadd.f32 0.0, %v3965
        %v3967 = vpop.f32.mrf.mxu0
        %3968 = vmatprep.mubr.bf16.mxu0 0
        %3969 = vmatmul.mubr.bf16.gmra.mxu0 %v3793
        %v3970 = vpop.f32.mrf.mxu0
        %v3971 = vadd.f32 0.0, %v3970
        %v3972 = vpop.f32.mrf.mxu0
        %v3973 = vpop.f32.mrf.mxu0
        %v3974 = vadd.f32 0.0, %v3973
        %v3975 = vpop.f32.mrf.mxu0
        %3976 = vmatprep.mubr.bf16.mxu0 0
        %3977 = vmatmul.mubr.bf16.gmra.mxu0 %v3794
        %v3978 = vpop.f32.mrf.mxu0
        %v3979 = vadd.f32 0.0, %v3978
        %v3980 = vpop.f32.mrf.mxu0
        %v3981 = vpop.f32.mrf.mxu0
        %v3982 = vadd.f32 0.0, %v3981
        %v3983 = vpop.f32.mrf.mxu0
        %3984 = vmatprep.mubr.bf16.mxu0 0
        %3985 = vmatmul.mubr.bf16.gmra.mxu0 %v3795
        %v3986 = vpop.f32.mrf.mxu0
        %v3987 = vadd.f32 0.0, %v3986
        %v3988 = vpop.f32.mrf.mxu0
        %v3989 = vpop.f32.mrf.mxu0
        %v3990 = vadd.f32 0.0, %v3989
        %v3991 = vpop.f32.mrf.mxu0
        %3992 = vmatprep.mubr.bf16.mxu0 0
        %3993 = vmatmul.mubr.bf16.gmra.mxu0 %v3796
        %v3994 = vpop.f32.mrf.mxu0
        %v3995 = vadd.f32 0.0, %v3994
        %v3996 = vpop.f32.mrf.mxu0
        %v3997 = vpop.f32.mrf.mxu0
        %v3998 = vadd.f32 0.0, %v3997
        %v3999 = vpop.f32.mrf.mxu0
        %4000 = vmatprep.mubr.bf16.mxu0 0
        %4001 = vmatmul.mubr.bf16.gmra.mxu0 %v3797
        %v4002 = vpop.f32.mrf.mxu0
        %v4003 = vadd.f32 0.0, %v4002
        %v4004 = vpop.f32.mrf.mxu0
        %v4005 = vpop.f32.mrf.mxu0
        %v4006 = vadd.f32 0.0, %v4005
        %v4007 = vpop.f32.mrf.mxu0
        %4008 = vmatprep.mubr.bf16.mxu0 0
        %4009 = vmatmul.mubr.bf16.gmra.mxu0 %v3798
        %v4010 = vpop.f32.mrf.mxu0
        %v4011 = vadd.f32 0.0, %v4010
        %v4012 = vpop.f32.mrf.mxu0
        %v4013 = vpop.f32.mrf.mxu0
        %v4014 = vadd.f32 0.0, %v4013
        %v4015 = vpop.f32.mrf.mxu0
        %4016 = vmatprep.mubr.bf16.mxu0 0
        %4017 = vmatmul.mubr.bf16.gmra.mxu0 %v3799
        %v4018 = vpop.f32.mrf.mxu0
        %v4019 = vadd.f32 0.0, %v4018
        %v4020 = vpop.f32.mrf.mxu0
        %v4021 = vpop.f32.mrf.mxu0
        %v4022 = vadd.f32 0.0, %v4021
        %v4023 = vpop.f32.mrf.mxu0
        %4024 = vdwg.mxu0
        %v4025 = vadd.f32 %v3271, %v3899
        %v4026 = vadd.f32 %v3272, %v3902
        %v4027 = vadd.f32 %v3273, %v3907
        %v4028 = vadd.f32 %v3274, %v3910
        %v4029 = vadd.f32 %v3275, %v3915
        %v4030 = vadd.f32 %v3276, %v3918
        %v4031 = vadd.f32 %v3277, %v3923
        %v4032 = vadd.f32 %v3278, %v3926
        %v4033 = vadd.f32 %v3279, %v3931
        %v4034 = vadd.f32 %v3280, %v3934
        %v4035 = vadd.f32 %v3281, %v3939
        %v4036 = vadd.f32 %v3282, %v3942
        %v4037 = vadd.f32 %v3283, %v3947
        %v4038 = vadd.f32 %v3284, %v3950
        %v4039 = vadd.f32 %v3285, %v3955
        %v4040 = vadd.f32 %v3286, %v3958
        %v4041 = vadd.f32 %v3287, %v3963
        %v4042 = vadd.f32 %v3288, %v3966
        %v4043 = vadd.f32 %v3289, %v3971
        %v4044 = vadd.f32 %v3290, %v3974
        %v4045 = vadd.f32 %v3291, %v3979
        %v4046 = vadd.f32 %v3292, %v3982
        %v4047 = vadd.f32 %v3293, %v3987
        %v4048 = vadd.f32 %v3294, %v3990
        %v4049 = vadd.f32 %v3295, %v3995
        %v4050 = vadd.f32 %v3296, %v3998
        %v4051 = vadd.f32 %v3297, %v4003
        %v4052 = vadd.f32 %v3298, %v4006
        %v4053 = vadd.f32 %v3299, %v4011
        %v4054 = vadd.f32 %v3300, %v4014
        %v4055 = vadd.f32 %v3301, %v4019
        %v4056 = vadd.f32 %v3302, %v4022
        %s4057 = scalar_lea.vmem [#allocation2], 48
        %v4058 = vld [vmem:[%s4057 + $0x4] sm:$0x8]
        %v4059 = vld [vmem:[%s4057 + $0x8] sm:$0xf]
        %v4060 = vld [vmem:[%s4057 + $0xc] sm:$0xf]
        %v4061 = vld [vmem:[%s4057 + $0x1c] sm:$0x8]
        %v4062 = vld [vmem:[%s4057 + $0x20] sm:$0xf]
        %v4063 = vld [vmem:[%s4057 + $0x24] sm:$0xf]
        %v4064 = vld [vmem:[%s4057 + $0x34] sm:$0x8]
        %v4065 = vld [vmem:[%s4057 + $0x38] sm:$0xf]
        %v4066 = vld [vmem:[%s4057 + $0x3c] sm:$0xf]
        %v4067 = vld [vmem:[%s4057 + $0x4c] sm:$0x8]
        %v4068 = vld [vmem:[%s4057 + $0x50] sm:$0xf]
        %v4069 = vld [vmem:[%s4057 + $0x54] sm:$0xf]
        %v4070 = vld [vmem:[%s4057 + $0x64] sm:$0x8]
        %v4071 = vld [vmem:[%s4057 + $0x68] sm:$0xf]
        %v4072 = vld [vmem:[%s4057 + $0x6c] sm:$0xf]
        %v4073 = vld [vmem:[%s4057 + $0x7c] sm:$0x8]
        %v4074 = vld [vmem:[%s4057 + $0x80] sm:$0xf]
        %v4075 = vld [vmem:[%s4057 + $0x84] sm:$0xf]
        %v4076 = vld [vmem:[%s4057 + $0x94] sm:$0x8]
        %v4077 = vld [vmem:[%s4057 + $0x98] sm:$0xf]
        %v4078 = vld [vmem:[%s4057 + $0x9c] sm:$0xf]
        %v4079 = vld [vmem:[%s4057 + $0xac] sm:$0x8]
        %v4080 = vld [vmem:[%s4057 + $0xb0] sm:$0xf]
        %v4081 = vld [vmem:[%s4057 + $0xb4] sm:$0xf]
        %v4082 = vld [vmem:[%s4057 + $0xc4] sm:$0x8]
        %v4083 = vld [vmem:[%s4057 + $0xc8] sm:$0xf]
        %v4084 = vld [vmem:[%s4057 + $0xcc] sm:$0xf]
        %v4085 = vld [vmem:[%s4057 + $0xdc] sm:$0x8]
        %v4086 = vld [vmem:[%s4057 + $0xe0] sm:$0xf]
        %v4087 = vld [vmem:[%s4057 + $0xe4] sm:$0xf]
        %v4088 = vld [vmem:[%s4057 + $0xf4] sm:$0x8]
        %v4089 = vld [vmem:[%s4057 + $0xf8] sm:$0xf]
        %v4090 = vld [vmem:[%s4057 + $0xfc] sm:$0xf]
        %v4091 = vld [vmem:[%s4057 + $0x10c] sm:$0x8]
        %v4092 = vld [vmem:[%s4057 + $0x110] sm:$0xf]
        %v4093 = vld [vmem:[%s4057 + $0x114] sm:$0xf]
        %v4094 = vld [vmem:[%s4057 + $0x124] sm:$0x8]
        %v4095 = vld [vmem:[%s4057 + $0x128] sm:$0xf]
        %v4096 = vld [vmem:[%s4057 + $0x12c] sm:$0xf]
        %v4097 = vld [vmem:[%s4057 + $0x13c] sm:$0x8]
        %v4098 = vld [vmem:[%s4057 + $0x140] sm:$0xf]
        %v4099 = vld [vmem:[%s4057 + $0x144] sm:$0xf]
        %v4100 = vld [vmem:[%s4057 + $0x154] sm:$0x8]
        %v4101 = vld [vmem:[%s4057 + $0x158] sm:$0xf]
        %v4102 = vld [vmem:[%s4057 + $0x15c] sm:$0xf]
        %v4103 = vld [vmem:[%s4057 + $0x16c] sm:$0x8]
        %v4104 = vld [vmem:[%s4057 + $0x170] sm:$0xf]
        %v4105 = vld [vmem:[%s4057 + $0x174] sm:$0xf]
        %v4107 = vshrl.u32 %v4058, 16
        %v4109 = vrot.slane %v4107, 7
        %v4110 = vrot.slane %v4109, 4
        %v4112 = vshrl.u32 %v4059, 16
        %v4114 = vrot.slane %v4112, 7
        %v4115 = vshll.u32 %v4059, 16
        %v4117 = vor.u32 %v4114, %v4115
        %v4118 = vsel %vm442, %v4110, %v4117
        %v4119 = vrot.slane %v4114, 4
        %v4121 = vshrl.u32 %v4060, 16
        %v4123 = vrot.slane %v4121, 7
        %v4124 = vshll.u32 %v4060, 16
        %v4126 = vor.u32 %v4123, %v4124
        %v4127 = vsel %vm442, %v4119, %v4126
        %v4129 = vshrl.u32 %v4061, 16
        %v4131 = vrot.slane %v4129, 7
        %v4132 = vrot.slane %v4131, 4
        %v4134 = vshrl.u32 %v4062, 16
        %v4136 = vrot.slane %v4134, 7
        %v4137 = vshll.u32 %v4062, 16
        %v4139 = vor.u32 %v4136, %v4137
        %v4140 = vsel %vm442, %v4132, %v4139
        %v4141 = vrot.slane %v4136, 4
        %v4143 = vshrl.u32 %v4063, 16
        %v4145 = vrot.slane %v4143, 7
        %v4146 = vshll.u32 %v4063, 16
        %v4148 = vor.u32 %v4145, %v4146
        %v4149 = vsel %vm442, %v4141, %v4148
        %v4151 = vshrl.u32 %v4064, 16
        %v4153 = vrot.slane %v4151, 7
        %v4154 = vrot.slane %v4153, 4
        %v4156 = vshrl.u32 %v4065, 16
        %v4158 = vrot.slane %v4156, 7
        %v4159 = vshll.u32 %v4065, 16
        %v4161 = vor.u32 %v4158, %v4159
        %v4162 = vsel %vm442, %v4154, %v4161
        %v4163 = vrot.slane %v4158, 4
        %v4165 = vshrl.u32 %v4066, 16
        %v4167 = vrot.slane %v4165, 7
        %v4168 = vshll.u32 %v4066, 16
        %v4170 = vor.u32 %v4167, %v4168
        %v4171 = vsel %vm442, %v4163, %v4170
        %v4173 = vshrl.u32 %v4067, 16
        %v4175 = vrot.slane %v4173, 7
        %v4176 = vrot.slane %v4175, 4
        %v4178 = vshrl.u32 %v4068, 16
        %v4180 = vrot.slane %v4178, 7
        %v4181 = vshll.u32 %v4068, 16
        %v4183 = vor.u32 %v4180, %v4181
        %v4184 = vsel %vm442, %v4176, %v4183
        %v4185 = vrot.slane %v4180, 4
        %v4187 = vshrl.u32 %v4069, 16
        %v4189 = vrot.slane %v4187, 7
        %v4190 = vshll.u32 %v4069, 16
        %v4192 = vor.u32 %v4189, %v4190
        %v4193 = vsel %vm442, %v4185, %v4192
        %v4195 = vshrl.u32 %v4070, 16
        %v4197 = vrot.slane %v4195, 7
        %v4198 = vrot.slane %v4197, 4
        %v4200 = vshrl.u32 %v4071, 16
        %v4202 = vrot.slane %v4200, 7
        %v4203 = vshll.u32 %v4071, 16
        %v4205 = vor.u32 %v4202, %v4203
        %v4206 = vsel %vm442, %v4198, %v4205
        %v4207 = vrot.slane %v4202, 4
        %v4209 = vshrl.u32 %v4072, 16
        %v4211 = vrot.slane %v4209, 7
        %v4212 = vshll.u32 %v4072, 16
        %v4214 = vor.u32 %v4211, %v4212
        %v4215 = vsel %vm442, %v4207, %v4214
        %v4217 = vshrl.u32 %v4073, 16
        %v4219 = vrot.slane %v4217, 7
        %v4220 = vrot.slane %v4219, 4
        %v4222 = vshrl.u32 %v4074, 16
        %v4224 = vrot.slane %v4222, 7
        %v4225 = vshll.u32 %v4074, 16
        %v4227 = vor.u32 %v4224, %v4225
        %v4228 = vsel %vm442, %v4220, %v4227
        %v4229 = vrot.slane %v4224, 4
        %v4231 = vshrl.u32 %v4075, 16
        %v4233 = vrot.slane %v4231, 7
        %v4234 = vshll.u32 %v4075, 16
        %v4236 = vor.u32 %v4233, %v4234
        %v4237 = vsel %vm442, %v4229, %v4236
        %v4239 = vshrl.u32 %v4076, 16
        %v4241 = vrot.slane %v4239, 7
        %v4242 = vrot.slane %v4241, 4
        %v4244 = vshrl.u32 %v4077, 16
        %v4246 = vrot.slane %v4244, 7
        %v4247 = vshll.u32 %v4077, 16
        %v4249 = vor.u32 %v4246, %v4247
        %v4250 = vsel %vm442, %v4242, %v4249
        %v4251 = vrot.slane %v4246, 4
        %v4253 = vshrl.u32 %v4078, 16
        %v4255 = vrot.slane %v4253, 7
        %v4256 = vshll.u32 %v4078, 16
        %v4258 = vor.u32 %v4255, %v4256
        %v4259 = vsel %vm442, %v4251, %v4258
        %v4261 = vshrl.u32 %v4079, 16
        %v4263 = vrot.slane %v4261, 7
        %v4264 = vrot.slane %v4263, 4
        %v4266 = vshrl.u32 %v4080, 16
        %v4268 = vrot.slane %v4266, 7
        %v4269 = vshll.u32 %v4080, 16
        %v4271 = vor.u32 %v4268, %v4269
        %v4272 = vsel %vm442, %v4264, %v4271
        %v4273 = vrot.slane %v4268, 4
        %v4275 = vshrl.u32 %v4081, 16
        %v4277 = vrot.slane %v4275, 7
        %v4278 = vshll.u32 %v4081, 16
        %v4280 = vor.u32 %v4277, %v4278
        %v4281 = vsel %vm442, %v4273, %v4280
        %v4283 = vshrl.u32 %v4082, 16
        %v4285 = vrot.slane %v4283, 7
        %v4286 = vrot.slane %v4285, 4
        %v4288 = vshrl.u32 %v4083, 16
        %v4290 = vrot.slane %v4288, 7
        %v4291 = vshll.u32 %v4083, 16
        %v4293 = vor.u32 %v4290, %v4291
        %v4294 = vsel %vm442, %v4286, %v4293
        %v4295 = vrot.slane %v4290, 4
        %v4297 = vshrl.u32 %v4084, 16
        %v4299 = vrot.slane %v4297, 7
        %v4300 = vshll.u32 %v4084, 16
        %v4302 = vor.u32 %v4299, %v4300
        %v4303 = vsel %vm442, %v4295, %v4302
        %v4305 = vshrl.u32 %v4085, 16
        %v4307 = vrot.slane %v4305, 7
        %v4308 = vrot.slane %v4307, 4
        %v4310 = vshrl.u32 %v4086, 16
        %v4312 = vrot.slane %v4310, 7
        %v4313 = vshll.u32 %v4086, 16
        %v4315 = vor.u32 %v4312, %v4313
        %v4316 = vsel %vm442, %v4308, %v4315
        %v4317 = vrot.slane %v4312, 4
        %v4319 = vshrl.u32 %v4087, 16
        %v4321 = vrot.slane %v4319, 7
        %v4322 = vshll.u32 %v4087, 16
        %v4324 = vor.u32 %v4321, %v4322
        %v4325 = vsel %vm442, %v4317, %v4324
        %v4327 = vshrl.u32 %v4088, 16
        %v4329 = vrot.slane %v4327, 7
        %v4330 = vrot.slane %v4329, 4
        %v4332 = vshrl.u32 %v4089, 16
        %v4334 = vrot.slane %v4332, 7
        %v4335 = vshll.u32 %v4089, 16
        %v4337 = vor.u32 %v4334, %v4335
        %v4338 = vsel %vm442, %v4330, %v4337
        %v4339 = vrot.slane %v4334, 4
        %v4341 = vshrl.u32 %v4090, 16
        %v4343 = vrot.slane %v4341, 7
        %v4344 = vshll.u32 %v4090, 16
        %v4346 = vor.u32 %v4343, %v4344
        %v4347 = vsel %vm442, %v4339, %v4346
        %v4349 = vshrl.u32 %v4091, 16
        %v4351 = vrot.slane %v4349, 7
        %v4352 = vrot.slane %v4351, 4
        %v4354 = vshrl.u32 %v4092, 16
        %v4356 = vrot.slane %v4354, 7
        %v4357 = vshll.u32 %v4092, 16
        %v4359 = vor.u32 %v4356, %v4357
        %v4360 = vsel %vm442, %v4352, %v4359
        %v4361 = vrot.slane %v4356, 4
        %v4363 = vshrl.u32 %v4093, 16
        %v4365 = vrot.slane %v4363, 7
        %v4366 = vshll.u32 %v4093, 16
        %v4368 = vor.u32 %v4365, %v4366
        %v4369 = vsel %vm442, %v4361, %v4368
        %v4371 = vshrl.u32 %v4094, 16
        %v4373 = vrot.slane %v4371, 7
        %v4374 = vrot.slane %v4373, 4
        %v4376 = vshrl.u32 %v4095, 16
        %v4378 = vrot.slane %v4376, 7
        %v4379 = vshll.u32 %v4095, 16
        %v4381 = vor.u32 %v4378, %v4379
        %v4382 = vsel %vm442, %v4374, %v4381
        %v4383 = vrot.slane %v4378, 4
        %v4385 = vshrl.u32 %v4096, 16
        %v4387 = vrot.slane %v4385, 7
        %v4388 = vshll.u32 %v4096, 16
        %v4390 = vor.u32 %v4387, %v4388
        %v4391 = vsel %vm442, %v4383, %v4390
        %v4393 = vshrl.u32 %v4097, 16
        %v4395 = vrot.slane %v4393, 7
        %v4396 = vrot.slane %v4395, 4
        %v4398 = vshrl.u32 %v4098, 16
        %v4400 = vrot.slane %v4398, 7
        %v4401 = vshll.u32 %v4098, 16
        %v4403 = vor.u32 %v4400, %v4401
        %v4404 = vsel %vm442, %v4396, %v4403
        %v4405 = vrot.slane %v4400, 4
        %v4407 = vshrl.u32 %v4099, 16
        %v4409 = vrot.slane %v4407, 7
        %v4410 = vshll.u32 %v4099, 16
        %v4412 = vor.u32 %v4409, %v4410
        %v4413 = vsel %vm442, %v4405, %v4412
        %v4415 = vshrl.u32 %v4100, 16
        %v4417 = vrot.slane %v4415, 7
        %v4418 = vrot.slane %v4417, 4
        %v4420 = vshrl.u32 %v4101, 16
        %v4422 = vrot.slane %v4420, 7
        %v4423 = vshll.u32 %v4101, 16
        %v4425 = vor.u32 %v4422, %v4423
        %v4426 = vsel %vm442, %v4418, %v4425
        %v4427 = vrot.slane %v4422, 4
        %v4429 = vshrl.u32 %v4102, 16
        %v4431 = vrot.slane %v4429, 7
        %v4432 = vshll.u32 %v4102, 16
        %v4434 = vor.u32 %v4431, %v4432
        %v4435 = vsel %vm442, %v4427, %v4434
        %v4437 = vshrl.u32 %v4103, 16
        %v4439 = vrot.slane %v4437, 7
        %v4440 = vrot.slane %v4439, 4
        %v4442 = vshrl.u32 %v4104, 16
        %v4444 = vrot.slane %v4442, 7
        %v4445 = vshll.u32 %v4104, 16
        %v4447 = vor.u32 %v4444, %v4445
        %v4448 = vsel %vm442, %v4440, %v4447
        %v4449 = vrot.slane %v4444, 4
        %v4451 = vshrl.u32 %v4105, 16
        %v4453 = vrot.slane %v4451, 7
        %v4454 = vshll.u32 %v4105, 16
        %v4456 = vor.u32 %v4453, %v4454
        %v4457 = vsel %vm442, %v4449, %v4456
        %s4458 = scalar_lea.vmem [#allocation6], 384
        %v4459 = vld [vmem:[%s4458] sm:$0xf]
        %v4460 = vld [vmem:[%s4458 + $0x4] sm:$0xf]
        %v4461 = vld [vmem:[%s4458 + $0x8] sm:$0xf]
        %v4462 = vld [vmem:[%s4458 + $0xc] sm:$0xf]
        %v4463 = vld [vmem:[%s4458 + $0x10] sm:$0xf]
        %v4464 = vld [vmem:[%s4458 + $0x14] sm:$0xf]
        %v4465 = vld [vmem:[%s4458 + $0x18] sm:$0xf]
        %v4466 = vld [vmem:[%s4458 + $0x1c] sm:$0xf]
        %v4467 = vld [vmem:[%s4458 + $0x20] sm:$0xf]
        %v4468 = vld [vmem:[%s4458 + $0x24] sm:$0xf]
        %v4469 = vld [vmem:[%s4458 + $0x28] sm:$0xf]
        %v4470 = vld [vmem:[%s4458 + $0x2c] sm:$0xf]
        %v4471 = vld [vmem:[%s4458 + $0x30] sm:$0xf]
        %v4472 = vld [vmem:[%s4458 + $0x34] sm:$0xf]
        %v4473 = vld [vmem:[%s4458 + $0x38] sm:$0xf]
        %v4474 = vld [vmem:[%s4458 + $0x3c] sm:$0xf]
        %v4475 = vunpack.c.l.b16 %v4118
        %v4476 = vunpack.c.l.b16 %v4127
        %v4477 = vunpack.c.l.b16 %v4140
        %v4478 = vunpack.c.l.b16 %v4149
        %v4479 = vunpack.c.l.b16 %v4162
        %v4480 = vunpack.c.l.b16 %v4171
        %v4481 = vunpack.c.l.b16 %v4184
        %v4482 = vunpack.c.l.b16 %v4193
        %v4483 = vunpack.c.l.b16 %v4206
        %v4484 = vunpack.c.l.b16 %v4215
        %v4485 = vunpack.c.l.b16 %v4228
        %v4486 = vunpack.c.l.b16 %v4237
        %v4487 = vunpack.c.l.b16 %v4250
        %v4488 = vunpack.c.l.b16 %v4259
        %v4489 = vunpack.c.l.b16 %v4272
        %v4490 = vunpack.c.l.b16 %v4281
        %v4491 = vunpack.c.l.b16 %v4294
        %v4492 = vunpack.c.l.b16 %v4303
        %v4493 = vunpack.c.l.b16 %v4316
        %v4494 = vunpack.c.l.b16 %v4325
        %v4495 = vunpack.c.l.b16 %v4338
        %v4496 = vunpack.c.l.b16 %v4347
        %v4497 = vunpack.c.l.b16 %v4360
        %v4498 = vunpack.c.l.b16 %v4369
        %v4499 = vunpack.c.l.b16 %v4382
        %v4500 = vunpack.c.l.b16 %v4391
        %v4501 = vunpack.c.l.b16 %v4404
        %v4502 = vunpack.c.l.b16 %v4413
        %v4503 = vunpack.c.l.b16 %v4426
        %v4504 = vunpack.c.l.b16 %v4435
        %v4505 = vunpack.c.l.b16 %v4448
        %v4506 = vunpack.c.l.b16 %v4457
        %v4507 = vpack.c.b16 %v4476, %v4475
        %v4508 = vpack.c.b16 %v4478, %v4477
        %v4509 = vpack.c.b16 %v4480, %v4479
        %v4510 = vpack.c.b16 %v4482, %v4481
        %v4511 = vpack.c.b16 %v4484, %v4483
        %v4512 = vpack.c.b16 %v4486, %v4485
        %v4513 = vpack.c.b16 %v4488, %v4487
        %v4514 = vpack.c.b16 %v4490, %v4489
        %v4515 = vpack.c.b16 %v4492, %v4491
        %v4516 = vpack.c.b16 %v4494, %v4493
        %v4517 = vpack.c.b16 %v4496, %v4495
        %v4518 = vpack.c.b16 %v4498, %v4497
        %v4519 = vpack.c.b16 %v4500, %v4499
        %v4520 = vpack.c.b16 %v4502, %v4501
        %v4521 = vpack.c.b16 %v4504, %v4503
        %v4522 = vpack.c.b16 %v4506, %v4505
        %v4555 = vunpack.c.l.b16 %v4459
        %v4556 = vunpack.c.l.b16 %v4460
        %v4557 = vunpack.c.l.b16 %v4461
        %v4558 = vunpack.c.l.b16 %v4462
        %v4559 = vunpack.c.l.b16 %v4463
        %v4560 = vunpack.c.l.b16 %v4464
        %v4561 = vunpack.c.l.b16 %v4465
        %v4562 = vunpack.c.l.b16 %v4466
        %v4563 = vunpack.c.l.b16 %v4467
        %v4564 = vunpack.c.l.b16 %v4468
        %v4565 = vunpack.c.l.b16 %v4469
        %v4566 = vunpack.c.l.b16 %v4470
        %v4567 = vunpack.c.l.b16 %v4471
        %v4568 = vunpack.c.l.b16 %v4472
        %v4569 = vunpack.c.l.b16 %v4473
        %v4570 = vunpack.c.l.b16 %v4474
        %v4571 = vpack.c.b16 %v4556, %v4555
        %v4572 = vpack.c.b16 %v4558, %v4557
        %v4573 = vpack.c.b16 %v4560, %v4559
        %v4574 = vpack.c.b16 %v4562, %v4561
        %v4575 = vpack.c.b16 %v4564, %v4563
        %v4576 = vpack.c.b16 %v4566, %v4565
        %v4577 = vpack.c.b16 %v4568, %v4567
        %v4578 = vpack.c.b16 %v4570, %v4569
        %4587 = vmatprep.subr.bf16.mxu0 0
        %4588 = vmatpush1.bf16.msra.mxu0 %v4578
        %4589 = vmatprep.subr.bf16.mxu0 0
        %4590 = vmatpush1.bf16.msra.mxu0 %v4577
        %4591 = vmatprep.subr.bf16.mxu0 0
        %4592 = vmatpush1.bf16.msra.mxu0 %v4576
        %4593 = vmatprep.subr.bf16.mxu0 0
        %4594 = vmatpush1.bf16.msra.mxu0 %v4575
        %4595 = vmatprep.subr.bf16.mxu0 0
        %4596 = vmatpush1.bf16.msra.mxu0 %v4574
        %4597 = vmatprep.subr.bf16.mxu0 0
        %4598 = vmatpush1.bf16.msra.mxu0 %v4573
        %4599 = vmatprep.subr.bf16.mxu0 0
        %4600 = vmatpush1.bf16.msra.mxu0 %v4572
        %4601 = vmatprep.subr.bf16.mxu0 0
        %4602 = vmatpush1.bf16.msra.mxu0 %v4571
        %4603 = vmatprep.subr.bf16.mxu0 0
        %4604 = vmatpush2.bf16.msra.mxu0 0
        %4605 = vmatprep.subr.bf16.mxu0 0
        %4606 = vmatpush2.bf16.msra.mxu0 0
        %4607 = vmatprep.subr.bf16.mxu0 0
        %4608 = vmatpush2.bf16.msra.mxu0 0
        %4609 = vmatprep.subr.bf16.mxu0 0
        %4610 = vmatpush2.bf16.msra.mxu0 0
        %4611 = vmatprep.subr.bf16.mxu0 0
        %4612 = vmatpush2.bf16.msra.mxu0 0
        %4613 = vmatprep.subr.bf16.mxu0 0
        %4614 = vmatpush2.bf16.msra.mxu0 0
        %4615 = vmatprep.subr.bf16.mxu0 0
        %4616 = vmatpush2.bf16.msra.mxu0 0
        %4617 = vmatprep.subr.bf16.mxu0 0
        %4618 = vmatpush2.bf16.msra.mxu0 0
        %4619 = vmatprep.mubr.bf16.mxu0 0
        %4620 = vmatmul.mubr.bf16.gmra.mxu0 %v4507
        %v4621 = vpop.f32.mrf.mxu0
        %v4622 = vadd.f32 0.0, %v4621
        %v4623 = vpop.f32.mrf.mxu0
        %v4624 = vpop.f32.mrf.mxu0
        %v4625 = vadd.f32 0.0, %v4624
        %v4626 = vpop.f32.mrf.mxu0
        %4627 = vmatprep.mubr.bf16.mxu0 0
        %4628 = vmatmul.mubr.bf16.gmra.mxu0 %v4508
        %v4629 = vpop.f32.mrf.mxu0
        %v4630 = vadd.f32 0.0, %v4629
        %v4631 = vpop.f32.mrf.mxu0
        %v4632 = vpop.f32.mrf.mxu0
        %v4633 = vadd.f32 0.0, %v4632
        %v4634 = vpop.f32.mrf.mxu0
        %4635 = vmatprep.mubr.bf16.mxu0 0
        %4636 = vmatmul.mubr.bf16.gmra.mxu0 %v4509
        %v4637 = vpop.f32.mrf.mxu0
        %v4638 = vadd.f32 0.0, %v4637
        %v4639 = vpop.f32.mrf.mxu0
        %v4640 = vpop.f32.mrf.mxu0
        %v4641 = vadd.f32 0.0, %v4640
        %v4642 = vpop.f32.mrf.mxu0
        %4643 = vmatprep.mubr.bf16.mxu0 0
        %4644 = vmatmul.mubr.bf16.gmra.mxu0 %v4510
        %v4645 = vpop.f32.mrf.mxu0
        %v4646 = vadd.f32 0.0, %v4645
        %v4647 = vpop.f32.mrf.mxu0
        %v4648 = vpop.f32.mrf.mxu0
        %v4649 = vadd.f32 0.0, %v4648
        %v4650 = vpop.f32.mrf.mxu0
        %4651 = vmatprep.mubr.bf16.mxu0 0
        %4652 = vmatmul.mubr.bf16.gmra.mxu0 %v4511
        %v4653 = vpop.f32.mrf.mxu0
        %v4654 = vadd.f32 0.0, %v4653
        %v4655 = vpop.f32.mrf.mxu0
        %v4656 = vpop.f32.mrf.mxu0
        %v4657 = vadd.f32 0.0, %v4656
        %v4658 = vpop.f32.mrf.mxu0
        %4659 = vmatprep.mubr.bf16.mxu0 0
        %4660 = vmatmul.mubr.bf16.gmra.mxu0 %v4512
        %v4661 = vpop.f32.mrf.mxu0
        %v4662 = vadd.f32 0.0, %v4661
        %v4663 = vpop.f32.mrf.mxu0
        %v4664 = vpop.f32.mrf.mxu0
        %v4665 = vadd.f32 0.0, %v4664
        %v4666 = vpop.f32.mrf.mxu0
        %4667 = vmatprep.mubr.bf16.mxu0 0
        %4668 = vmatmul.mubr.bf16.gmra.mxu0 %v4513
        %v4669 = vpop.f32.mrf.mxu0
        %v4670 = vadd.f32 0.0, %v4669
        %v4671 = vpop.f32.mrf.mxu0
        %v4672 = vpop.f32.mrf.mxu0
        %v4673 = vadd.f32 0.0, %v4672
        %v4674 = vpop.f32.mrf.mxu0
        %4675 = vmatprep.mubr.bf16.mxu0 0
        %4676 = vmatmul.mubr.bf16.gmra.mxu0 %v4514
        %v4677 = vpop.f32.mrf.mxu0
        %v4678 = vadd.f32 0.0, %v4677
        %v4679 = vpop.f32.mrf.mxu0
        %v4680 = vpop.f32.mrf.mxu0
        %v4681 = vadd.f32 0.0, %v4680
        %v4682 = vpop.f32.mrf.mxu0
        %4683 = vmatprep.mubr.bf16.mxu0 0
        %4684 = vmatmul.mubr.bf16.gmra.mxu0 %v4515
        %v4685 = vpop.f32.mrf.mxu0
        %v4686 = vadd.f32 0.0, %v4685
        %v4687 = vpop.f32.mrf.mxu0
        %v4688 = vpop.f32.mrf.mxu0
        %v4689 = vadd.f32 0.0, %v4688
        %v4690 = vpop.f32.mrf.mxu0
        %4691 = vmatprep.mubr.bf16.mxu0 0
        %4692 = vmatmul.mubr.bf16.gmra.mxu0 %v4516
        %v4693 = vpop.f32.mrf.mxu0
        %v4694 = vadd.f32 0.0, %v4693
        %v4695 = vpop.f32.mrf.mxu0
        %v4696 = vpop.f32.mrf.mxu0
        %v4697 = vadd.f32 0.0, %v4696
        %v4698 = vpop.f32.mrf.mxu0
        %4699 = vmatprep.mubr.bf16.mxu0 0
        %4700 = vmatmul.mubr.bf16.gmra.mxu0 %v4517
        %v4701 = vpop.f32.mrf.mxu0
        %v4702 = vadd.f32 0.0, %v4701
        %v4703 = vpop.f32.mrf.mxu0
        %v4704 = vpop.f32.mrf.mxu0
        %v4705 = vadd.f32 0.0, %v4704
        %v4706 = vpop.f32.mrf.mxu0
        %4707 = vmatprep.mubr.bf16.mxu0 0
        %4708 = vmatmul.mubr.bf16.gmra.mxu0 %v4518
        %v4709 = vpop.f32.mrf.mxu0
        %v4710 = vadd.f32 0.0, %v4709
        %v4711 = vpop.f32.mrf.mxu0
        %v4712 = vpop.f32.mrf.mxu0
        %v4713 = vadd.f32 0.0, %v4712
        %v4714 = vpop.f32.mrf.mxu0
        %4715 = vmatprep.mubr.bf16.mxu0 0
        %4716 = vmatmul.mubr.bf16.gmra.mxu0 %v4519
        %v4717 = vpop.f32.mrf.mxu0
        %v4718 = vadd.f32 0.0, %v4717
        %v4719 = vpop.f32.mrf.mxu0
        %v4720 = vpop.f32.mrf.mxu0
        %v4721 = vadd.f32 0.0, %v4720
        %v4722 = vpop.f32.mrf.mxu0
        %4723 = vmatprep.mubr.bf16.mxu0 0
        %4724 = vmatmul.mubr.bf16.gmra.mxu0 %v4520
        %v4725 = vpop.f32.mrf.mxu0
        %v4726 = vadd.f32 0.0, %v4725
        %v4727 = vpop.f32.mrf.mxu0
        %v4728 = vpop.f32.mrf.mxu0
        %v4729 = vadd.f32 0.0, %v4728
        %v4730 = vpop.f32.mrf.mxu0
        %4731 = vmatprep.mubr.bf16.mxu0 0
        %4732 = vmatmul.mubr.bf16.gmra.mxu0 %v4521
        %v4733 = vpop.f32.mrf.mxu0
        %v4734 = vadd.f32 0.0, %v4733
        %v4735 = vpop.f32.mrf.mxu0
        %v4736 = vpop.f32.mrf.mxu0
        %v4737 = vadd.f32 0.0, %v4736
        %v4738 = vpop.f32.mrf.mxu0
        %4739 = vmatprep.mubr.bf16.mxu0 0
        %4740 = vmatmul.mubr.bf16.gmra.mxu0 %v4522
        %v4741 = vpop.f32.mrf.mxu0
        %v4742 = vadd.f32 0.0, %v4741
        %v4743 = vpop.f32.mrf.mxu0
        %v4744 = vpop.f32.mrf.mxu0
        %v4745 = vadd.f32 0.0, %v4744
        %v4746 = vpop.f32.mrf.mxu0
        %4747 = vdwg.mxu0
        %v4748 = vadd.f32 %v4025, %v4622
        %v4749 = vadd.f32 %v4026, %v4625
        %v4750 = vadd.f32 %v4027, %v4630
        %v4751 = vadd.f32 %v4028, %v4633
        %v4752 = vadd.f32 %v4029, %v4638
        %v4753 = vadd.f32 %v4030, %v4641
        %v4754 = vadd.f32 %v4031, %v4646
        %v4755 = vadd.f32 %v4032, %v4649
        %v4756 = vadd.f32 %v4033, %v4654
        %v4757 = vadd.f32 %v4034, %v4657
        %v4758 = vadd.f32 %v4035, %v4662
        %v4759 = vadd.f32 %v4036, %v4665
        %v4760 = vadd.f32 %v4037, %v4670
        %v4761 = vadd.f32 %v4038, %v4673
        %v4762 = vadd.f32 %v4039, %v4678
        %v4763 = vadd.f32 %v4040, %v4681
        %v4764 = vadd.f32 %v4041, %v4686
        %v4765 = vadd.f32 %v4042, %v4689
        %v4766 = vadd.f32 %v4043, %v4694
        %v4767 = vadd.f32 %v4044, %v4697
        %v4768 = vadd.f32 %v4045, %v4702
        %v4769 = vadd.f32 %v4046, %v4705
        %v4770 = vadd.f32 %v4047, %v4710
        %v4771 = vadd.f32 %v4048, %v4713
        %v4772 = vadd.f32 %v4049, %v4718
        %v4773 = vadd.f32 %v4050, %v4721
        %v4774 = vadd.f32 %v4051, %v4726
        %v4775 = vadd.f32 %v4052, %v4729
        %v4776 = vadd.f32 %v4053, %v4734
        %v4777 = vadd.f32 %v4054, %v4737
        %v4778 = vadd.f32 %v4055, %v4742
        %v4779 = vadd.f32 %v4056, %v4745
        %s4780 = scalar_lea.vmem [#allocation6], 448
        %v4781 = vld [vmem:[%s4780] sm:$0xf]
        %v4782 = vld [vmem:[%s4780 + $0x4] sm:$0xf]
        %v4783 = vld [vmem:[%s4780 + $0x8] sm:$0xf]
        %v4784 = vld [vmem:[%s4780 + $0xc] sm:$0xf]
        %v4785 = vld [vmem:[%s4780 + $0x10] sm:$0xf]
        %v4786 = vld [vmem:[%s4780 + $0x14] sm:$0xf]
        %v4787 = vld [vmem:[%s4780 + $0x18] sm:$0xf]
        %v4788 = vld [vmem:[%s4780 + $0x1c] sm:$0xf]
        %v4789 = vld [vmem:[%s4780 + $0x20] sm:$0xf]
        %v4790 = vld [vmem:[%s4780 + $0x24] sm:$0xf]
        %v4791 = vld [vmem:[%s4780 + $0x28] sm:$0xf]
        %v4792 = vld [vmem:[%s4780 + $0x2c] sm:$0xf]
        %v4793 = vld [vmem:[%s4780 + $0x30] sm:$0xf]
        %v4794 = vld [vmem:[%s4780 + $0x34] sm:$0xf]
        %v4795 = vld [vmem:[%s4780 + $0x38] sm:$0xf]
        %v4796 = vld [vmem:[%s4780 + $0x3c] sm:$0xf]
        %v4829 = vunpack.c.l.b16 %v4059
        %v4830 = vunpack.c.l.b16 %v4060
        %v4831 = vunpack.c.l.b16 %v4062
        %v4832 = vunpack.c.l.b16 %v4063
        %v4833 = vunpack.c.l.b16 %v4065
        %v4834 = vunpack.c.l.b16 %v4066
        %v4835 = vunpack.c.l.b16 %v4068
        %v4836 = vunpack.c.l.b16 %v4069
        %v4837 = vunpack.c.l.b16 %v4071
        %v4838 = vunpack.c.l.b16 %v4072
        %v4839 = vunpack.c.l.b16 %v4074
        %v4840 = vunpack.c.l.b16 %v4075
        %v4841 = vunpack.c.l.b16 %v4077
        %v4842 = vunpack.c.l.b16 %v4078
        %v4843 = vunpack.c.l.b16 %v4080
        %v4844 = vunpack.c.l.b16 %v4081
        %v4845 = vunpack.c.l.b16 %v4083
        %v4846 = vunpack.c.l.b16 %v4084
        %v4847 = vunpack.c.l.b16 %v4086
        %v4848 = vunpack.c.l.b16 %v4087
        %v4849 = vunpack.c.l.b16 %v4089
        %v4850 = vunpack.c.l.b16 %v4090
        %v4851 = vunpack.c.l.b16 %v4092
        %v4852 = vunpack.c.l.b16 %v4093
        %v4853 = vunpack.c.l.b16 %v4095
        %v4854 = vunpack.c.l.b16 %v4096
        %v4855 = vunpack.c.l.b16 %v4098
        %v4856 = vunpack.c.l.b16 %v4099
        %v4857 = vunpack.c.l.b16 %v4101
        %v4858 = vunpack.c.l.b16 %v4102
        %v4859 = vunpack.c.l.b16 %v4104
        %v4860 = vunpack.c.l.b16 %v4105
        %v4861 = vpack.c.b16 %v4830, %v4829
        %v4862 = vpack.c.b16 %v4832, %v4831
        %v4863 = vpack.c.b16 %v4834, %v4833
        %v4864 = vpack.c.b16 %v4836, %v4835
        %v4865 = vpack.c.b16 %v4838, %v4837
        %v4866 = vpack.c.b16 %v4840, %v4839
        %v4867 = vpack.c.b16 %v4842, %v4841
        %v4868 = vpack.c.b16 %v4844, %v4843
        %v4869 = vpack.c.b16 %v4846, %v4845
        %v4870 = vpack.c.b16 %v4848, %v4847
        %v4871 = vpack.c.b16 %v4850, %v4849
        %v4872 = vpack.c.b16 %v4852, %v4851
        %v4873 = vpack.c.b16 %v4854, %v4853
        %v4874 = vpack.c.b16 %v4856, %v4855
        %v4875 = vpack.c.b16 %v4858, %v4857
        %v4876 = vpack.c.b16 %v4860, %v4859
        %v4909 = vunpack.c.l.b16 %v4781
        %v4910 = vunpack.c.l.b16 %v4782
        %v4911 = vunpack.c.l.b16 %v4783
        %v4912 = vunpack.c.l.b16 %v4784
        %v4913 = vunpack.c.l.b16 %v4785
        %v4914 = vunpack.c.l.b16 %v4786
        %v4915 = vunpack.c.l.b16 %v4787
        %v4916 = vunpack.c.l.b16 %v4788
        %v4917 = vunpack.c.l.b16 %v4789
        %v4918 = vunpack.c.l.b16 %v4790
        %v4919 = vunpack.c.l.b16 %v4791
        %v4920 = vunpack.c.l.b16 %v4792
        %v4921 = vunpack.c.l.b16 %v4793
        %v4922 = vunpack.c.l.b16 %v4794
        %v4923 = vunpack.c.l.b16 %v4795
        %v4924 = vunpack.c.l.b16 %v4796
        %v4925 = vpack.c.b16 %v4910, %v4909
        %v4926 = vpack.c.b16 %v4912, %v4911
        %v4927 = vpack.c.b16 %v4914, %v4913
        %v4928 = vpack.c.b16 %v4916, %v4915
        %v4929 = vpack.c.b16 %v4918, %v4917
        %v4930 = vpack.c.b16 %v4920, %v4919
        %v4931 = vpack.c.b16 %v4922, %v4921
        %v4932 = vpack.c.b16 %v4924, %v4923
        %4941 = vmatprep.subr.bf16.mxu0 0
        %4942 = vmatpush1.bf16.msra.mxu0 %v4932
        %4943 = vmatprep.subr.bf16.mxu0 0
        %4944 = vmatpush1.bf16.msra.mxu0 %v4931
        %4945 = vmatprep.subr.bf16.mxu0 0
        %4946 = vmatpush1.bf16.msra.mxu0 %v4930
        %4947 = vmatprep.subr.bf16.mxu0 0
        %4948 = vmatpush1.bf16.msra.mxu0 %v4929
        %4949 = vmatprep.subr.bf16.mxu0 0
        %4950 = vmatpush1.bf16.msra.mxu0 %v4928
        %4951 = vmatprep.subr.bf16.mxu0 0
        %4952 = vmatpush1.bf16.msra.mxu0 %v4927
        %4953 = vmatprep.subr.bf16.mxu0 0
        %4954 = vmatpush1.bf16.msra.mxu0 %v4926
        %4955 = vmatprep.subr.bf16.mxu0 0
        %4956 = vmatpush1.bf16.msra.mxu0 %v4925
        %4957 = vmatprep.subr.bf16.mxu0 0
        %4958 = vmatpush2.bf16.msra.mxu0 0
        %4959 = vmatprep.subr.bf16.mxu0 0
        %4960 = vmatpush2.bf16.msra.mxu0 0
        %4961 = vmatprep.subr.bf16.mxu0 0
        %4962 = vmatpush2.bf16.msra.mxu0 0
        %4963 = vmatprep.subr.bf16.mxu0 0
        %4964 = vmatpush2.bf16.msra.mxu0 0
        %4965 = vmatprep.subr.bf16.mxu0 0
        %4966 = vmatpush2.bf16.msra.mxu0 0
        %4967 = vmatprep.subr.bf16.mxu0 0
        %4968 = vmatpush2.bf16.msra.mxu0 0
        %4969 = vmatprep.subr.bf16.mxu0 0
        %4970 = vmatpush2.bf16.msra.mxu0 0
        %4971 = vmatprep.subr.bf16.mxu0 0
        %4972 = vmatpush2.bf16.msra.mxu0 0
        %4973 = vmatprep.mubr.bf16.mxu0 0
        %4974 = vmatmul.mubr.bf16.gmra.mxu0 %v4861
        %v4975 = vpop.f32.mrf.mxu0
        %v4976 = vadd.f32 0.0, %v4975
        %v4977 = vpop.f32.mrf.mxu0
        %v4978 = vpop.f32.mrf.mxu0
        %v4979 = vadd.f32 0.0, %v4978
        %v4980 = vpop.f32.mrf.mxu0
        %4981 = vmatprep.mubr.bf16.mxu0 0
        %4982 = vmatmul.mubr.bf16.gmra.mxu0 %v4862
        %v4983 = vpop.f32.mrf.mxu0
        %v4984 = vadd.f32 0.0, %v4983
        %v4985 = vpop.f32.mrf.mxu0
        %v4986 = vpop.f32.mrf.mxu0
        %v4987 = vadd.f32 0.0, %v4986
        %v4988 = vpop.f32.mrf.mxu0
        %4989 = vmatprep.mubr.bf16.mxu0 0
        %4990 = vmatmul.mubr.bf16.gmra.mxu0 %v4863
        %v4991 = vpop.f32.mrf.mxu0
        %v4992 = vadd.f32 0.0, %v4991
        %v4993 = vpop.f32.mrf.mxu0
        %v4994 = vpop.f32.mrf.mxu0
        %v4995 = vadd.f32 0.0, %v4994
        %v4996 = vpop.f32.mrf.mxu0
        %4997 = vmatprep.mubr.bf16.mxu0 0
        %4998 = vmatmul.mubr.bf16.gmra.mxu0 %v4864
        %v4999 = vpop.f32.mrf.mxu0
        %v5000 = vadd.f32 0.0, %v4999
        %v5001 = vpop.f32.mrf.mxu0
        %v5002 = vpop.f32.mrf.mxu0
        %v5003 = vadd.f32 0.0, %v5002
        %v5004 = vpop.f32.mrf.mxu0
        %5005 = vmatprep.mubr.bf16.mxu0 0
        %5006 = vmatmul.mubr.bf16.gmra.mxu0 %v4865
        %v5007 = vpop.f32.mrf.mxu0
        %v5008 = vadd.f32 0.0, %v5007
        %v5009 = vpop.f32.mrf.mxu0
        %v5010 = vpop.f32.mrf.mxu0
        %v5011 = vadd.f32 0.0, %v5010
        %v5012 = vpop.f32.mrf.mxu0
        %5013 = vmatprep.mubr.bf16.mxu0 0
        %5014 = vmatmul.mubr.bf16.gmra.mxu0 %v4866
        %v5015 = vpop.f32.mrf.mxu0
        %v5016 = vadd.f32 0.0, %v5015
        %v5017 = vpop.f32.mrf.mxu0
        %v5018 = vpop.f32.mrf.mxu0
        %v5019 = vadd.f32 0.0, %v5018
        %v5020 = vpop.f32.mrf.mxu0
        %5021 = vmatprep.mubr.bf16.mxu0 0
        %5022 = vmatmul.mubr.bf16.gmra.mxu0 %v4867
        %v5023 = vpop.f32.mrf.mxu0
        %v5024 = vadd.f32 0.0, %v5023
        %v5025 = vpop.f32.mrf.mxu0
        %v5026 = vpop.f32.mrf.mxu0
        %v5027 = vadd.f32 0.0, %v5026
        %v5028 = vpop.f32.mrf.mxu0
        %5029 = vmatprep.mubr.bf16.mxu0 0
        %5030 = vmatmul.mubr.bf16.gmra.mxu0 %v4868
        %v5031 = vpop.f32.mrf.mxu0
        %v5032 = vadd.f32 0.0, %v5031
        %v5033 = vpop.f32.mrf.mxu0
        %v5034 = vpop.f32.mrf.mxu0
        %v5035 = vadd.f32 0.0, %v5034
        %v5036 = vpop.f32.mrf.mxu0
        %5037 = vmatprep.mubr.bf16.mxu0 0
        %5038 = vmatmul.mubr.bf16.gmra.mxu0 %v4869
        %v5039 = vpop.f32.mrf.mxu0
        %v5040 = vadd.f32 0.0, %v5039
        %v5041 = vpop.f32.mrf.mxu0
        %v5042 = vpop.f32.mrf.mxu0
        %v5043 = vadd.f32 0.0, %v5042
        %v5044 = vpop.f32.mrf.mxu0
        %5045 = vmatprep.mubr.bf16.mxu0 0
        %5046 = vmatmul.mubr.bf16.gmra.mxu0 %v4870
        %v5047 = vpop.f32.mrf.mxu0
        %v5048 = vadd.f32 0.0, %v5047
        %v5049 = vpop.f32.mrf.mxu0
        %v5050 = vpop.f32.mrf.mxu0
        %v5051 = vadd.f32 0.0, %v5050
        %v5052 = vpop.f32.mrf.mxu0
        %5053 = vmatprep.mubr.bf16.mxu0 0
        %5054 = vmatmul.mubr.bf16.gmra.mxu0 %v4871
        %v5055 = vpop.f32.mrf.mxu0
        %v5056 = vadd.f32 0.0, %v5055
        %v5057 = vpop.f32.mrf.mxu0
        %v5058 = vpop.f32.mrf.mxu0
        %v5059 = vadd.f32 0.0, %v5058
        %v5060 = vpop.f32.mrf.mxu0
        %5061 = vmatprep.mubr.bf16.mxu0 0
        %5062 = vmatmul.mubr.bf16.gmra.mxu0 %v4872
        %v5063 = vpop.f32.mrf.mxu0
        %v5064 = vadd.f32 0.0, %v5063
        %v5065 = vpop.f32.mrf.mxu0
        %v5066 = vpop.f32.mrf.mxu0
        %v5067 = vadd.f32 0.0, %v5066
        %v5068 = vpop.f32.mrf.mxu0
        %5069 = vmatprep.mubr.bf16.mxu0 0
        %5070 = vmatmul.mubr.bf16.gmra.mxu0 %v4873
        %v5071 = vpop.f32.mrf.mxu0
        %v5072 = vadd.f32 0.0, %v5071
        %v5073 = vpop.f32.mrf.mxu0
        %v5074 = vpop.f32.mrf.mxu0
        %v5075 = vadd.f32 0.0, %v5074
        %v5076 = vpop.f32.mrf.mxu0
        %5077 = vmatprep.mubr.bf16.mxu0 0
        %5078 = vmatmul.mubr.bf16.gmra.mxu0 %v4874
        %v5079 = vpop.f32.mrf.mxu0
        %v5080 = vadd.f32 0.0, %v5079
        %v5081 = vpop.f32.mrf.mxu0
        %v5082 = vpop.f32.mrf.mxu0
        %v5083 = vadd.f32 0.0, %v5082
        %v5084 = vpop.f32.mrf.mxu0
        %5085 = vmatprep.mubr.bf16.mxu0 0
        %5086 = vmatmul.mubr.bf16.gmra.mxu0 %v4875
        %v5087 = vpop.f32.mrf.mxu0
        %v5088 = vadd.f32 0.0, %v5087
        %v5089 = vpop.f32.mrf.mxu0
        %v5090 = vpop.f32.mrf.mxu0
        %v5091 = vadd.f32 0.0, %v5090
        %v5092 = vpop.f32.mrf.mxu0
        %5093 = vmatprep.mubr.bf16.mxu0 0
        %5094 = vmatmul.mubr.bf16.gmra.mxu0 %v4876
        %v5095 = vpop.f32.mrf.mxu0
        %v5096 = vadd.f32 0.0, %v5095
        %v5097 = vpop.f32.mrf.mxu0
        %v5098 = vpop.f32.mrf.mxu0
        %v5099 = vadd.f32 0.0, %v5098
        %v5100 = vpop.f32.mrf.mxu0
        %5101 = vdwg.mxu0
        %v5102 = vadd.f32 %v4748, %v4976
        %v5103 = vadd.f32 %v4749, %v4979
        %v5104 = vadd.f32 %v4750, %v4984
        %v5105 = vadd.f32 %v4751, %v4987
        %v5106 = vadd.f32 %v4752, %v4992
        %v5107 = vadd.f32 %v4753, %v4995
        %v5108 = vadd.f32 %v4754, %v5000
        %v5109 = vadd.f32 %v4755, %v5003
        %v5110 = vadd.f32 %v4756, %v5008
        %v5111 = vadd.f32 %v4757, %v5011
        %v5112 = vadd.f32 %v4758, %v5016
        %v5113 = vadd.f32 %v4759, %v5019
        %v5114 = vadd.f32 %v4760, %v5024
        %v5115 = vadd.f32 %v4761, %v5027
        %v5116 = vadd.f32 %v4762, %v5032
        %v5117 = vadd.f32 %v4763, %v5035
        %v5118 = vadd.f32 %v4764, %v5040
        %v5119 = vadd.f32 %v4765, %v5043
        %v5120 = vadd.f32 %v4766, %v5048
        %v5121 = vadd.f32 %v4767, %v5051
        %v5122 = vadd.f32 %v4768, %v5056
        %v5123 = vadd.f32 %v4769, %v5059
        %v5124 = vadd.f32 %v4770, %v5064
        %v5125 = vadd.f32 %v4771, %v5067
        %v5126 = vadd.f32 %v4772, %v5072
        %v5127 = vadd.f32 %v4773, %v5075
        %v5128 = vadd.f32 %v4774, %v5080
        %v5129 = vadd.f32 %v4775, %v5083
        %v5130 = vadd.f32 %v4776, %v5088
        %v5131 = vadd.f32 %v4777, %v5091
        %v5132 = vadd.f32 %v4778, %v5096
        %v5133 = vadd.f32 %v4779, %v5099
        %v5134 = vld [vmem:[%s4057 + $0x8] sm:$0xf]
        %v5135 = vld [vmem:[%s4057 + $0xc] sm:$0xf]
        %v5136 = vld [vmem:[%s4057 + $0x10] sm:$0x1]
        %v5137 = vld [vmem:[%s4057 + $0x20] sm:$0xf]
        %v5138 = vld [vmem:[%s4057 + $0x24] sm:$0xf]
        %v5139 = vld [vmem:[%s4057 + $0x28] sm:$0x1]
        %v5140 = vld [vmem:[%s4057 + $0x38] sm:$0xf]
        %v5141 = vld [vmem:[%s4057 + $0x3c] sm:$0xf]
        %v5142 = vld [vmem:[%s4057 + $0x40] sm:$0x1]
        %v5143 = vld [vmem:[%s4057 + $0x50] sm:$0xf]
        %v5144 = vld [vmem:[%s4057 + $0x54] sm:$0xf]
        %v5145 = vld [vmem:[%s4057 + $0x58] sm:$0x1]
        %v5146 = vld [vmem:[%s4057 + $0x68] sm:$0xf]
        %v5147 = vld [vmem:[%s4057 + $0x6c] sm:$0xf]
        %v5148 = vld [vmem:[%s4057 + $0x70] sm:$0x1]
        %v5149 = vld [vmem:[%s4057 + $0x80] sm:$0xf]
        %v5150 = vld [vmem:[%s4057 + $0x84] sm:$0xf]
        %v5151 = vld [vmem:[%s4057 + $0x88] sm:$0x1]
        %v5152 = vld [vmem:[%s4057 + $0x98] sm:$0xf]
        %v5153 = vld [vmem:[%s4057 + $0x9c] sm:$0xf]
        %v5154 = vld [vmem:[%s4057 + $0xa0] sm:$0x1]
        %v5155 = vld [vmem:[%s4057 + $0xb0] sm:$0xf]
        %v5156 = vld [vmem:[%s4057 + $0xb4] sm:$0xf]
        %v5157 = vld [vmem:[%s4057 + $0xb8] sm:$0x1]
        %v5158 = vld [vmem:[%s4057 + $0xc8] sm:$0xf]
        %v5159 = vld [vmem:[%s4057 + $0xcc] sm:$0xf]
        %v5160 = vld [vmem:[%s4057 + $0xd0] sm:$0x1]
        %v5161 = vld [vmem:[%s4057 + $0xe0] sm:$0xf]
        %v5162 = vld [vmem:[%s4057 + $0xe4] sm:$0xf]
        %v5163 = vld [vmem:[%s4057 + $0xe8] sm:$0x1]
        %v5164 = vld [vmem:[%s4057 + $0xf8] sm:$0xf]
        %v5165 = vld [vmem:[%s4057 + $0xfc] sm:$0xf]
        %v5166 = vld [vmem:[%s4057 + $0x100] sm:$0x1]
        %v5167 = vld [vmem:[%s4057 + $0x110] sm:$0xf]
        %v5168 = vld [vmem:[%s4057 + $0x114] sm:$0xf]
        %v5169 = vld [vmem:[%s4057 + $0x118] sm:$0x1]
        %v5170 = vld [vmem:[%s4057 + $0x128] sm:$0xf]
        %v5171 = vld [vmem:[%s4057 + $0x12c] sm:$0xf]
        %v5172 = vld [vmem:[%s4057 + $0x130] sm:$0x1]
        %v5173 = vld [vmem:[%s4057 + $0x140] sm:$0xf]
        %v5174 = vld [vmem:[%s4057 + $0x144] sm:$0xf]
        %v5175 = vld [vmem:[%s4057 + $0x148] sm:$0x1]
        %v5176 = vld [vmem:[%s4057 + $0x158] sm:$0xf]
        %v5177 = vld [vmem:[%s4057 + $0x15c] sm:$0xf]
        %v5178 = vld [vmem:[%s4057 + $0x160] sm:$0x1]
        %v5179 = vld [vmem:[%s4057 + $0x170] sm:$0xf]
        %v5180 = vld [vmem:[%s4057 + $0x174] sm:$0xf]
        %v5181 = vld [vmem:[%s4057 + $0x178] sm:$0x1]
        %v5183 = vshrl.u32 %v5134, 16
        %v5185 = vrot.slane %v5183, 4
        %v5186 = vshll.u32 %v5134, 16
        %v5188 = vrot.slane %v5186, 5
        %v5189 = vor.u32 %v5185, %v5188
        %v5190 = vrot.slane %v5189, 4
        %v5192 = vshll.u32 %v5135, 16
        %v5194 = vrot.slane %v5192, 5
        %v5195 = vsel %vm1520, %v5190, %v5194
        %v5196 = vshrl.u32 %v5135, 16
        %v5198 = vrot.slane %v5196, 4
        %v5199 = vor.u32 %v5198, %v5194
        %v5200 = vrot.slane %v5199, 4
        %v5202 = vshll.u32 %v5136, 16
        %v5204 = vrot.slane %v5202, 5
        %v5205 = vsel %vm1520, %v5200, %v5204
        %v5207 = vshrl.u32 %v5137, 16
        %v5209 = vrot.slane %v5207, 4
        %v5210 = vshll.u32 %v5137, 16
        %v5212 = vrot.slane %v5210, 5
        %v5213 = vor.u32 %v5209, %v5212
        %v5214 = vrot.slane %v5213, 4
        %v5216 = vshll.u32 %v5138, 16
        %v5218 = vrot.slane %v5216, 5
        %v5219 = vsel %vm1520, %v5214, %v5218
        %v5220 = vshrl.u32 %v5138, 16
        %v5222 = vrot.slane %v5220, 4
        %v5223 = vor.u32 %v5222, %v5218
        %v5224 = vrot.slane %v5223, 4
        %v5226 = vshll.u32 %v5139, 16
        %v5228 = vrot.slane %v5226, 5
        %v5229 = vsel %vm1520, %v5224, %v5228
        %v5231 = vshrl.u32 %v5140, 16
        %v5233 = vrot.slane %v5231, 4
        %v5234 = vshll.u32 %v5140, 16
        %v5236 = vrot.slane %v5234, 5
        %v5237 = vor.u32 %v5233, %v5236
        %v5238 = vrot.slane %v5237, 4
        %v5240 = vshll.u32 %v5141, 16
        %v5242 = vrot.slane %v5240, 5
        %v5243 = vsel %vm1520, %v5238, %v5242
        %v5244 = vshrl.u32 %v5141, 16
        %v5246 = vrot.slane %v5244, 4
        %v5247 = vor.u32 %v5246, %v5242
        %v5248 = vrot.slane %v5247, 4
        %v5250 = vshll.u32 %v5142, 16
        %v5252 = vrot.slane %v5250, 5
        %v5253 = vsel %vm1520, %v5248, %v5252
        %v5255 = vshrl.u32 %v5143, 16
        %v5257 = vrot.slane %v5255, 4
        %v5258 = vshll.u32 %v5143, 16
        %v5260 = vrot.slane %v5258, 5
        %v5261 = vor.u32 %v5257, %v5260
        %v5262 = vrot.slane %v5261, 4
        %v5264 = vshll.u32 %v5144, 16
        %v5266 = vrot.slane %v5264, 5
        %v5267 = vsel %vm1520, %v5262, %v5266
        %v5268 = vshrl.u32 %v5144, 16
        %v5270 = vrot.slane %v5268, 4
        %v5271 = vor.u32 %v5270, %v5266
        %v5272 = vrot.slane %v5271, 4
        %v5274 = vshll.u32 %v5145, 16
        %v5276 = vrot.slane %v5274, 5
        %v5277 = vsel %vm1520, %v5272, %v5276
        %v5279 = vshrl.u32 %v5146, 16
        %v5281 = vrot.slane %v5279, 4
        %v5282 = vshll.u32 %v5146, 16
        %v5284 = vrot.slane %v5282, 5
        %v5285 = vor.u32 %v5281, %v5284
        %v5286 = vrot.slane %v5285, 4
        %v5288 = vshll.u32 %v5147, 16
        %v5290 = vrot.slane %v5288, 5
        %v5291 = vsel %vm1520, %v5286, %v5290
        %v5292 = vshrl.u32 %v5147, 16
        %v5294 = vrot.slane %v5292, 4
        %v5295 = vor.u32 %v5294, %v5290
        %v5296 = vrot.slane %v5295, 4
        %v5298 = vshll.u32 %v5148, 16
        %v5300 = vrot.slane %v5298, 5
        %v5301 = vsel %vm1520, %v5296, %v5300
        %v5303 = vshrl.u32 %v5149, 16
        %v5305 = vrot.slane %v5303, 4
        %v5306 = vshll.u32 %v5149, 16
        %v5308 = vrot.slane %v5306, 5
        %v5309 = vor.u32 %v5305, %v5308
        %v5310 = vrot.slane %v5309, 4
        %v5312 = vshll.u32 %v5150, 16
        %v5314 = vrot.slane %v5312, 5
        %v5315 = vsel %vm1520, %v5310, %v5314
        %v5316 = vshrl.u32 %v5150, 16
        %v5318 = vrot.slane %v5316, 4
        %v5319 = vor.u32 %v5318, %v5314
        %v5320 = vrot.slane %v5319, 4
        %v5322 = vshll.u32 %v5151, 16
        %v5324 = vrot.slane %v5322, 5
        %v5325 = vsel %vm1520, %v5320, %v5324
        %v5327 = vshrl.u32 %v5152, 16
        %v5329 = vrot.slane %v5327, 4
        %v5330 = vshll.u32 %v5152, 16
        %v5332 = vrot.slane %v5330, 5
        %v5333 = vor.u32 %v5329, %v5332
        %v5334 = vrot.slane %v5333, 4
        %v5336 = vshll.u32 %v5153, 16
        %v5338 = vrot.slane %v5336, 5
        %v5339 = vsel %vm1520, %v5334, %v5338
        %v5340 = vshrl.u32 %v5153, 16
        %v5342 = vrot.slane %v5340, 4
        %v5343 = vor.u32 %v5342, %v5338
        %v5344 = vrot.slane %v5343, 4
        %v5346 = vshll.u32 %v5154, 16
        %v5348 = vrot.slane %v5346, 5
        %v5349 = vsel %vm1520, %v5344, %v5348
        %v5351 = vshrl.u32 %v5155, 16
        %v5353 = vrot.slane %v5351, 4
        %v5354 = vshll.u32 %v5155, 16
        %v5356 = vrot.slane %v5354, 5
        %v5357 = vor.u32 %v5353, %v5356
        %v5358 = vrot.slane %v5357, 4
        %v5360 = vshll.u32 %v5156, 16
        %v5362 = vrot.slane %v5360, 5
        %v5363 = vsel %vm1520, %v5358, %v5362
        %v5364 = vshrl.u32 %v5156, 16
        %v5366 = vrot.slane %v5364, 4
        %v5367 = vor.u32 %v5366, %v5362
        %v5368 = vrot.slane %v5367, 4
        %v5370 = vshll.u32 %v5157, 16
        %v5372 = vrot.slane %v5370, 5
        %v5373 = vsel %vm1520, %v5368, %v5372
        %v5375 = vshrl.u32 %v5158, 16
        %v5377 = vrot.slane %v5375, 4
        %v5378 = vshll.u32 %v5158, 16
        %v5380 = vrot.slane %v5378, 5
        %v5381 = vor.u32 %v5377, %v5380
        %v5382 = vrot.slane %v5381, 4
        %v5384 = vshll.u32 %v5159, 16
        %v5386 = vrot.slane %v5384, 5
        %v5387 = vsel %vm1520, %v5382, %v5386
        %v5388 = vshrl.u32 %v5159, 16
        %v5390 = vrot.slane %v5388, 4
        %v5391 = vor.u32 %v5390, %v5386
        %v5392 = vrot.slane %v5391, 4
        %v5394 = vshll.u32 %v5160, 16
        %v5396 = vrot.slane %v5394, 5
        %v5397 = vsel %vm1520, %v5392, %v5396
        %v5399 = vshrl.u32 %v5161, 16
        %v5401 = vrot.slane %v5399, 4
        %v5402 = vshll.u32 %v5161, 16
        %v5404 = vrot.slane %v5402, 5
        %v5405 = vor.u32 %v5401, %v5404
        %v5406 = vrot.slane %v5405, 4
        %v5408 = vshll.u32 %v5162, 16
        %v5410 = vrot.slane %v5408, 5
        %v5411 = vsel %vm1520, %v5406, %v5410
        %v5412 = vshrl.u32 %v5162, 16
        %v5414 = vrot.slane %v5412, 4
        %v5415 = vor.u32 %v5414, %v5410
        %v5416 = vrot.slane %v5415, 4
        %v5418 = vshll.u32 %v5163, 16
        %v5420 = vrot.slane %v5418, 5
        %v5421 = vsel %vm1520, %v5416, %v5420
        %v5423 = vshrl.u32 %v5164, 16
        %v5425 = vrot.slane %v5423, 4
        %v5426 = vshll.u32 %v5164, 16
        %v5428 = vrot.slane %v5426, 5
        %v5429 = vor.u32 %v5425, %v5428
        %v5430 = vrot.slane %v5429, 4
        %v5432 = vshll.u32 %v5165, 16
        %v5434 = vrot.slane %v5432, 5
        %v5435 = vsel %vm1520, %v5430, %v5434
        %v5436 = vshrl.u32 %v5165, 16
        %v5438 = vrot.slane %v5436, 4
        %v5439 = vor.u32 %v5438, %v5434
        %v5440 = vrot.slane %v5439, 4
        %v5442 = vshll.u32 %v5166, 16
        %v5444 = vrot.slane %v5442, 5
        %v5445 = vsel %vm1520, %v5440, %v5444
        %v5447 = vshrl.u32 %v5167, 16
        %v5449 = vrot.slane %v5447, 4
        %v5450 = vshll.u32 %v5167, 16
        %v5452 = vrot.slane %v5450, 5
        %v5453 = vor.u32 %v5449, %v5452
        %v5454 = vrot.slane %v5453, 4
        %v5456 = vshll.u32 %v5168, 16
        %v5458 = vrot.slane %v5456, 5
        %v5459 = vsel %vm1520, %v5454, %v5458
        %v5460 = vshrl.u32 %v5168, 16
        %v5462 = vrot.slane %v5460, 4
        %v5463 = vor.u32 %v5462, %v5458
        %v5464 = vrot.slane %v5463, 4
        %v5466 = vshll.u32 %v5169, 16
        %v5468 = vrot.slane %v5466, 5
        %v5469 = vsel %vm1520, %v5464, %v5468
        %v5471 = vshrl.u32 %v5170, 16
        %v5473 = vrot.slane %v5471, 4
        %v5474 = vshll.u32 %v5170, 16
        %v5476 = vrot.slane %v5474, 5
        %v5477 = vor.u32 %v5473, %v5476
        %v5478 = vrot.slane %v5477, 4
        %v5480 = vshll.u32 %v5171, 16
        %v5482 = vrot.slane %v5480, 5
        %v5483 = vsel %vm1520, %v5478, %v5482
        %v5484 = vshrl.u32 %v5171, 16
        %v5486 = vrot.slane %v5484, 4
        %v5487 = vor.u32 %v5486, %v5482
        %v5488 = vrot.slane %v5487, 4
        %v5490 = vshll.u32 %v5172, 16
        %v5492 = vrot.slane %v5490, 5
        %v5493 = vsel %vm1520, %v5488, %v5492
        %v5495 = vshrl.u32 %v5173, 16
        %v5497 = vrot.slane %v5495, 4
        %v5498 = vshll.u32 %v5173, 16
        %v5500 = vrot.slane %v5498, 5
        %v5501 = vor.u32 %v5497, %v5500
        %v5502 = vrot.slane %v5501, 4
        %v5504 = vshll.u32 %v5174, 16
        %v5506 = vrot.slane %v5504, 5
        %v5507 = vsel %vm1520, %v5502, %v5506
        %v5508 = vshrl.u32 %v5174, 16
        %v5510 = vrot.slane %v5508, 4
        %v5511 = vor.u32 %v5510, %v5506
        %v5512 = vrot.slane %v5511, 4
        %v5514 = vshll.u32 %v5175, 16
        %v5516 = vrot.slane %v5514, 5
        %v5517 = vsel %vm1520, %v5512, %v5516
        %v5519 = vshrl.u32 %v5176, 16
        %v5521 = vrot.slane %v5519, 4
        %v5522 = vshll.u32 %v5176, 16
        %v5524 = vrot.slane %v5522, 5
        %v5525 = vor.u32 %v5521, %v5524
        %v5526 = vrot.slane %v5525, 4
        %v5528 = vshll.u32 %v5177, 16
        %v5530 = vrot.slane %v5528, 5
        %v5531 = vsel %vm1520, %v5526, %v5530
        %v5532 = vshrl.u32 %v5177, 16
        %v5534 = vrot.slane %v5532, 4
        %v5535 = vor.u32 %v5534, %v5530
        %v5536 = vrot.slane %v5535, 4
        %v5538 = vshll.u32 %v5178, 16
        %v5540 = vrot.slane %v5538, 5
        %v5541 = vsel %vm1520, %v5536, %v5540
        %v5543 = vshrl.u32 %v5179, 16
        %v5545 = vrot.slane %v5543, 4
        %v5546 = vshll.u32 %v5179, 16
        %v5548 = vrot.slane %v5546, 5
        %v5549 = vor.u32 %v5545, %v5548
        %v5550 = vrot.slane %v5549, 4
        %v5552 = vshll.u32 %v5180, 16
        %v5554 = vrot.slane %v5552, 5
        %v5555 = vsel %vm1520, %v5550, %v5554
        %v5556 = vshrl.u32 %v5180, 16
        %v5558 = vrot.slane %v5556, 4
        %v5559 = vor.u32 %v5558, %v5554
        %v5560 = vrot.slane %v5559, 4
        %v5562 = vshll.u32 %v5181, 16
        %v5564 = vrot.slane %v5562, 5
        %v5565 = vsel %vm1520, %v5560, %v5564
        %s5566 = scalar_lea.vmem [#allocation6], 512
        %v5567 = vld [vmem:[%s5566] sm:$0xf]
        %v5568 = vld [vmem:[%s5566 + $0x4] sm:$0xf]
        %v5569 = vld [vmem:[%s5566 + $0x8] sm:$0xf]
        %v5570 = vld [vmem:[%s5566 + $0xc] sm:$0xf]
        %v5571 = vld [vmem:[%s5566 + $0x10] sm:$0xf]
        %v5572 = vld [vmem:[%s5566 + $0x14] sm:$0xf]
        %v5573 = vld [vmem:[%s5566 + $0x18] sm:$0xf]
        %v5574 = vld [vmem:[%s5566 + $0x1c] sm:$0xf]
        %v5575 = vld [vmem:[%s5566 + $0x20] sm:$0xf]
        %v5576 = vld [vmem:[%s5566 + $0x24] sm:$0xf]
        %v5577 = vld [vmem:[%s5566 + $0x28] sm:$0xf]
        %v5578 = vld [vmem:[%s5566 + $0x2c] sm:$0xf]
        %v5579 = vld [vmem:[%s5566 + $0x30] sm:$0xf]
        %v5580 = vld [vmem:[%s5566 + $0x34] sm:$0xf]
        %v5581 = vld [vmem:[%s5566 + $0x38] sm:$0xf]
        %v5582 = vld [vmem:[%s5566 + $0x3c] sm:$0xf]
        %v5583 = vunpack.c.l.b16 %v5195
        %v5584 = vunpack.c.l.b16 %v5205
        %v5585 = vunpack.c.l.b16 %v5219
        %v5586 = vunpack.c.l.b16 %v5229
        %v5587 = vunpack.c.l.b16 %v5243
        %v5588 = vunpack.c.l.b16 %v5253
        %v5589 = vunpack.c.l.b16 %v5267
        %v5590 = vunpack.c.l.b16 %v5277
        %v5591 = vunpack.c.l.b16 %v5291
        %v5592 = vunpack.c.l.b16 %v5301
        %v5593 = vunpack.c.l.b16 %v5315
        %v5594 = vunpack.c.l.b16 %v5325
        %v5595 = vunpack.c.l.b16 %v5339
        %v5596 = vunpack.c.l.b16 %v5349
        %v5597 = vunpack.c.l.b16 %v5363
        %v5598 = vunpack.c.l.b16 %v5373
        %v5599 = vunpack.c.l.b16 %v5387
        %v5600 = vunpack.c.l.b16 %v5397
        %v5601 = vunpack.c.l.b16 %v5411
        %v5602 = vunpack.c.l.b16 %v5421
        %v5603 = vunpack.c.l.b16 %v5435
        %v5604 = vunpack.c.l.b16 %v5445
        %v5605 = vunpack.c.l.b16 %v5459
        %v5606 = vunpack.c.l.b16 %v5469
        %v5607 = vunpack.c.l.b16 %v5483
        %v5608 = vunpack.c.l.b16 %v5493
        %v5609 = vunpack.c.l.b16 %v5507
        %v5610 = vunpack.c.l.b16 %v5517
        %v5611 = vunpack.c.l.b16 %v5531
        %v5612 = vunpack.c.l.b16 %v5541
        %v5613 = vunpack.c.l.b16 %v5555
        %v5614 = vunpack.c.l.b16 %v5565
        %v5615 = vpack.c.b16 %v5584, %v5583
        %v5616 = vpack.c.b16 %v5586, %v5585
        %v5617 = vpack.c.b16 %v5588, %v5587
        %v5618 = vpack.c.b16 %v5590, %v5589
        %v5619 = vpack.c.b16 %v5592, %v5591
        %v5620 = vpack.c.b16 %v5594, %v5593
        %v5621 = vpack.c.b16 %v5596, %v5595
        %v5622 = vpack.c.b16 %v5598, %v5597
        %v5623 = vpack.c.b16 %v5600, %v5599
        %v5624 = vpack.c.b16 %v5602, %v5601
        %v5625 = vpack.c.b16 %v5604, %v5603
        %v5626 = vpack.c.b16 %v5606, %v5605
        %v5627 = vpack.c.b16 %v5608, %v5607
        %v5628 = vpack.c.b16 %v5610, %v5609
        %v5629 = vpack.c.b16 %v5612, %v5611
        %v5630 = vpack.c.b16 %v5614, %v5613
        %v5663 = vunpack.c.l.b16 %v5567
        %v5664 = vunpack.c.l.b16 %v5568
        %v5665 = vunpack.c.l.b16 %v5569
        %v5666 = vunpack.c.l.b16 %v5570
        %v5667 = vunpack.c.l.b16 %v5571
        %v5668 = vunpack.c.l.b16 %v5572
        %v5669 = vunpack.c.l.b16 %v5573
        %v5670 = vunpack.c.l.b16 %v5574
        %v5671 = vunpack.c.l.b16 %v5575
        %v5672 = vunpack.c.l.b16 %v5576
        %v5673 = vunpack.c.l.b16 %v5577
        %v5674 = vunpack.c.l.b16 %v5578
        %v5675 = vunpack.c.l.b16 %v5579
        %v5676 = vunpack.c.l.b16 %v5580
        %v5677 = vunpack.c.l.b16 %v5581
        %v5678 = vunpack.c.l.b16 %v5582
        %v5679 = vpack.c.b16 %v5664, %v5663
        %v5680 = vpack.c.b16 %v5666, %v5665
        %v5681 = vpack.c.b16 %v5668, %v5667
        %v5682 = vpack.c.b16 %v5670, %v5669
        %v5683 = vpack.c.b16 %v5672, %v5671
        %v5684 = vpack.c.b16 %v5674, %v5673
        %v5685 = vpack.c.b16 %v5676, %v5675
        %v5686 = vpack.c.b16 %v5678, %v5677
        %5695 = vmatprep.subr.bf16.mxu0 0
        %5696 = vmatpush1.bf16.msra.mxu0 %v5686
        %5697 = vmatprep.subr.bf16.mxu0 0
        %5698 = vmatpush1.bf16.msra.mxu0 %v5685
        %5699 = vmatprep.subr.bf16.mxu0 0
        %5700 = vmatpush1.bf16.msra.mxu0 %v5684
        %5701 = vmatprep.subr.bf16.mxu0 0
        %5702 = vmatpush1.bf16.msra.mxu0 %v5683
        %5703 = vmatprep.subr.bf16.mxu0 0
        %5704 = vmatpush1.bf16.msra.mxu0 %v5682
        %5705 = vmatprep.subr.bf16.mxu0 0
        %5706 = vmatpush1.bf16.msra.mxu0 %v5681
        %5707 = vmatprep.subr.bf16.mxu0 0
        %5708 = vmatpush1.bf16.msra.mxu0 %v5680
        %5709 = vmatprep.subr.bf16.mxu0 0
        %5710 = vmatpush1.bf16.msra.mxu0 %v5679
        %5711 = vmatprep.subr.bf16.mxu0 0
        %5712 = vmatpush2.bf16.msra.mxu0 0
        %5713 = vmatprep.subr.bf16.mxu0 0
        %5714 = vmatpush2.bf16.msra.mxu0 0
        %5715 = vmatprep.subr.bf16.mxu0 0
        %5716 = vmatpush2.bf16.msra.mxu0 0
        %5717 = vmatprep.subr.bf16.mxu0 0
        %5718 = vmatpush2.bf16.msra.mxu0 0
        %5719 = vmatprep.subr.bf16.mxu0 0
        %5720 = vmatpush2.bf16.msra.mxu0 0
        %5721 = vmatprep.subr.bf16.mxu0 0
        %5722 = vmatpush2.bf16.msra.mxu0 0
        %5723 = vmatprep.subr.bf16.mxu0 0
        %5724 = vmatpush2.bf16.msra.mxu0 0
        %5725 = vmatprep.subr.bf16.mxu0 0
        %5726 = vmatpush2.bf16.msra.mxu0 0
        %5727 = vmatprep.mubr.bf16.mxu0 0
        %5728 = vmatmul.mubr.bf16.gmra.mxu0 %v5615
        %v5729 = vpop.f32.mrf.mxu0
        %v5730 = vadd.f32 0.0, %v5729
        %v5731 = vpop.f32.mrf.mxu0
        %v5732 = vpop.f32.mrf.mxu0
        %v5733 = vadd.f32 0.0, %v5732
        %v5734 = vpop.f32.mrf.mxu0
        %5735 = vmatprep.mubr.bf16.mxu0 0
        %5736 = vmatmul.mubr.bf16.gmra.mxu0 %v5616
        %v5737 = vpop.f32.mrf.mxu0
        %v5738 = vadd.f32 0.0, %v5737
        %v5739 = vpop.f32.mrf.mxu0
        %v5740 = vpop.f32.mrf.mxu0
        %v5741 = vadd.f32 0.0, %v5740
        %v5742 = vpop.f32.mrf.mxu0
        %5743 = vmatprep.mubr.bf16.mxu0 0
        %5744 = vmatmul.mubr.bf16.gmra.mxu0 %v5617
        %v5745 = vpop.f32.mrf.mxu0
        %v5746 = vadd.f32 0.0, %v5745
        %v5747 = vpop.f32.mrf.mxu0
        %v5748 = vpop.f32.mrf.mxu0
        %v5749 = vadd.f32 0.0, %v5748
        %v5750 = vpop.f32.mrf.mxu0
        %5751 = vmatprep.mubr.bf16.mxu0 0
        %5752 = vmatmul.mubr.bf16.gmra.mxu0 %v5618
        %v5753 = vpop.f32.mrf.mxu0
        %v5754 = vadd.f32 0.0, %v5753
        %v5755 = vpop.f32.mrf.mxu0
        %v5756 = vpop.f32.mrf.mxu0
        %v5757 = vadd.f32 0.0, %v5756
        %v5758 = vpop.f32.mrf.mxu0
        %5759 = vmatprep.mubr.bf16.mxu0 0
        %5760 = vmatmul.mubr.bf16.gmra.mxu0 %v5619
        %v5761 = vpop.f32.mrf.mxu0
        %v5762 = vadd.f32 0.0, %v5761
        %v5763 = vpop.f32.mrf.mxu0
        %v5764 = vpop.f32.mrf.mxu0
        %v5765 = vadd.f32 0.0, %v5764
        %v5766 = vpop.f32.mrf.mxu0
        %5767 = vmatprep.mubr.bf16.mxu0 0
        %5768 = vmatmul.mubr.bf16.gmra.mxu0 %v5620
        %v5769 = vpop.f32.mrf.mxu0
        %v5770 = vadd.f32 0.0, %v5769
        %v5771 = vpop.f32.mrf.mxu0
        %v5772 = vpop.f32.mrf.mxu0
        %v5773 = vadd.f32 0.0, %v5772
        %v5774 = vpop.f32.mrf.mxu0
        %5775 = vmatprep.mubr.bf16.mxu0 0
        %5776 = vmatmul.mubr.bf16.gmra.mxu0 %v5621
        %v5777 = vpop.f32.mrf.mxu0
        %v5778 = vadd.f32 0.0, %v5777
        %v5779 = vpop.f32.mrf.mxu0
        %v5780 = vpop.f32.mrf.mxu0
        %v5781 = vadd.f32 0.0, %v5780
        %v5782 = vpop.f32.mrf.mxu0
        %5783 = vmatprep.mubr.bf16.mxu0 0
        %5784 = vmatmul.mubr.bf16.gmra.mxu0 %v5622
        %v5785 = vpop.f32.mrf.mxu0
        %v5786 = vadd.f32 0.0, %v5785
        %v5787 = vpop.f32.mrf.mxu0
        %v5788 = vpop.f32.mrf.mxu0
        %v5789 = vadd.f32 0.0, %v5788
        %v5790 = vpop.f32.mrf.mxu0
        %5791 = vmatprep.mubr.bf16.mxu0 0
        %5792 = vmatmul.mubr.bf16.gmra.mxu0 %v5623
        %v5793 = vpop.f32.mrf.mxu0
        %v5794 = vadd.f32 0.0, %v5793
        %v5795 = vpop.f32.mrf.mxu0
        %v5796 = vpop.f32.mrf.mxu0
        %v5797 = vadd.f32 0.0, %v5796
        %v5798 = vpop.f32.mrf.mxu0
        %5799 = vmatprep.mubr.bf16.mxu0 0
        %5800 = vmatmul.mubr.bf16.gmra.mxu0 %v5624
        %v5801 = vpop.f32.mrf.mxu0
        %v5802 = vadd.f32 0.0, %v5801
        %v5803 = vpop.f32.mrf.mxu0
        %v5804 = vpop.f32.mrf.mxu0
        %v5805 = vadd.f32 0.0, %v5804
        %v5806 = vpop.f32.mrf.mxu0
        %5807 = vmatprep.mubr.bf16.mxu0 0
        %5808 = vmatmul.mubr.bf16.gmra.mxu0 %v5625
        %v5809 = vpop.f32.mrf.mxu0
        %v5810 = vadd.f32 0.0, %v5809
        %v5811 = vpop.f32.mrf.mxu0
        %v5812 = vpop.f32.mrf.mxu0
        %v5813 = vadd.f32 0.0, %v5812
        %v5814 = vpop.f32.mrf.mxu0
        %5815 = vmatprep.mubr.bf16.mxu0 0
        %5816 = vmatmul.mubr.bf16.gmra.mxu0 %v5626
        %v5817 = vpop.f32.mrf.mxu0
        %v5818 = vadd.f32 0.0, %v5817
        %v5819 = vpop.f32.mrf.mxu0
        %v5820 = vpop.f32.mrf.mxu0
        %v5821 = vadd.f32 0.0, %v5820
        %v5822 = vpop.f32.mrf.mxu0
        %5823 = vmatprep.mubr.bf16.mxu0 0
        %5824 = vmatmul.mubr.bf16.gmra.mxu0 %v5627
        %v5825 = vpop.f32.mrf.mxu0
        %v5826 = vadd.f32 0.0, %v5825
        %v5827 = vpop.f32.mrf.mxu0
        %v5828 = vpop.f32.mrf.mxu0
        %v5829 = vadd.f32 0.0, %v5828
        %v5830 = vpop.f32.mrf.mxu0
        %5831 = vmatprep.mubr.bf16.mxu0 0
        %5832 = vmatmul.mubr.bf16.gmra.mxu0 %v5628
        %v5833 = vpop.f32.mrf.mxu0
        %v5834 = vadd.f32 0.0, %v5833
        %v5835 = vpop.f32.mrf.mxu0
        %v5836 = vpop.f32.mrf.mxu0
        %v5837 = vadd.f32 0.0, %v5836
        %v5838 = vpop.f32.mrf.mxu0
        %5839 = vmatprep.mubr.bf16.mxu0 0
        %5840 = vmatmul.mubr.bf16.gmra.mxu0 %v5629
        %v5841 = vpop.f32.mrf.mxu0
        %v5842 = vadd.f32 0.0, %v5841
        %v5843 = vpop.f32.mrf.mxu0
        %v5844 = vpop.f32.mrf.mxu0
        %v5845 = vadd.f32 0.0, %v5844
        %v5846 = vpop.f32.mrf.mxu0
        %5847 = vmatprep.mubr.bf16.mxu0 0
        %5848 = vmatmul.mubr.bf16.gmra.mxu0 %v5630
        %v5849 = vpop.f32.mrf.mxu0
        %v5850 = vadd.f32 0.0, %v5849
        %v5851 = vpop.f32.mrf.mxu0
        %v5852 = vpop.f32.mrf.mxu0
        %v5853 = vadd.f32 0.0, %v5852
        %v5854 = vpop.f32.mrf.mxu0
        %5855 = vdwg.mxu0
        %v5856 = vadd.f32 %v5102, %v5730
        %v5857 = vadd.f32 %v5103, %v5733
        %v5858 = vadd.f32 %v5104, %v5738
        %v5859 = vadd.f32 %v5105, %v5741
        %v5860 = vadd.f32 %v5106, %v5746
        %v5861 = vadd.f32 %v5107, %v5749
        %v5862 = vadd.f32 %v5108, %v5754
        %v5863 = vadd.f32 %v5109, %v5757
        %v5864 = vadd.f32 %v5110, %v5762
        %v5865 = vadd.f32 %v5111, %v5765
        %v5866 = vadd.f32 %v5112, %v5770
        %v5867 = vadd.f32 %v5113, %v5773
        %v5868 = vadd.f32 %v5114, %v5778
        %v5869 = vadd.f32 %v5115, %v5781
        %v5870 = vadd.f32 %v5116, %v5786
        %v5871 = vadd.f32 %v5117, %v5789
        %v5872 = vadd.f32 %v5118, %v5794
        %v5873 = vadd.f32 %v5119, %v5797
        %v5874 = vadd.f32 %v5120, %v5802
        %v5875 = vadd.f32 %v5121, %v5805
        %v5876 = vadd.f32 %v5122, %v5810
        %v5877 = vadd.f32 %v5123, %v5813
        %v5878 = vadd.f32 %v5124, %v5818
        %v5879 = vadd.f32 %v5125, %v5821
        %v5880 = vadd.f32 %v5126, %v5826
        %v5881 = vadd.f32 %v5127, %v5829
        %v5882 = vadd.f32 %v5128, %v5834
        %v5883 = vadd.f32 %v5129, %v5837
        %v5884 = vadd.f32 %v5130, %v5842
        %v5885 = vadd.f32 %v5131, %v5845
        %v5886 = vadd.f32 %v5132, %v5850
        %v5887 = vadd.f32 %v5133, %v5853
        %v5888 = vmax.f32 %v5856, 0.0
        %v5889 = vmax.f32 %v5857, 0.0
        %v5890 = vmax.f32 %v5858, 0.0
        %v5891 = vmax.f32 %v5859, 0.0
        %v5892 = vmax.f32 %v5860, 0.0
        %v5893 = vmax.f32 %v5861, 0.0
        %v5894 = vmax.f32 %v5862, 0.0
        %v5895 = vmax.f32 %v5863, 0.0
        %v5896 = vmax.f32 %v5864, 0.0
        %v5897 = vmax.f32 %v5865, 0.0
        %v5898 = vmax.f32 %v5866, 0.0
        %v5899 = vmax.f32 %v5867, 0.0
        %v5900 = vmax.f32 %v5868, 0.0
        %v5901 = vmax.f32 %v5869, 0.0
        %v5902 = vmax.f32 %v5870, 0.0
        %v5903 = vmax.f32 %v5871, 0.0
        %v5904 = vmax.f32 %v5872, 0.0
        %v5905 = vmax.f32 %v5873, 0.0
        %v5906 = vmax.f32 %v5874, 0.0
        %v5907 = vmax.f32 %v5875, 0.0
        %v5908 = vmax.f32 %v5876, 0.0
        %v5909 = vmax.f32 %v5877, 0.0
        %v5910 = vmax.f32 %v5878, 0.0
        %v5911 = vmax.f32 %v5879, 0.0
        %v5912 = vmax.f32 %v5880, 0.0
        %v5913 = vmax.f32 %v5881, 0.0
        %v5914 = vmax.f32 %v5882, 0.0
        %v5915 = vmax.f32 %v5883, 0.0
        %v5916 = vmax.f32 %v5884, 0.0
        %v5917 = vmax.f32 %v5885, 0.0
        %v5918 = vmax.f32 %v5886, 0.0
        %v5919 = vmax.f32 %v5887, 0.0
        %v5920 = vpack.c.bf16 %v5889, %v5888
        %v5921 = vpack.c.bf16 %v5891, %v5890
        %v5922 = vpack.c.bf16 %v5893, %v5892
        %v5923 = vpack.c.bf16 %v5895, %v5894
        %v5924 = vpack.c.bf16 %v5897, %v5896
        %v5925 = vpack.c.bf16 %v5899, %v5898
        %v5926 = vpack.c.bf16 %v5901, %v5900
        %v5927 = vpack.c.bf16 %v5903, %v5902
        %v5928 = vpack.c.bf16 %v5905, %v5904
        %v5929 = vpack.c.bf16 %v5907, %v5906
        %v5930 = vpack.c.bf16 %v5909, %v5908
        %v5931 = vpack.c.bf16 %v5911, %v5910
        %v5932 = vpack.c.bf16 %v5913, %v5912
        %v5933 = vpack.c.bf16 %v5915, %v5914
        %v5934 = vpack.c.bf16 %v5917, %v5916
        %v5935 = vpack.c.bf16 %v5919, %v5918
        %v5952 = vunpack.c.l.b16 %v5920
        %v5953 = vunpack.c.h.b16 %v5920
        %v5954 = vunpack.c.l.b16 %v5921
        %v5955 = vunpack.c.h.b16 %v5921
        %v5956 = vunpack.c.l.b16 %v5922
        %v5957 = vunpack.c.h.b16 %v5922
        %v5958 = vunpack.c.l.b16 %v5923
        %v5959 = vunpack.c.h.b16 %v5923
        %v5960 = vunpack.c.l.b16 %v5924
        %v5961 = vunpack.c.h.b16 %v5924
        %v5962 = vunpack.c.l.b16 %v5925
        %v5963 = vunpack.c.h.b16 %v5925
        %v5964 = vunpack.c.l.b16 %v5926
        %v5965 = vunpack.c.h.b16 %v5926
        %v5966 = vunpack.c.l.b16 %v5927
        %v5967 = vunpack.c.h.b16 %v5927
        %v5968 = vunpack.c.l.b16 %v5928
        %v5969 = vunpack.c.h.b16 %v5928
        %v5970 = vunpack.c.l.b16 %v5929
        %v5971 = vunpack.c.h.b16 %v5929
        %v5972 = vunpack.c.l.b16 %v5930
        %v5973 = vunpack.c.h.b16 %v5930
        %v5974 = vunpack.c.l.b16 %v5931
        %v5975 = vunpack.c.h.b16 %v5931
        %v5976 = vunpack.c.l.b16 %v5932
        %v5977 = vunpack.c.h.b16 %v5932
        %v5978 = vunpack.c.l.b16 %v5933
        %v5979 = vunpack.c.h.b16 %v5933
        %v5980 = vunpack.c.l.b16 %v5934
        %v5981 = vunpack.c.h.b16 %v5934
        %v5982 = vunpack.c.l.b16 %v5935
        %v5983 = vunpack.c.h.b16 %v5935
        %v5984 = vpack.c.b16 %v5952, %v5952
        %v5985 = vpack.c.b16 %v5953, %v5953
        %v5986 = vpack.c.b16 %v5954, %v5954
        %v5987 = vpack.c.b16 %v5955, %v5955
        %v5988 = vpack.c.b16 %v5956, %v5956
        %v5989 = vpack.c.b16 %v5957, %v5957
        %v5990 = vpack.c.b16 %v5958, %v5958
        %v5991 = vpack.c.b16 %v5959, %v5959
        %v5992 = vpack.c.b16 %v5960, %v5960
        %v5993 = vpack.c.b16 %v5961, %v5961
        %v5994 = vpack.c.b16 %v5962, %v5962
        %v5995 = vpack.c.b16 %v5963, %v5963
        %v5996 = vpack.c.b16 %v5964, %v5964
        %v5997 = vpack.c.b16 %v5965, %v5965
        %v5998 = vpack.c.b16 %v5966, %v5966
        %v5999 = vpack.c.b16 %v5967, %v5967
        %v6000 = vpack.c.b16 %v5968, %v5968
        %v6001 = vpack.c.b16 %v5969, %v5969
        %v6002 = vpack.c.b16 %v5970, %v5970
        %v6003 = vpack.c.b16 %v5971, %v5971
        %v6004 = vpack.c.b16 %v5972, %v5972
        %v6005 = vpack.c.b16 %v5973, %v5973
        %v6006 = vpack.c.b16 %v5974, %v5974
        %v6007 = vpack.c.b16 %v5975, %v5975
        %v6008 = vpack.c.b16 %v5976, %v5976
        %v6009 = vpack.c.b16 %v5977, %v5977
        %v6010 = vpack.c.b16 %v5978, %v5978
        %v6011 = vpack.c.b16 %v5979, %v5979
        %v6012 = vpack.c.b16 %v5980, %v5980
        %v6013 = vpack.c.b16 %v5981, %v5981
        %v6014 = vpack.c.b16 %v5982, %v5982
        %v6015 = vpack.c.b16 %v5983, %v5983
        %6048 = vst [vmem:[%s203] sm:$0xf] %v5984
        %6049 = vst [vmem:[%s203 + $0x4] sm:$0xf] %v5985
        %6050 = vst [vmem:[%s203 + $0x8] sm:$0xf] %v5986
        %6051 = vst [vmem:[%s203 + $0xc] sm:$0xf] %v5987
        %6052 = vst [vmem:[%s203 + $0x10] sm:$0xf] %v5988
        %6053 = vst [vmem:[%s203 + $0x14] sm:$0xf] %v5989
        %6054 = vst [vmem:[%s203 + $0x18] sm:$0xf] %v5990
        %6055 = vst [vmem:[%s203 + $0x1c] sm:$0xf] %v5991
        %6056 = vst [vmem:[%s203 + $0x20] sm:$0xf] %v5992
        %6057 = vst [vmem:[%s203 + $0x24] sm:$0xf] %v5993
        %6058 = vst [vmem:[%s203 + $0x28] sm:$0xf] %v5994
        %6059 = vst [vmem:[%s203 + $0x2c] sm:$0xf] %v5995
        %6060 = vst [vmem:[%s203 + $0x30] sm:$0xf] %v5996
        %6061 = vst [vmem:[%s203 + $0x34] sm:$0xf] %v5997
        %6062 = vst [vmem:[%s203 + $0x38] sm:$0xf] %v5998
        %6063 = vst [vmem:[%s203 + $0x3c] sm:$0xf] %v5999
        %6064 = vst [vmem:[%s203 + $0x40] sm:$0xf] %v6000
        %6065 = vst [vmem:[%s203 + $0x44] sm:$0xf] %v6001
        %6066 = vst [vmem:[%s203 + $0x48] sm:$0xf] %v6002
        %6067 = vst [vmem:[%s203 + $0x4c] sm:$0xf] %v6003
        %6068 = vst [vmem:[%s203 + $0x50] sm:$0xf] %v6004
        %6069 = vst [vmem:[%s203 + $0x54] sm:$0xf] %v6005
        %6070 = vst [vmem:[%s203 + $0x58] sm:$0xf] %v6006
        %6071 = vst [vmem:[%s203 + $0x5c] sm:$0xf] %v6007
        %6072 = vst [vmem:[%s203 + $0x60] sm:$0xf] %v6008
        %6073 = vst [vmem:[%s203 + $0x64] sm:$0xf] %v6009
        %6074 = vst [vmem:[%s203 + $0x68] sm:$0xf] %v6010
        %6075 = vst [vmem:[%s203 + $0x6c] sm:$0xf] %v6011
        %6076 = vst [vmem:[%s203 + $0x70] sm:$0xf] %v6012
        %6077 = vst [vmem:[%s203 + $0x74] sm:$0xf] %v6013
        %6078 = vst [vmem:[%s203 + $0x78] sm:$0xf] %v6014
        %6079 = vst [vmem:[%s203 + $0x7c] sm:$0xf] %v6015
        %s6080 = sand.u32 %s97, 1
        %s6081 = scalar_lea.sflag [#allocation5], %s6080
        %s6082 = sand.u32 %s97, 1
        %s6083 = smul.addr %s6082, 128
        %s6084 = scalar_lea.vmem [#allocation8], %s6083
        // Predicated region
        $region41: #{tpu_custom_call.1} parent=31 // pred_check
          %p6085 = pneg %p107
        $region42: #{tpu_custom_call.1} parent=31 // pred_check_branch
          %6087 = sbr.rel (%p6085) target = $region44
        $region43: #{tpu_custom_call.1} parent=31 // pred_region
          %s6089 = ssub.s32 2048, 2048
          %6090 = vsyncadd %s6081, %s6089
          %s6091 = smul.addr %s21, 32
          %s6092 = smul.addr %s6091, 64
          %s6093 = scalar_lea.hbm %s3, %s6092
          %s6094 = sshll.u32 %s6084, 4
          %s6095 = int_to_ptr.vmem [resolvable:$true] %s6094
          %6100 = dma.vmem_to_hbm [thread:$0]  %s6095, 2048, %s6093, %s6081, 64, 64, 4
        $region44: #{tpu_custom_call.1} parent=31 // pred_fallthru
          _
      $region32: #{tpu_custom_call.1} parent=5 // pred_fallthru
        _
      %p6101 = scmp.le.s32.totalorder 2, %s16
      // Predicated region
      $region45: #{tpu_custom_call.1} parent=5 // pred_check
        %p6102 = pneg %p6101
      $region46: #{tpu_custom_call.1} parent=5 // pred_check_branch
        %6104 = sbr.rel (%p6102) target = $region48
      $region47: #{tpu_custom_call.1} parent=5 // pred_region
        %s6105 = ssub.s32 %s16, 2
        // Predicated region
        $region49: #{tpu_custom_call.1} parent=47 // pred_check
          %p6106 = pneg %p113
        $region50: #{tpu_custom_call.1} parent=47 // pred_check_branch
          %6108 = sbr.rel (%p6106) target = $region52
        $region51: #{tpu_custom_call.1} parent=47 // pred_region
          %s6109 = sand.u32 %s98, 1
          %s6110 = scalar_lea.sflag [#allocation5], %s6109
          %s6111 = sand.u32 %s98, 1
          %s6112 = smul.addr %s6111, 128
          %s6113 = scalar_lea.vmem [#allocation8], %s6112
          %6114 = dma.done %s6110, 2048
        $region52: #{tpu_custom_call.1} parent=47 // pred_fallthru
          _
      $region48: #{tpu_custom_call.1} parent=5 // pred_fallthru
        _
    $region6: #{tpu_custom_call.1} parent=1 // loop_footer
      %s20 = sadd.s32 1, %s16
    $region7: #{tpu_custom_call.1} parent=1 // loop_footer_branch
      %15 = sbr.rel target = $region3
    $region8: #{tpu_custom_call.1} parent=1 // loop_exit
      _
    %6115 = vsyncpa [#allocation4], 1
    %s6116 = scalar_lea.sflag [#allocation4], 1
    %6117 = vsyncpa %s6116, 1
    %6118 = vsyncpa [#allocation7], 1
    %6119 = vsyncpa [#allocation5], 1
    %s6120 = scalar_lea.sflag [#allocation5], 1
    %6121 = vsyncpa %s6120, 1

</llo_original>
